<compile_context>
chip_gen: v6e
topology: v6e:2x2x1
jax: 0.10.0
libtpu: 0.0.40
codegen_flags: <defaults>
</compile_context>

<pallas_src>
import numpy as np
import jax
import jax.numpy as jnp
from jax.experimental import pallas as pl
from jax.experimental.pallas import tpu as pltpu

# ---- problem sizes (small, consistent with the module) ----
B, F, C = 2, 16, 32          # batch, frames/sequence, embedding dim
H = 4                        # num_heads
DH = C // H                  # head dim
HID = int(C * 4.0)           # mlp_ratio = 4
F2 = F // 2                  # half of the frames (mlp1 / mlp2 split)
BF = B * F                   # tokens
BF2 = B * F2                 # tokens per half
HB = H * B                   # (batch, head) blocks
SCALE = DH ** (-0.5)
EPS = 1e-5


# ---------------- in-kernel helpers ----------------
def _erf(x):
    # Abramowitz & Stegun 7.1.26 (max abs err ~1.5e-7); divide replaced by
    # the EUP approximate reciprocal (rel err ~2^-12, well under tolerance).
    a1, a2, a3, a4, a5 = 0.254829592, -0.284496736, 1.421413741, -1.453152027, 1.061405429
    pc = 0.3275911
    ax = jnp.abs(x)
    t = pl.reciprocal(1.0 + pc * ax, approx=True)
    poly = ((((a5 * t + a4) * t + a3) * t + a2) * t + a1) * t
    y = 1.0 - poly * jnp.exp(-ax * ax)
    return jnp.where(x >= 0, y, -y)


def _gelu(x):
    # PyTorch nn.GELU default (erf-based).
    return 0.5 * x * (1.0 + _erf(x * 0.7071067811865476))


def _layernorm(x, g, b):
    mu = jnp.mean(x, axis=-1, keepdims=True)
    var = jnp.mean((x - mu) ** 2, axis=-1, keepdims=True)
    return (x - mu) * jax.lax.rsqrt(var + EPS) * g + b


# ---------------- Pallas kernel (all batches in one invocation) ----------------
def mixed_block_kernel(x_ref,
                       g1_ref, b1_ref, wqkv_ref, wproj_ref, bproj_ref,
                       g2_ref, b2_ref, w1_ref, bb1_ref, w2_ref, bb2_ref,
                       g3_ref, b3_ref, wf1_ref, bf1_ref, wf2_ref, bf2_ref,
                       dct_ref, idct_ref,
                       out_ref,
                       qkv_scr, ao_scr):
    x = x_ref[...]                                                    # (B*F, C)

    # ---------- x = x + Attention(norm1(x)) ----------
    h = _layernorm(x, g1_ref[...], b1_ref[...])
    # wqkv columns are host-reordered head-grouped [q_h | k_h | v_h] per head,
    # with the attention scale already folded into the q columns.
    qkv = jnp.dot(h, wqkv_ref[...], preferred_element_type=jnp.float32)  # (B*F, 3C)

    # Restack to (batch*head, F, 3*DH): 8 stores of (F, 24)-wide slabs.
    for bi in range(B):
        for hd in range(H):
            qkv_scr[bi * H + hd] = qkv[bi * F:(bi + 1) * F,
                                       hd * 3 * DH:(hd + 1) * 3 * DH]

    qkv3 = qkv_scr[...]                                               # (HB, F, 3*DH)
    q3 = qkv3[:, :, 0:DH]
    k3 = qkv3[:, :, DH:2 * DH]
    v3 = qkv3[:, :, 2 * DH:3 * DH]

    # Per-(batch, head) attention as a batched matmul; no mask / padding needed.
    s = jnp.einsum('gqd,gkd->gqk', q3, k3,
                   preferred_element_type=jnp.float32)                # (HB, F, F)
    s = s - jnp.max(s, axis=-1, keepdims=True)
    e = jnp.exp(s)
    p = e * pl.reciprocal(jnp.sum(e, axis=-1, keepdims=True), approx=True)
    o3 = jnp.einsum('gqk,gkd->gqd', p, v3,
                    preferred_element_type=jnp.float32)               # (HB, F, DH)

    # Scatter head outputs back to token-major (B*F, C): 8 stores of (F, DH).
    for bi in range(B):
        for hd in range(H):
            ao_scr[bi * F:(bi + 1) * F, hd * DH:(hd + 1) * DH] = o3[bi * H + hd]

    xa = jnp.dot(ao_scr[...], wproj_ref[...],
                 preferred_element_type=jnp.float32) + bproj_ref[...]
    xr = x + xa                                                       # (B*F, C)

    # ---------- frame-half split (rows are (batch, frame) order) ----------
    x1 = jnp.concatenate([xr[0:F2], xr[F:F + F2]], axis=0)            # (B*F2, C)
    x2 = jnp.concatenate([xr[F2:F], xr[F + F2:2 * F]], axis=0)        # (B*F2, C)

    # ---------- Mlp branch: x1 + Mlp(norm2(x1)) ----------
    h1 = _layernorm(x1, g2_ref[...], b2_ref[...])
    y1 = jnp.dot(h1, w1_ref[...], preferred_element_type=jnp.float32) + bb1_ref[...]
    y1 = _gelu(y1)                                                    # only valid elems
    y1 = jnp.dot(y1, w2_ref[...], preferred_element_type=jnp.float32) + bb2_ref[...]
    out1 = x1 + y1

    # ---------- FreqMlp branch: x2 + iDCT(Mlp(DCT(norm3(x2)))) ----------
    h2 = _layernorm(x2, g3_ref[...], b3_ref[...])
    z = jnp.dot(dct_ref[...], h2, preferred_element_type=jnp.float32)     # per-batch DCT
    y2 = jnp.dot(z, wf1_ref[...], preferred_element_type=jnp.float32) + bf1_ref[...]
    y2 = _gelu(y2)                                                    # only valid elems
    y2 = jnp.dot(y2, wf2_ref[...], preferred_element_type=jnp.float32) + bf2_ref[...]
    y2 = jnp.dot(idct_ref[...], y2, preferred_element_type=jnp.float32)   # inverse DCT
    out2 = x2 + y2

    # Direct slice stores (interleave halves back to (batch, frame) row order).
    out_ref[0:F2, :] = out1[0:F2]
    out_ref[F2:F, :] = out2[0:F2]
    out_ref[F:F + F2, :] = out1[F2:BF2]
    out_ref[F + F2:2 * F, :] = out2[F2:BF2]


# ---------------- wrapper ----------------
def mixed_block(x, kparams):
    # Single grid step: on v5e/v6e there is one TensorCore, so a batch grid is
    # pure serial pipeline overhead for a kernel this small.  On v7x one would
    # use grid=(B,) with dimension_semantics=("parallel",) to use both TCs.
    x2d = x.reshape(BF, C)                        # free host-side reshape
    in_specs = [pl.BlockSpec((BF, C), lambda i: (0, 0))]
    for prm in kparams:
        nd = prm.ndim
        in_specs.append(pl.BlockSpec(prm.shape, (lambda i, _nd=nd: (0,) * _nd)))

    out2d = pl.pallas_call(
        mixed_block_kernel,
        out_shape=jax.ShapeDtypeStruct((BF, C), jnp.float32),
        grid=(1,),
        in_specs=in_specs,
        out_specs=pl.BlockSpec((BF, C), lambda i: (0, 0)),
        scratch_shapes=[
            pltpu.VMEM((HB, F, 3 * DH), jnp.float32),   # q|k|v, (batch,head)-major
            pltpu.VMEM((BF, C), jnp.float32),           # attention output (tokens, C)
        ],
        compiler_params=pltpu.CompilerParams(dimension_semantics=("arbitrary",)),
    )(x2d, *kparams)
    return out2d.reshape(B, F, C)


# ---------------- deterministic parameter construction ----------------
def make_params(key):
    ks = jax.random.split(key, 20)

    def rnd(k, shape, scale):
        return jax.random.normal(k, shape, dtype=jnp.float32) * scale

    g1 = 1.0 + rnd(ks[0], (1, C), 0.02)
    b1 = rnd(ks[1], (1, C), 0.02)
    wqkv = rnd(ks[2], (C, 3 * C), 0.05)          # qkv_bias=False
    wproj = rnd(ks[3], (C, C), 0.05)
    bproj = rnd(ks[4], (1, C), 0.02)
    g2 = 1.0 + rnd(ks[5], (1, C), 0.02)
    b2 = rnd(ks[6], (1, C), 0.02)
    w1 = rnd(ks[7], (C, HID), 0.05)
    bb1 = rnd(ks[8], (1, HID), 0.02)
    w2 = rnd(ks[9], (HID, C), 0.05)
    bb2 = rnd(ks[10], (1, C), 0.02)
    g3 = 1.0 + rnd(ks[11], (1, C), 0.02)
    b3 = rnd(ks[12], (1, C), 0.02)
    wf1 = rnd(ks[13], (C, HID), 0.05)
    bf1 = rnd(ks[14], (1, HID), 0.02)
    wf2 = rnd(ks[15], (HID, C), 0.05)
    bf2 = rnd(ks[16], (1, C), 0.02)

    # torch_dct (norm=None): X_k = 2 * sum_n x_n cos(pi*(2n+1)*k/(2N));
    # Dinv is its exact inverse (idct(dct(x)) == x).
    n = np.arange(F2)
    k = np.arange(F2)
    Dm = 2.0 * np.cos(np.pi * (2.0 * n[None, :] + 1.0) * k[:, None] / (2.0 * F2))
    w = np.where(k == 0, 0.5, 1.0)
    Dinv = (np.cos(np.pi * k[None, :] * (2.0 * n[:, None] + 1.0) / (2.0 * F2))
            * w[None, :]) / F2
    Dm = jnp.asarray(Dm, jnp.float32)
    Dinv = jnp.asarray(Dinv, jnp.float32)

    return (g1, b1, wqkv, wproj, bproj,
            g2, b2, w1, bb1, w2, bb2,
            g3, b3, wf1, bf1, wf2, bf2, Dm, Dinv)


def _block_diag(a, b):
    za = jnp.zeros((a.shape[0], b.shape[1]), a.dtype)
    zb = jnp.zeros((b.shape[0], a.shape[1]), b.dtype)
    return jnp.concatenate(
        [jnp.concatenate([a, za], axis=1), jnp.concatenate([zb, b], axis=1)], axis=0)


def fuse_params(raw):
    """Host-side (one-time) weight preprocessing for the kernel."""
    (g1, b1, wqkv, wproj, bproj,
     g2, b2, w1, bb1, w2, bb2,
     g3, b3, wf1, bf1, wf2, bf2, Dm, Dinv) = raw
    # Reorder QKV columns head-grouped [q_h | k_h | v_h] per head and fold the
    # attention scale into the q columns (numerically identical).
    cols = []
    for h in range(H):
        cols.append(wqkv[:, h * DH:(h + 1) * DH] * SCALE)            # q_h (scaled)
        cols.append(wqkv[:, C + h * DH:C + (h + 1) * DH])            # k_h
        cols.append(wqkv[:, 2 * C + h * DH:2 * C + (h + 1) * DH])    # v_h
    wqkv_r = jnp.concatenate(cols, axis=1)                           # (C, 3C)
    dbd = _block_diag(Dm, Dm)                                        # per-batch DCT-II (B==2)
    dinvbd = _block_diag(Dinv, Dinv)                                 # per-batch inverse DCT
    return (g1, b1, wqkv_r, wproj, bproj,
            g2, b2, w1, bb1, w2, bb2,
            g3, b3, wf1, bf1, wf2, bf2, dbd, dinvbd)


# ---------------- pure-JAX reference (mirrors the PyTorch forward) ----------------
def reference(x, params):
    (g1, b1, wqkv, wproj, bproj,
     g2, b2, w1, bb1, w2, bb2,
     g3, b3, wf1, bf1, wf2, bf2, Dm, Dinv) = params

    def ln(v, g, bta):
        mu = jnp.mean(v, -1, keepdims=True)
        var = jnp.mean((v - mu) ** 2, -1, keepdims=True)
        return (v - mu) / jnp.sqrt(var + EPS) * g + bta

    h = ln(x, g1, b1)
    qkv = h @ wqkv
    q = qkv[..., :C].reshape(B, F, H, DH).transpose(0, 2, 1, 3)
    k = qkv[..., C:2 * C].reshape(B, F, H, DH).transpose(0, 2, 1, 3)
    v = qkv[..., 2 * C:].reshape(B, F, H, DH).transpose(0, 2, 1, 3)
    a = jnp.einsum('bhqd,bhkd->bhqk', q, k) * SCALE
    p = jax.nn.softmax(a, axis=-1)
    o = jnp.einsum('bhqk,bhkd->bhqd', p, v).transpose(0, 2, 1, 3).reshape(B, F, C)
    xr = x + o @ wproj + bproj

    x1 = xr[:, :F2]
    y1 = jax.nn.gelu(ln(x1, g2, b2) @ w1 + bb1, approximate=False) @ w2 + bb2
    out1 = x1 + y1

    x2 = xr[:, F2:]
    z = jnp.einsum('kn,bnc->bkc', Dm, ln(x2, g3, b3))
    y2 = jax.nn.gelu(z @ wf1 + bf1, approximate=False) @ wf2 + bf2
    y2 = jnp.einsum('nk,bkc->bnc', Dinv, y2)
    out2 = x2 + y2

    return jnp.concatenate([out1, out2], axis=1)


if __name__ == "__main__":
    key = jax.random.PRNGKey(0)
    kx, kp = jax.random.split(key)
    x = jax.random.normal(kx, (B, F, C), dtype=jnp.float32)
    raw_params = make_params(kp)
    kernel_params = fuse_params(raw_params)

    out = mixed_block(x, kernel_params)
    out = jax.block_until_ready(out)

    ref = reference(x, raw_params)
    # Tolerance 2e-3: softmax denominator and the erf divide in GELU both use
    # the approximate EUP reciprocal (documented numerics trade-off).
    np.testing.assert_allclose(np.asarray(out), np.asarray(ref), rtol=2e-3, atol=2e-3)
    print("KERNEL_OK")
</pallas_src>

<mosaic_0001>
module attributes {stable_mosaic.version = 11 : i64} {
  func.func @mixed_block_kernel(%arg0: i32, %arg1: memref<32x32xf32, #tpu.memory_space<vmem>>, %arg2: memref<1x32xf32, #tpu.memory_space<vmem>>, %arg3: memref<1x32xf32, #tpu.memory_space<vmem>>, %arg4: memref<32x96xf32, #tpu.memory_space<vmem>>, %arg5: memref<32x32xf32, #tpu.memory_space<vmem>>, %arg6: memref<1x32xf32, #tpu.memory_space<vmem>>, %arg7: memref<1x32xf32, #tpu.memory_space<vmem>>, %arg8: memref<1x32xf32, #tpu.memory_space<vmem>>, %arg9: memref<32x128xf32, #tpu.memory_space<vmem>>, %arg10: memref<1x128xf32, #tpu.memory_space<vmem>>, %arg11: memref<128x32xf32, #tpu.memory_space<vmem>>, %arg12: memref<1x32xf32, #tpu.memory_space<vmem>>, %arg13: memref<1x32xf32, #tpu.memory_space<vmem>>, %arg14: memref<1x32xf32, #tpu.memory_space<vmem>>, %arg15: memref<32x128xf32, #tpu.memory_space<vmem>>, %arg16: memref<1x128xf32, #tpu.memory_space<vmem>>, %arg17: memref<128x32xf32, #tpu.memory_space<vmem>>, %arg18: memref<1x32xf32, #tpu.memory_space<vmem>>, %arg19: memref<16x16xf32, #tpu.memory_space<vmem>>, %arg20: memref<16x16xf32, #tpu.memory_space<vmem>>, %arg21: memref<32x32xf32, #tpu.memory_space<vmem>>, %arg22: memref<8x16x24xf32, #tpu.memory_space<vmem>>, %arg23: memref<32x32xf32, #tpu.memory_space<vmem>>) attributes {dimension_semantics = [#tpu.dimension_semantics<arbitrary>], iteration_bounds = array<i64: 1>, scalar_prefetch = 0 : i64, scratch_operands = 2 : i64, tpu.core_type = #tpu.core_type<tc>, window_params = [{pipeline_mode = #tpu.pipeline_mode<synchronous>, transform_indices = @transform_0, window_bounds = array<i64: 32, 32>}, {pipeline_mode = #tpu.pipeline_mode<synchronous>, transform_indices = @transform_1, window_bounds = array<i64: 1, 32>}, {pipeline_mode = #tpu.pipeline_mode<synchronous>, transform_indices = @transform_2, window_bounds = array<i64: 1, 32>}, {pipeline_mode = #tpu.pipeline_mode<synchronous>, transform_indices = @transform_3, window_bounds = array<i64: 32, 96>}, {pipeline_mode = #tpu.pipeline_mode<synchronous>, transform_indices = @transform_4, window_bounds = array<i64: 32, 32>}, {pipeline_mode = #tpu.pipeline_mode<synchronous>, transform_indices = @transform_5, window_bounds = array<i64: 1, 32>}, {pipeline_mode = #tpu.pipeline_mode<synchronous>, transform_indices = @transform_6, window_bounds = array<i64: 1, 32>}, {pipeline_mode = #tpu.pipeline_mode<synchronous>, transform_indices = @transform_7, window_bounds = array<i64: 1, 32>}, {pipeline_mode = #tpu.pipeline_mode<synchronous>, transform_indices = @transform_8, window_bounds = array<i64: 32, 128>}, {pipeline_mode = #tpu.pipeline_mode<synchronous>, transform_indices = @transform_9, window_bounds = array<i64: 1, 128>}, {pipeline_mode = #tpu.pipeline_mode<synchronous>, transform_indices = @transform_10, window_bounds = array<i64: 128, 32>}, {pipeline_mode = #tpu.pipeline_mode<synchronous>, transform_indices = @transform_11, window_bounds = array<i64: 1, 32>}, {pipeline_mode = #tpu.pipeline_mode<synchronous>, transform_indices = @transform_12, window_bounds = array<i64: 1, 32>}, {pipeline_mode = #tpu.pipeline_mode<synchronous>, transform_indices = @transform_13, window_bounds = array<i64: 1, 32>}, {pipeline_mode = #tpu.pipeline_mode<synchronous>, transform_indices = @transform_14, window_bounds = array<i64: 32, 128>}, {pipeline_mode = #tpu.pipeline_mode<synchronous>, transform_indices = @transform_15, window_bounds = array<i64: 1, 128>}, {pipeline_mode = #tpu.pipeline_mode<synchronous>, transform_indices = @transform_16, window_bounds = array<i64: 128, 32>}, {pipeline_mode = #tpu.pipeline_mode<synchronous>, transform_indices = @transform_17, window_bounds = array<i64: 1, 32>}, {pipeline_mode = #tpu.pipeline_mode<synchronous>, transform_indices = @transform_18, window_bounds = array<i64: 16, 16>}, {pipeline_mode = #tpu.pipeline_mode<synchronous>, transform_indices = @transform_19, window_bounds = array<i64: 16, 16>}, {pipeline_mode = #tpu.pipeline_mode<synchronous>, transform_indices = @transform_20, window_bounds = array<i64: 32, 32>}]} {
    %c0 = arith.constant 0 : index
    %c0_0 = arith.constant 0 : index
    %0 = vector.load %arg1[%c0, %c0_0] : memref<32x32xf32, #tpu.memory_space<vmem>>, vector<32x32xf32>
    %c0_1 = arith.constant 0 : index
    %c0_2 = arith.constant 0 : index
    %1 = vector.load %arg2[%c0_1, %c0_2] : memref<1x32xf32, #tpu.memory_space<vmem>>, vector<1x32xf32>
    %c0_3 = arith.constant 0 : index
    %c0_4 = arith.constant 0 : index
    %2 = vector.load %arg3[%c0_3, %c0_4] : memref<1x32xf32, #tpu.memory_space<vmem>>, vector<1x32xf32>
    %cst = arith.constant dense<0.000000e+00> : vector<32xf32>
    %3 = vector.multi_reduction <add>, %0, %cst [1] : vector<32x32xf32> to vector<32xf32>
    %4 = vector.shape_cast %3 : vector<32xf32> to vector<32x1xf32>
    %cst_5 = arith.constant 3.200000e+01 : f32
    %5 = vector.broadcast %cst_5 : f32 to vector<32x1xf32>
    %6 = arith.divf %4, %5 : vector<32x1xf32>
    %7 = vector.broadcast %6 : vector<32x1xf32> to vector<32x32xf32>
    %8 = arith.subf %0, %7 : vector<32x32xf32>
    %9 = arith.mulf %8, %8 : vector<32x32xf32>
    %cst_6 = arith.constant dense<0.000000e+00> : vector<32xf32>
    %10 = vector.multi_reduction <add>, %9, %cst_6 [1] : vector<32x32xf32> to vector<32xf32>
    %11 = vector.shape_cast %10 : vector<32xf32> to vector<32x1xf32>
    %cst_7 = arith.constant 3.200000e+01 : f32
    %12 = vector.broadcast %cst_7 : f32 to vector<32x1xf32>
    %13 = arith.divf %11, %12 : vector<32x1xf32>
    %14 = vector.broadcast %6 : vector<32x1xf32> to vector<32x32xf32>
    %15 = arith.subf %0, %14 : vector<32x32xf32>
    %cst_8 = arith.constant 9.99999974E-6 : f32
    %16 = vector.broadcast %cst_8 : f32 to vector<32x1xf32>
    %17 = arith.addf %13, %16 : vector<32x1xf32>
    %18 = math.rsqrt %17 : vector<32x1xf32>
    %19 = vector.broadcast %18 : vector<32x1xf32> to vector<32x32xf32>
    %20 = arith.mulf %15, %19 : vector<32x32xf32>
    %21 = vector.broadcast %1 : vector<1x32xf32> to vector<32x32xf32>
    %22 = arith.mulf %20, %21 : vector<32x32xf32>
    %23 = vector.broadcast %2 : vector<1x32xf32> to vector<32x32xf32>
    %24 = arith.addf %22, %23 : vector<32x32xf32>
    %c0_9 = arith.constant 0 : index
    %c0_10 = arith.constant 0 : index
    %25 = vector.load %arg4[%c0_9, %c0_10] : memref<32x96xf32, #tpu.memory_space<vmem>>, vector<32x96xf32>
    %cst_11 = arith.constant dense<0.000000e+00> : vector<32x96xf32>
    %26 = tpu.matmul %24, %25, %cst_11 {dimension_numbers = #tpu.dot_dimension_numbers<[1], [0], [0], [1], [0, 0, 1, 1], [], []>} : vector<32x32xf32>, vector<32x96xf32>, vector<32x96xf32> -> vector<32x96xf32>
    %27 = vector.extract_strided_slice %26 {offsets = [0, 0], sizes = [16, 24], strides = [1, 1]} : vector<32x96xf32> to vector<16x24xf32>
    %c0_12 = arith.constant 0 : index
    %c0_13 = arith.constant 0 : index
    %c0_14 = arith.constant 0 : index
    %28 = vector.load %arg22[%c0_12, %c0_13, %c0_14] : memref<8x16x24xf32, #tpu.memory_space<vmem>>, vector<1x16x24xf32>
    %29 = vector.shape_cast %28 : vector<1x16x24xf32> to vector<16x24xf32>
    %30 = vector.shape_cast %27 : vector<16x24xf32> to vector<1x16x24xf32>
    tpu.vector_store %arg22[%c0_12, %c0_13, %c0_14], %30 {strides = array<i32>} : memref<8x16x24xf32, #tpu.memory_space<vmem>>, vector<1x16x24xf32>,
    %31 = vector.extract_strided_slice %26 {offsets = [0, 24], sizes = [16, 24], strides = [1, 1]} : vector<32x96xf32> to vector<16x24xf32>
    %c1 = arith.constant 1 : index
    %c0_15 = arith.constant 0 : index
    %c0_16 = arith.constant 0 : index
    %32 = vector.load %arg22[%c1, %c0_15, %c0_16] : memref<8x16x24xf32, #tpu.memory_space<vmem>>, vector<1x16x24xf32>
    %33 = vector.shape_cast %32 : vector<1x16x24xf32> to vector<16x24xf32>
    %34 = vector.shape_cast %31 : vector<16x24xf32> to vector<1x16x24xf32>
    tpu.vector_store %arg22[%c1, %c0_15, %c0_16], %34 {strides = array<i32>} : memref<8x16x24xf32, #tpu.memory_space<vmem>>, vector<1x16x24xf32>,
    %35 = vector.extract_strided_slice %26 {offsets = [0, 48], sizes = [16, 24], strides = [1, 1]} : vector<32x96xf32> to vector<16x24xf32>
    %c2 = arith.constant 2 : index
    %c0_17 = arith.constant 0 : index
    %c0_18 = arith.constant 0 : index
    %36 = vector.load %arg22[%c2, %c0_17, %c0_18] : memref<8x16x24xf32, #tpu.memory_space<vmem>>, vector<1x16x24xf32>
    %37 = vector.shape_cast %36 : vector<1x16x24xf32> to vector<16x24xf32>
    %38 = vector.shape_cast %35 : vector<16x24xf32> to vector<1x16x24xf32>
    tpu.vector_store %arg22[%c2, %c0_17, %c0_18], %38 {strides = array<i32>} : memref<8x16x24xf32, #tpu.memory_space<vmem>>, vector<1x16x24xf32>,
    %39 = vector.extract_strided_slice %26 {offsets = [0, 72], sizes = [16, 24], strides = [1, 1]} : vector<32x96xf32> to vector<16x24xf32>
    %c3 = arith.constant 3 : index
    %c0_19 = arith.constant 0 : index
    %c0_20 = arith.constant 0 : index
    %40 = vector.load %arg22[%c3, %c0_19, %c0_20] : memref<8x16x24xf32, #tpu.memory_space<vmem>>, vector<1x16x24xf32>
    %41 = vector.shape_cast %40 : vector<1x16x24xf32> to vector<16x24xf32>
    %42 = vector.shape_cast %39 : vector<16x24xf32> to vector<1x16x24xf32>
    tpu.vector_store %arg22[%c3, %c0_19, %c0_20], %42 {strides = array<i32>} : memref<8x16x24xf32, #tpu.memory_space<vmem>>, vector<1x16x24xf32>,
    %43 = vector.extract_strided_slice %26 {offsets = [16, 0], sizes = [16, 24], strides = [1, 1]} : vector<32x96xf32> to vector<16x24xf32>
    %c4 = arith.constant 4 : index
    %c0_21 = arith.constant 0 : index
    %c0_22 = arith.constant 0 : index
    %44 = vector.load %arg22[%c4, %c0_21, %c0_22] : memref<8x16x24xf32, #tpu.memory_space<vmem>>, vector<1x16x24xf32>
    %45 = vector.shape_cast %44 : vector<1x16x24xf32> to vector<16x24xf32>
    %46 = vector.shape_cast %43 : vector<16x24xf32> to vector<1x16x24xf32>
    tpu.vector_store %arg22[%c4, %c0_21, %c0_22], %46 {strides = array<i32>} : memref<8x16x24xf32, #tpu.memory_space<vmem>>, vector<1x16x24xf32>,
    %47 = vector.extract_strided_slice %26 {offsets = [16, 24], sizes = [16, 24], strides = [1, 1]} : vector<32x96xf32> to vector<16x24xf32>
    %c5 = arith.constant 5 : index
    %c0_23 = arith.constant 0 : index
    %c0_24 = arith.constant 0 : index
    %48 = vector.load %arg22[%c5, %c0_23, %c0_24] : memref<8x16x24xf32, #tpu.memory_space<vmem>>, vector<1x16x24xf32>
    %49 = vector.shape_cast %48 : vector<1x16x24xf32> to vector<16x24xf32>
    %50 = vector.shape_cast %47 : vector<16x24xf32> to vector<1x16x24xf32>
    tpu.vector_store %arg22[%c5, %c0_23, %c0_24], %50 {strides = array<i32>} : memref<8x16x24xf32, #tpu.memory_space<vmem>>, vector<1x16x24xf32>,
    %51 = vector.extract_strided_slice %26 {offsets = [16, 48], sizes = [16, 24], strides = [1, 1]} : vector<32x96xf32> to vector<16x24xf32>
    %c6 = arith.constant 6 : index
    %c0_25 = arith.constant 0 : index
    %c0_26 = arith.constant 0 : index
    %52 = vector.load %arg22[%c6, %c0_25, %c0_26] : memref<8x16x24xf32, #tpu.memory_space<vmem>>, vector<1x16x24xf32>
    %53 = vector.shape_cast %52 : vector<1x16x24xf32> to vector<16x24xf32>
    %54 = vector.shape_cast %51 : vector<16x24xf32> to vector<1x16x24xf32>
    tpu.vector_store %arg22[%c6, %c0_25, %c0_26], %54 {strides = array<i32>} : memref<8x16x24xf32, #tpu.memory_space<vmem>>, vector<1x16x24xf32>,
    %55 = vector.extract_strided_slice %26 {offsets = [16, 72], sizes = [16, 24], strides = [1, 1]} : vector<32x96xf32> to vector<16x24xf32>
    %c7 = arith.constant 7 : index
    %c0_27 = arith.constant 0 : index
    %c0_28 = arith.constant 0 : index
    %56 = vector.load %arg22[%c7, %c0_27, %c0_28] : memref<8x16x24xf32, #tpu.memory_space<vmem>>, vector<1x16x24xf32>
    %57 = vector.shape_cast %56 : vector<1x16x24xf32> to vector<16x24xf32>
    %58 = vector.shape_cast %55 : vector<16x24xf32> to vector<1x16x24xf32>
    tpu.vector_store %arg22[%c7, %c0_27, %c0_28], %58 {strides = array<i32>} : memref<8x16x24xf32, #tpu.memory_space<vmem>>, vector<1x16x24xf32>,
    %c0_29 = arith.constant 0 : index
    %c0_30 = arith.constant 0 : index
    %c0_31 = arith.constant 0 : index
    %59 = vector.load %arg22[%c0_29, %c0_30, %c0_31] : memref<8x16x24xf32, #tpu.memory_space<vmem>>, vector<8x16x24xf32>
    %60 = vector.extract_strided_slice %59 {offsets = [0, 0, 0], sizes = [8, 16, 8], strides = [1, 1, 1]} : vector<8x16x24xf32> to vector<8x16x8xf32>
    %61 = vector.extract_strided_slice %59 {offsets = [0, 0, 8], sizes = [8, 16, 8], strides = [1, 1, 1]} : vector<8x16x24xf32> to vector<8x16x8xf32>
    %62 = vector.extract_strided_slice %59 {offsets = [0, 0, 16], sizes = [8, 16, 8], strides = [1, 1, 1]} : vector<8x16x24xf32> to vector<8x16x8xf32>
    "tpu.trace_start"() <{level = 10 : i32, message = "gqd,gkd->gqk"}> : () -> ()
    %cst_32 = arith.constant dense<0.000000e+00> : vector<8x16x16xf32>
    %63 = tpu.matmul %60, %61, %cst_32 {dimension_numbers = #tpu.dot_dimension_numbers<[2], [2], [1], [1], [0, 0, 0, 1, 1, 1], [0], [0]>} : vector<8x16x8xf32>, vector<8x16x8xf32>, vector<8x16x16xf32> -> vector<8x16x16xf32>
    "tpu.trace_stop"() : () -> ()
    %cst_33 = arith.constant dense<0xFF800000> : vector<8x16xf32>
    %64 = vector.multi_reduction <maximumf>, %63, %cst_33 [2] : vector<8x16x16xf32> to vector<8x16xf32>
    %65 = vector.shape_cast %64 : vector<8x16xf32> to vector<8x16x1xf32>
    %66 = vector.broadcast %65 : vector<8x16x1xf32> to vector<8x16x16xf32>
    %67 = arith.subf %63, %66 : vector<8x16x16xf32>
    %68 = math.exp %67 : vector<8x16x16xf32>
    %cst_34 = arith.constant dense<0.000000e+00> : vector<8x16xf32>
    %69 = vector.multi_reduction <add>, %68, %cst_34 [2] : vector<8x16x16xf32> to vector<8x16xf32>
    %70 = vector.shape_cast %69 : vector<8x16xf32> to vector<8x16x1xf32>
    %71 = tpu.reciprocal %70 {approx = true} : vector<8x16x1xf32> -> vector<8x16x1xf32>
    %72 = vector.broadcast %71 : vector<8x16x1xf32> to vector<8x16x16xf32>
    %73 = arith.mulf %68, %72 : vector<8x16x16xf32>
    "tpu.trace_start"() <{level = 10 : i32, message = "gqk,gkd->gqd"}> : () -> ()
    %cst_35 = arith.constant dense<0.000000e+00> : vector<8x16x8xf32>
    %74 = tpu.matmul %73, %62, %cst_35 {dimension_numbers = #tpu.dot_dimension_numbers<[2], [1], [1], [2], [0, 0, 0, 1, 1, 2], [0], [0]>} : vector<8x16x16xf32>, vector<8x16x8xf32>, vector<8x16x8xf32> -> vector<8x16x8xf32>
    "tpu.trace_stop"() : () -> ()
    %75 = vector.extract_strided_slice %74 {offsets = [0, 0, 0], sizes = [1, 16, 8], strides = [1, 1, 1]} : vector<8x16x8xf32> to vector<1x16x8xf32>
    %76 = vector.shape_cast %75 : vector<1x16x8xf32> to vector<16x8xf32>
    %c0_36 = arith.constant 0 : index
    %c0_37 = arith.constant 0 : index
    %77 = vector.load %arg23[%c0_36, %c0_37] : memref<32x32xf32, #tpu.memory_space<vmem>>, vector<16x8xf32>
    tpu.vector_store %arg23[%c0_36, %c0_37], %76 {strides = array<i32>} : memref<32x32xf32, #tpu.memory_space<vmem>>, vector<16x8xf32>,
    %78 = vector.extract_strided_slice %74 {offsets = [1, 0, 0], sizes = [1, 16, 8], strides = [1, 1, 1]} : vector<8x16x8xf32> to vector<1x16x8xf32>
    %79 = vector.shape_cast %78 : vector<1x16x8xf32> to vector<16x8xf32>
    %c0_38 = arith.constant 0 : index
    %c8 = arith.constant 8 : index
    %80 = vector.load %arg23[%c0_38, %c8] : memref<32x32xf32, #tpu.memory_space<vmem>>, vector<16x8xf32>
    tpu.vector_store %arg23[%c0_38, %c8], %79 {strides = array<i32>} : memref<32x32xf32, #tpu.memory_space<vmem>>, vector<16x8xf32>,
    %81 = vector.extract_strided_slice %74 {offsets = [2, 0, 0], sizes = [1, 16, 8], strides = [1, 1, 1]} : vector<8x16x8xf32> to vector<1x16x8xf32>
    %82 = vector.shape_cast %81 : vector<1x16x8xf32> to vector<16x8xf32>
    %c0_39 = arith.constant 0 : index
    %c16 = arith.constant 16 : index
    %83 = vector.load %arg23[%c0_39, %c16] : memref<32x32xf32, #tpu.memory_space<vmem>>, vector<16x8xf32>
    tpu.vector_store %arg23[%c0_39, %c16], %82 {strides = array<i32>} : memref<32x32xf32, #tpu.memory_space<vmem>>, vector<16x8xf32>,
    %84 = vector.extract_strided_slice %74 {offsets = [3, 0, 0], sizes = [1, 16, 8], strides = [1, 1, 1]} : vector<8x16x8xf32> to vector<1x16x8xf32>
    %85 = vector.shape_cast %84 : vector<1x16x8xf32> to vector<16x8xf32>
    %c0_40 = arith.constant 0 : index
    %c24 = arith.constant 24 : index
    %86 = vector.load %arg23[%c0_40, %c24] : memref<32x32xf32, #tpu.memory_space<vmem>>, vector<16x8xf32>
    tpu.vector_store %arg23[%c0_40, %c24], %85 {strides = array<i32>} : memref<32x32xf32, #tpu.memory_space<vmem>>, vector<16x8xf32>,
    %87 = vector.extract_strided_slice %74 {offsets = [4, 0, 0], sizes = [1, 16, 8], strides = [1, 1, 1]} : vector<8x16x8xf32> to vector<1x16x8xf32>
    %88 = vector.shape_cast %87 : vector<1x16x8xf32> to vector<16x8xf32>
    %c16_41 = arith.constant 16 : index
    %c0_42 = arith.constant 0 : index
    %89 = vector.load %arg23[%c16_41, %c0_42] : memref<32x32xf32, #tpu.memory_space<vmem>>, vector<16x8xf32>
    tpu.vector_store %arg23[%c16_41, %c0_42], %88 {strides = array<i32>} : memref<32x32xf32, #tpu.memory_space<vmem>>, vector<16x8xf32>,
    %90 = vector.extract_strided_slice %74 {offsets = [5, 0, 0], sizes = [1, 16, 8], strides = [1, 1, 1]} : vector<8x16x8xf32> to vector<1x16x8xf32>
    %91 = vector.shape_cast %90 : vector<1x16x8xf32> to vector<16x8xf32>
    %c16_43 = arith.constant 16 : index
    %c8_44 = arith.constant 8 : index
    %92 = vector.load %arg23[%c16_43, %c8_44] : memref<32x32xf32, #tpu.memory_space<vmem>>, vector<16x8xf32>
    tpu.vector_store %arg23[%c16_43, %c8_44], %91 {strides = array<i32>} : memref<32x32xf32, #tpu.memory_space<vmem>>, vector<16x8xf32>,
    %93 = vector.extract_strided_slice %74 {offsets = [6, 0, 0], sizes = [1, 16, 8], strides = [1, 1, 1]} : vector<8x16x8xf32> to vector<1x16x8xf32>
    %94 = vector.shape_cast %93 : vector<1x16x8xf32> to vector<16x8xf32>
    %c16_45 = arith.constant 16 : index
    %c16_46 = arith.constant 16 : index
    %95 = vector.load %arg23[%c16_45, %c16_46] : memref<32x32xf32, #tpu.memory_space<vmem>>, vector<16x8xf32>
    tpu.vector_store %arg23[%c16_45, %c16_46], %94 {strides = array<i32>} : memref<32x32xf32, #tpu.memory_space<vmem>>, vector<16x8xf32>,
    %96 = vector.extract_strided_slice %74 {offsets = [7, 0, 0], sizes = [1, 16, 8], strides = [1, 1, 1]} : vector<8x16x8xf32> to vector<1x16x8xf32>
    %97 = vector.shape_cast %96 : vector<1x16x8xf32> to vector<16x8xf32>
    %c16_47 = arith.constant 16 : index
    %c24_48 = arith.constant 24 : index
    %98 = vector.load %arg23[%c16_47, %c24_48] : memref<32x32xf32, #tpu.memory_space<vmem>>, vector<16x8xf32>
    tpu.vector_store %arg23[%c16_47, %c24_48], %97 {strides = array<i32>} : memref<32x32xf32, #tpu.memory_space<vmem>>, vector<16x8xf32>,
    %c0_49 = arith.constant 0 : index
    %c0_50 = arith.constant 0 : index
    %99 = vector.load %arg23[%c0_49, %c0_50] : memref<32x32xf32, #tpu.memory_space<vmem>>, vector<32x32xf32>
    %c0_51 = arith.constant 0 : index
    %c0_52 = arith.constant 0 : index
    %100 = vector.load %arg5[%c0_51, %c0_52] : memref<32x32xf32, #tpu.memory_space<vmem>>, vector<32x32xf32>
    %cst_53 = arith.constant dense<0.000000e+00> : vector<32x32xf32>
    %101 = tpu.matmul %99, %100, %cst_53 {dimension_numbers = #tpu.dot_dimension_numbers<[1], [0], [0], [1], [0, 0, 1, 1], [], []>} : vector<32x32xf32>, vector<32x32xf32>, vector<32x32xf32> -> vector<32x32xf32>
    %c0_54 = arith.constant 0 : index
    %c0_55 = arith.constant 0 : index
    %102 = vector.load %arg6[%c0_54, %c0_55] : memref<1x32xf32, #tpu.memory_space<vmem>>, vector<1x32xf32>
    %103 = vector.broadcast %102 : vector<1x32xf32> to vector<32x32xf32>
    %104 = arith.addf %101, %103 : vector<32x32xf32>
    %105 = arith.addf %0, %104 : vector<32x32xf32>
    %106 = vector.extract_strided_slice %105 {offsets = [0, 0], sizes = [8, 32], strides = [1, 1]} : vector<32x32xf32> to vector<8x32xf32>
    %107 = vector.extract_strided_slice %105 {offsets = [16, 0], sizes = [8, 32], strides = [1, 1]} : vector<32x32xf32> to vector<8x32xf32>
    %108 = tpu.concatenate %106, %107 in 0 : vector<8x32xf32>, vector<8x32xf32> -> vector<16x32xf32>
    %109 = vector.extract_strided_slice %105 {offsets = [8, 0], sizes = [8, 32], strides = [1, 1]} : vector<32x32xf32> to vector<8x32xf32>
    %110 = vector.extract_strided_slice %105 {offsets = [24, 0], sizes = [8, 32], strides = [1, 1]} : vector<32x32xf32> to vector<8x32xf32>
    %111 = tpu.concatenate %109, %110 in 0 : vector<8x32xf32>, vector<8x32xf32> -> vector<16x32xf32>
    %c0_56 = arith.constant 0 : index
    %c0_57 = arith.constant 0 : index
    %112 = vector.load %arg7[%c0_56, %c0_57] : memref<1x32xf32, #tpu.memory_space<vmem>>, vector<1x32xf32>
    %c0_58 = arith.constant 0 : index
    %c0_59 = arith.constant 0 : index
    %113 = vector.load %arg8[%c0_58, %c0_59] : memref<1x32xf32, #tpu.memory_space<vmem>>, vector<1x32xf32>
    %cst_60 = arith.constant dense<0.000000e+00> : vector<16xf32>
    %114 = vector.multi_reduction <add>, %108, %cst_60 [1] : vector<16x32xf32> to vector<16xf32>
    %115 = vector.shape_cast %114 : vector<16xf32> to vector<16x1xf32>
    %cst_61 = arith.constant 3.200000e+01 : f32
    %116 = vector.broadcast %cst_61 : f32 to vector<16x1xf32>
    %117 = arith.divf %115, %116 : vector<16x1xf32>
    %118 = vector.broadcast %117 : vector<16x1xf32> to vector<16x32xf32>
    %119 = arith.subf %108, %118 : vector<16x32xf32>
    %120 = arith.mulf %119, %119 : vector<16x32xf32>
    %cst_62 = arith.constant dense<0.000000e+00> : vector<16xf32>
    %121 = vector.multi_reduction <add>, %120, %cst_62 [1] : vector<16x32xf32> to vector<16xf32>
    %122 = vector.shape_cast %121 : vector<16xf32> to vector<16x1xf32>
    %cst_63 = arith.constant 3.200000e+01 : f32
    %123 = vector.broadcast %cst_63 : f32 to vector<16x1xf32>
    %124 = arith.divf %122, %123 : vector<16x1xf32>
    %125 = vector.broadcast %117 : vector<16x1xf32> to vector<16x32xf32>
    %126 = arith.subf %108, %125 : vector<16x32xf32>
    %cst_64 = arith.constant 9.99999974E-6 : f32
    %127 = vector.broadcast %cst_64 : f32 to vector<16x1xf32>
    %128 = arith.addf %124, %127 : vector<16x1xf32>
    %129 = math.rsqrt %128 : vector<16x1xf32>
    %130 = vector.broadcast %129 : vector<16x1xf32> to vector<16x32xf32>
    %131 = arith.mulf %126, %130 : vector<16x32xf32>
    %132 = vector.broadcast %112 : vector<1x32xf32> to vector<16x32xf32>
    %133 = arith.mulf %131, %132 : vector<16x32xf32>
    %134 = vector.broadcast %113 : vector<1x32xf32> to vector<16x32xf32>
    %135 = arith.addf %133, %134 : vector<16x32xf32>
    %c0_65 = arith.constant 0 : index
    %c0_66 = arith.constant 0 : index
    %136 = vector.load %arg9[%c0_65, %c0_66] : memref<32x128xf32, #tpu.memory_space<vmem>>, vector<32x128xf32>
    %cst_67 = arith.constant dense<0.000000e+00> : vector<16x128xf32>
    %137 = tpu.matmul %135, %136, %cst_67 {dimension_numbers = #tpu.dot_dimension_numbers<[1], [0], [0], [1], [0, 0, 1, 1], [], []>} : vector<16x32xf32>, vector<32x128xf32>, vector<16x128xf32> -> vector<16x128xf32>
    %c0_68 = arith.constant 0 : index
    %c0_69 = arith.constant 0 : index
    %138 = vector.load %arg10[%c0_68, %c0_69] : memref<1x128xf32, #tpu.memory_space<vmem>>, vector<1x128xf32>
    %139 = vector.broadcast %138 : vector<1x128xf32> to vector<16x128xf32>
    %140 = arith.addf %137, %139 : vector<16x128xf32>
    %cst_70 = arith.constant 5.000000e-01 : f32
    %141 = vector.broadcast %cst_70 : f32 to vector<16x128xf32>
    %142 = arith.mulf %141, %140 : vector<16x128xf32>
    %cst_71 = arith.constant 0.707106769 : f32
    %143 = vector.broadcast %cst_71 : f32 to vector<16x128xf32>
    %144 = arith.mulf %140, %143 : vector<16x128xf32>
    %145 = math.absf %144 : vector<16x128xf32>
    %cst_72 = arith.constant 0.327591091 : f32
    %146 = vector.broadcast %cst_72 : f32 to vector<16x128xf32>
    %147 = arith.mulf %146, %145 : vector<16x128xf32>
    %cst_73 = arith.constant 1.000000e+00 : f32
    %148 = vector.broadcast %cst_73 : f32 to vector<16x128xf32>
    %149 = arith.addf %148, %147 : vector<16x128xf32>
    %150 = tpu.reciprocal %149 {approx = true} : vector<16x128xf32> -> vector<16x128xf32>
    %cst_74 = arith.constant 1.06140542 : f32
    %151 = vector.broadcast %cst_74 : f32 to vector<16x128xf32>
    %152 = arith.mulf %151, %150 : vector<16x128xf32>
    %cst_75 = arith.constant -1.45315206 : f32
    %153 = vector.broadcast %cst_75 : f32 to vector<16x128xf32>
    %154 = arith.addf %152, %153 : vector<16x128xf32>
    %155 = arith.mulf %154, %150 : vector<16x128xf32>
    %cst_76 = arith.constant 1.42141378 : f32
    %156 = vector.broadcast %cst_76 : f32 to vector<16x128xf32>
    %157 = arith.addf %155, %156 : vector<16x128xf32>
    %158 = arith.mulf %157, %150 : vector<16x128xf32>
    %cst_77 = arith.constant -0.284496725 : f32
    %159 = vector.broadcast %cst_77 : f32 to vector<16x128xf32>
    %160 = arith.addf %158, %159 : vector<16x128xf32>
    %161 = arith.mulf %160, %150 : vector<16x128xf32>
    %cst_78 = arith.constant 0.254829586 : f32
    %162 = vector.broadcast %cst_78 : f32 to vector<16x128xf32>
    %163 = arith.addf %161, %162 : vector<16x128xf32>
    %164 = arith.mulf %163, %150 : vector<16x128xf32>
    %cst_79 = arith.constant 0.000000e+00 : f32
    %165 = vector.broadcast %cst_79 : f32 to vector<16x128xf32>
    %166 = arith.subf %165, %145 : vector<16x128xf32>
    %167 = arith.mulf %166, %145 : vector<16x128xf32>
    %168 = math.exp %167 : vector<16x128xf32>
    %169 = arith.mulf %164, %168 : vector<16x128xf32>
    %cst_80 = arith.constant 1.000000e+00 : f32
    %170 = vector.broadcast %cst_80 : f32 to vector<16x128xf32>
    %171 = arith.subf %170, %169 : vector<16x128xf32>
    %cst_81 = arith.constant 0.000000e+00 : f32
    %172 = vector.broadcast %cst_81 : f32 to vector<16x128xf32>
    %173 = arith.cmpf oge, %144, %172 : vector<16x128xf32>
    %cst_82 = arith.constant 0.000000e+00 : f32
    %174 = vector.broadcast %cst_82 : f32 to vector<16x128xf32>
    %175 = arith.subf %174, %171 : vector<16x128xf32>
    %176 = arith.select %173, %171, %175 : vector<16x128xi1>, vector<16x128xf32>
    %cst_83 = arith.constant 1.000000e+00 : f32
    %177 = vector.broadcast %cst_83 : f32 to vector<16x128xf32>
    %178 = arith.addf %177, %176 : vector<16x128xf32>
    %179 = arith.mulf %142, %178 : vector<16x128xf32>
    %c0_84 = arith.constant 0 : index
    %c0_85 = arith.constant 0 : index
    %180 = vector.load %arg11[%c0_84, %c0_85] : memref<128x32xf32, #tpu.memory_space<vmem>>, vector<128x32xf32>
    %cst_86 = arith.constant dense<0.000000e+00> : vector<16x32xf32>
    %181 = tpu.matmul %179, %180, %cst_86 {dimension_numbers = #tpu.dot_dimension_numbers<[1], [0], [0], [1], [0, 0, 1, 1], [], []>} : vector<16x128xf32>, vector<128x32xf32>, vector<16x32xf32> -> vector<16x32xf32>
    %c0_87 = arith.constant 0 : index
    %c0_88 = arith.constant 0 : index
    %182 = vector.load %arg12[%c0_87, %c0_88] : memref<1x32xf32, #tpu.memory_space<vmem>>, vector<1x32xf32>
    %183 = vector.broadcast %182 : vector<1x32xf32> to vector<16x32xf32>
    %184 = arith.addf %181, %183 : vector<16x32xf32>
    %185 = arith.addf %108, %184 : vector<16x32xf32>
    %c0_89 = arith.constant 0 : index
    %c0_90 = arith.constant 0 : index
    %186 = vector.load %arg13[%c0_89, %c0_90] : memref<1x32xf32, #tpu.memory_space<vmem>>, vector<1x32xf32>
    %c0_91 = arith.constant 0 : index
    %c0_92 = arith.constant 0 : index
    %187 = vector.load %arg14[%c0_91, %c0_92] : memref<1x32xf32, #tpu.memory_space<vmem>>, vector<1x32xf32>
    %cst_93 = arith.constant dense<0.000000e+00> : vector<16xf32>
    %188 = vector.multi_reduction <add>, %111, %cst_93 [1] : vector<16x32xf32> to vector<16xf32>
    %189 = vector.shape_cast %188 : vector<16xf32> to vector<16x1xf32>
    %cst_94 = arith.constant 3.200000e+01 : f32
    %190 = vector.broadcast %cst_94 : f32 to vector<16x1xf32>
    %191 = arith.divf %189, %190 : vector<16x1xf32>
    %192 = vector.broadcast %191 : vector<16x1xf32> to vector<16x32xf32>
    %193 = arith.subf %111, %192 : vector<16x32xf32>
    %194 = arith.mulf %193, %193 : vector<16x32xf32>
    %cst_95 = arith.constant dense<0.000000e+00> : vector<16xf32>
    %195 = vector.multi_reduction <add>, %194, %cst_95 [1] : vector<16x32xf32> to vector<16xf32>
    %196 = vector.shape_cast %195 : vector<16xf32> to vector<16x1xf32>
    %cst_96 = arith.constant 3.200000e+01 : f32
    %197 = vector.broadcast %cst_96 : f32 to vector<16x1xf32>
    %198 = arith.divf %196, %197 : vector<16x1xf32>
    %199 = vector.broadcast %191 : vector<16x1xf32> to vector<16x32xf32>
    %200 = arith.subf %111, %199 : vector<16x32xf32>
    %cst_97 = arith.constant 9.99999974E-6 : f32
    %201 = vector.broadcast %cst_97 : f32 to vector<16x1xf32>
    %202 = arith.addf %198, %201 : vector<16x1xf32>
    %203 = math.rsqrt %202 : vector<16x1xf32>
    %204 = vector.broadcast %203 : vector<16x1xf32> to vector<16x32xf32>
    %205 = arith.mulf %200, %204 : vector<16x32xf32>
    %206 = vector.broadcast %186 : vector<1x32xf32> to vector<16x32xf32>
    %207 = arith.mulf %205, %206 : vector<16x32xf32>
    %208 = vector.broadcast %187 : vector<1x32xf32> to vector<16x32xf32>
    %209 = arith.addf %207, %208 : vector<16x32xf32>
    %c0_98 = arith.constant 0 : index
    %c0_99 = arith.constant 0 : index
    %210 = vector.load %arg19[%c0_98, %c0_99] : memref<16x16xf32, #tpu.memory_space<vmem>>, vector<16x16xf32>
    %cst_100 = arith.constant dense<0.000000e+00> : vector<16x32xf32>
    %211 = tpu.matmul %210, %209, %cst_100 {dimension_numbers = #tpu.dot_dimension_numbers<[1], [0], [0], [1], [0, 0, 1, 1], [], []>} : vector<16x16xf32>, vector<16x32xf32>, vector<16x32xf32> -> vector<16x32xf32>
    %c0_101 = arith.constant 0 : index
    %c0_102 = arith.constant 0 : index
    %212 = vector.load %arg15[%c0_101, %c0_102] : memref<32x128xf32, #tpu.memory_space<vmem>>, vector<32x128xf32>
    %cst_103 = arith.constant dense<0.000000e+00> : vector<16x128xf32>
    %213 = tpu.matmul %211, %212, %cst_103 {dimension_numbers = #tpu.dot_dimension_numbers<[1], [0], [0], [1], [0, 0, 1, 1], [], []>} : vector<16x32xf32>, vector<32x128xf32>, vector<16x128xf32> -> vector<16x128xf32>
    %c0_104 = arith.constant 0 : index
    %c0_105 = arith.constant 0 : index
    %214 = vector.load %arg16[%c0_104, %c0_105] : memref<1x128xf32, #tpu.memory_space<vmem>>, vector<1x128xf32>
    %215 = vector.broadcast %214 : vector<1x128xf32> to vector<16x128xf32>
    %216 = arith.addf %213, %215 : vector<16x128xf32>
    %cst_106 = arith.constant 5.000000e-01 : f32
    %217 = vector.broadcast %cst_106 : f32 to vector<16x128xf32>
    %218 = arith.mulf %217, %216 : vector<16x128xf32>
    %cst_107 = arith.constant 0.707106769 : f32
    %219 = vector.broadcast %cst_107 : f32 to vector<16x128xf32>
    %220 = arith.mulf %216, %219 : vector<16x128xf32>
    %221 = math.absf %220 : vector<16x128xf32>
    %cst_108 = arith.constant 0.327591091 : f32
    %222 = vector.broadcast %cst_108 : f32 to vector<16x128xf32>
    %223 = arith.mulf %222, %221 : vector<16x128xf32>
    %cst_109 = arith.constant 1.000000e+00 : f32
    %224 = vector.broadcast %cst_109 : f32 to vector<16x128xf32>
    %225 = arith.addf %224, %223 : vector<16x128xf32>
    %226 = tpu.reciprocal %225 {approx = true} : vector<16x128xf32> -> vector<16x128xf32>
    %cst_110 = arith.constant 1.06140542 : f32
    %227 = vector.broadcast %cst_110 : f32 to vector<16x128xf32>
    %228 = arith.mulf %227, %226 : vector<16x128xf32>
    %cst_111 = arith.constant -1.45315206 : f32
    %229 = vector.broadcast %cst_111 : f32 to vector<16x128xf32>
    %230 = arith.addf %228, %229 : vector<16x128xf32>
    %231 = arith.mulf %230, %226 : vector<16x128xf32>
    %cst_112 = arith.constant 1.42141378 : f32
    %232 = vector.broadcast %cst_112 : f32 to vector<16x128xf32>
    %233 = arith.addf %231, %232 : vector<16x128xf32>
    %234 = arith.mulf %233, %226 : vector<16x128xf32>
    %cst_113 = arith.constant -0.284496725 : f32
    %235 = vector.broadcast %cst_113 : f32 to vector<16x128xf32>
    %236 = arith.addf %234, %235 : vector<16x128xf32>
    %237 = arith.mulf %236, %226 : vector<16x128xf32>
    %cst_114 = arith.constant 0.254829586 : f32
    %238 = vector.broadcast %cst_114 : f32 to vector<16x128xf32>
    %239 = arith.addf %237, %238 : vector<16x128xf32>
    %240 = arith.mulf %239, %226 : vector<16x128xf32>
    %cst_115 = arith.constant 0.000000e+00 : f32
    %241 = vector.broadcast %cst_115 : f32 to vector<16x128xf32>
    %242 = arith.subf %241, %221 : vector<16x128xf32>
    %243 = arith.mulf %242, %221 : vector<16x128xf32>
    %244 = math.exp %243 : vector<16x128xf32>
    %245 = arith.mulf %240, %244 : vector<16x128xf32>
    %cst_116 = arith.constant 1.000000e+00 : f32
    %246 = vector.broadcast %cst_116 : f32 to vector<16x128xf32>
    %247 = arith.subf %246, %245 : vector<16x128xf32>
    %cst_117 = arith.constant 0.000000e+00 : f32
    %248 = vector.broadcast %cst_117 : f32 to vector<16x128xf32>
    %249 = arith.cmpf oge, %220, %248 : vector<16x128xf32>
    %cst_118 = arith.constant 0.000000e+00 : f32
    %250 = vector.broadcast %cst_118 : f32 to vector<16x128xf32>
    %251 = arith.subf %250, %247 : vector<16x128xf32>
    %252 = arith.select %249, %247, %251 : vector<16x128xi1>, vector<16x128xf32>
    %cst_119 = arith.constant 1.000000e+00 : f32
    %253 = vector.broadcast %cst_119 : f32 to vector<16x128xf32>
    %254 = arith.addf %253, %252 : vector<16x128xf32>
    %255 = arith.mulf %218, %254 : vector<16x128xf32>
    %c0_120 = arith.constant 0 : index
    %c0_121 = arith.constant 0 : index
    %256 = vector.load %arg17[%c0_120, %c0_121] : memref<128x32xf32, #tpu.memory_space<vmem>>, vector<128x32xf32>
    %cst_122 = arith.constant dense<0.000000e+00> : vector<16x32xf32>
    %257 = tpu.matmul %255, %256, %cst_122 {dimension_numbers = #tpu.dot_dimension_numbers<[1], [0], [0], [1], [0, 0, 1, 1], [], []>} : vector<16x128xf32>, vector<128x32xf32>, vector<16x32xf32> -> vector<16x32xf32>
    %c0_123 = arith.constant 0 : index
    %c0_124 = arith.constant 0 : index
    %258 = vector.load %arg18[%c0_123, %c0_124] : memref<1x32xf32, #tpu.memory_space<vmem>>, vector<1x32xf32>
    %259 = vector.broadcast %258 : vector<1x32xf32> to vector<16x32xf32>
    %260 = arith.addf %257, %259 : vector<16x32xf32>
    %c0_125 = arith.constant 0 : index
    %c0_126 = arith.constant 0 : index
    %261 = vector.load %arg20[%c0_125, %c0_126] : memref<16x16xf32, #tpu.memory_space<vmem>>, vector<16x16xf32>
    %cst_127 = arith.constant dense<0.000000e+00> : vector<16x32xf32>
    %262 = tpu.matmul %261, %260, %cst_127 {dimension_numbers = #tpu.dot_dimension_numbers<[1], [0], [0], [1], [0, 0, 1, 1], [], []>} : vector<16x16xf32>, vector<16x32xf32>, vector<16x32xf32> -> vector<16x32xf32>
    %263 = arith.addf %111, %262 : vector<16x32xf32>
    %264 = vector.extract_strided_slice %185 {offsets = [0, 0], sizes = [8, 32], strides = [1, 1]} : vector<16x32xf32> to vector<8x32xf32>
    %c0_128 = arith.constant 0 : index
    %c0_129 = arith.constant 0 : index
    %265 = vector.load %arg21[%c0_128, %c0_129] : memref<32x32xf32, #tpu.memory_space<vmem>>, vector<8x32xf32>
    tpu.vector_store %arg21[%c0_128, %c0_129], %264 {strides = array<i32>} : memref<32x32xf32, #tpu.memory_space<vmem>>, vector<8x32xf32>,
    %266 = vector.extract_strided_slice %263 {offsets = [0, 0], sizes = [8, 32], strides = [1, 1]} : vector<16x32xf32> to vector<8x32xf32>
    %c8_130 = arith.constant 8 : index
    %c0_131 = arith.constant 0 : index
    %267 = vector.load %arg21[%c8_130, %c0_131] : memref<32x32xf32, #tpu.memory_space<vmem>>, vector<8x32xf32>
    tpu.vector_store %arg21[%c8_130, %c0_131], %266 {strides = array<i32>} : memref<32x32xf32, #tpu.memory_space<vmem>>, vector<8x32xf32>,
    %268 = vector.extract_strided_slice %185 {offsets = [8, 0], sizes = [8, 32], strides = [1, 1]} : vector<16x32xf32> to vector<8x32xf32>
    %c16_132 = arith.constant 16 : index
    %c0_133 = arith.constant 0 : index
    %269 = vector.load %arg21[%c16_132, %c0_133] : memref<32x32xf32, #tpu.memory_space<vmem>>, vector<8x32xf32>
    tpu.vector_store %arg21[%c16_132, %c0_133], %268 {strides = array<i32>} : memref<32x32xf32, #tpu.memory_space<vmem>>, vector<8x32xf32>,
    %270 = vector.extract_strided_slice %263 {offsets = [8, 0], sizes = [8, 32], strides = [1, 1]} : vector<16x32xf32> to vector<8x32xf32>
    %c24_134 = arith.constant 24 : index
    %c0_135 = arith.constant 0 : index
    %271 = vector.load %arg21[%c24_134, %c0_135] : memref<32x32xf32, #tpu.memory_space<vmem>>, vector<8x32xf32>
    tpu.vector_store %arg21[%c24_134, %c0_135], %270 {strides = array<i32>} : memref<32x32xf32, #tpu.memory_space<vmem>>, vector<8x32xf32>,
    return
  }
  func.func @transform_0(%arg0: i32) -> (i32, i32) {
    %c0_i32 = arith.constant 0 : i32
    %c0_i32_0 = arith.constant 0 : i32
    %c0_i32_1 = arith.constant 0 : i32
    return %c0_i32, %c0_i32_0 : i32, i32
  }
  func.func @transform_1(%arg0: i32) -> (i32, i32) {
    %c0_i32 = arith.constant 0 : i32
    %c0_i32_0 = arith.constant 0 : i32
    %c0_i32_1 = arith.constant 0 : i32
    return %c0_i32, %c0_i32_0 : i32, i32
  }
  func.func @transform_2(%arg0: i32) -> (i32, i32) {
    %c0_i32 = arith.constant 0 : i32
    %c0_i32_0 = arith.constant 0 : i32
    %c0_i32_1 = arith.constant 0 : i32
    return %c0_i32, %c0_i32_0 : i32, i32
  }
  func.func @transform_3(%arg0: i32) -> (i32, i32) {
    %c0_i32 = arith.constant 0 : i32
    %c0_i32_0 = arith.constant 0 : i32
    %c0_i32_1 = arith.constant 0 : i32
    return %c0_i32, %c0_i32_0 : i32, i32
  }
  func.func @transform_4(%arg0: i32) -> (i32, i32) {
    %c0_i32 = arith.constant 0 : i32
    %c0_i32_0 = arith.constant 0 : i32
    %c0_i32_1 = arith.constant 0 : i32
    return %c0_i32, %c0_i32_0 : i32, i32
  }
  func.func @transform_5(%arg0: i32) -> (i32, i32) {
    %c0_i32 = arith.constant 0 : i32
    %c0_i32_0 = arith.constant 0 : i32
    %c0_i32_1 = arith.constant 0 : i32
    return %c0_i32, %c0_i32_0 : i32, i32
  }
  func.func @transform_6(%arg0: i32) -> (i32, i32) {
    %c0_i32 = arith.constant 0 : i32
    %c0_i32_0 = arith.constant 0 : i32
    %c0_i32_1 = arith.constant 0 : i32
    return %c0_i32, %c0_i32_0 : i32, i32
  }
  func.func @transform_7(%arg0: i32) -> (i32, i32) {
    %c0_i32 = arith.constant 0 : i32
    %c0_i32_0 = arith.constant 0 : i32
    %c0_i32_1 = arith.constant 0 : i32
    return %c0_i32, %c0_i32_0 : i32, i32
  }
  func.func @transform_8(%arg0: i32) -> (i32, i32) {
    %c0_i32 = arith.constant 0 : i32
    %c0_i32_0 = arith.constant 0 : i32
    %c0_i32_1 = arith.constant 0 : i32
    return %c0_i32, %c0_i32_0 : i32, i32
  }
  func.func @transform_9(%arg0: i32) -> (i32, i32) {
    %c0_i32 = arith.constant 0 : i32
    %c0_i32_0 = arith.constant 0 : i32
    %c0_i32_1 = arith.constant 0 : i32
    return %c0_i32, %c0_i32_0 : i32, i32
  }
  func.func @transform_10(%arg0: i32) -> (i32, i32) {
    %c0_i32 = arith.constant 0 : i32
    %c0_i32_0 = arith.constant 0 : i32
    %c0_i32_1 = arith.constant 0 : i32
    return %c0_i32, %c0_i32_0 : i32, i32
  }
  func.func @transform_11(%arg0: i32) -> (i32, i32) {
    %c0_i32 = arith.constant 0 : i32
    %c0_i32_0 = arith.constant 0 : i32
    %c0_i32_1 = arith.constant 0 : i32
    return %c0_i32, %c0_i32_0 : i32, i32
  }
  func.func @transform_12(%arg0: i32) -> (i32, i32) {
    %c0_i32 = arith.constant 0 : i32
    %c0_i32_0 = arith.constant 0 : i32
    %c0_i32_1 = arith.constant 0 : i32
    return %c0_i32, %c0_i32_0 : i32, i32
  }
  func.func @transform_13(%arg0: i32) -> (i32, i32) {
    %c0_i32 = arith.constant 0 : i32
    %c0_i32_0 = arith.constant 0 : i32
    %c0_i32_1 = arith.constant 0 : i32
    return %c0_i32, %c0_i32_0 : i32, i32
  }
  func.func @transform_14(%arg0: i32) -> (i32, i32) {
    %c0_i32 = arith.constant 0 : i32
    %c0_i32_0 = arith.constant 0 : i32
    %c0_i32_1 = arith.constant 0 : i32
    return %c0_i32, %c0_i32_0 : i32, i32
  }
  func.func @transform_15(%arg0: i32) -> (i32, i32) {
    %c0_i32 = arith.constant 0 : i32
    %c0_i32_0 = arith.constant 0 : i32
    %c0_i32_1 = arith.constant 0 : i32
    return %c0_i32, %c0_i32_0 : i32, i32
  }
  func.func @transform_16(%arg0: i32) -> (i32, i32) {
    %c0_i32 = arith.constant 0 : i32
    %c0_i32_0 = arith.constant 0 : i32
    %c0_i32_1 = arith.constant 0 : i32
    return %c0_i32, %c0_i32_0 : i32, i32
  }
  func.func @transform_17(%arg0: i32) -> (i32, i32) {
    %c0_i32 = arith.constant 0 : i32
    %c0_i32_0 = arith.constant 0 : i32
    %c0_i32_1 = arith.constant 0 : i32
    return %c0_i32, %c0_i32_0 : i32, i32
  }
  func.func @transform_18(%arg0: i32) -> (i32, i32) {
    %c0_i32 = arith.constant 0 : i32
    %c0_i32_0 = arith.constant 0 : i32
    %c0_i32_1 = arith.constant 0 : i32
    return %c0_i32, %c0_i32_0 : i32, i32
  }
  func.func @transform_19(%arg0: i32) -> (i32, i32) {
    %c0_i32 = arith.constant 0 : i32
    %c0_i32_0 = arith.constant 0 : i32
    %c0_i32_1 = arith.constant 0 : i32
    return %c0_i32, %c0_i32_0 : i32, i32
  }
  func.func @transform_20(%arg0: i32) -> (i32, i32) {
    %c0_i32 = arith.constant 0 : i32
    %c0_i32_0 = arith.constant 0 : i32
    %c0_i32_1 = arith.constant 0 : i32
    return %c0_i32, %c0_i32_0 : i32, i32
  }
}

</mosaic_0001>

<llo_original>
// kernel: tpu_custom_call.1
$region0: #{tpu_custom_call.1}
  #allocation0 [shape = 'u32[]', space=smem, size = 0x4, offset = 0x4, fixed_abs, tag = 'smem constant byte address 0x4 - core index']
  #allocation1 [shape = 'u32[144,128]{1,0:T(1,128)}', space=vmem, size = 0x12000, scoped, tag = 'internal scratch']
  #allocation2 [shape = 'f32[8,16,24]{2,1,0:T(8,128)}', space=vmem, size = 0x10000, scoped, tag = 'scratch operand']
  #allocation3 [shape = 'f32[32,32]{1,0:T(8,128)}', space=vmem, size = 0x4000, scoped, tag = 'scratch operand']
  %s0 = inlined_call_operand.vmem [shape: f32[32,32], index: 0, kind: input, shape index: {}]
  %s1 = inlined_call_operand.vmem [shape: f32[1,32], index: 1, kind: input, shape index: {}]
  %s2 = inlined_call_operand.vmem [shape: f32[1,32], index: 2, kind: input, shape index: {}]
  %s3 = inlined_call_operand.vmem [shape: f32[32,96], index: 3, kind: input, shape index: {}]
  %s4 = inlined_call_operand.vmem [shape: f32[32,32], index: 4, kind: input, shape index: {}]
  %s5 = inlined_call_operand.vmem [shape: f32[1,32], index: 5, kind: input, shape index: {}]
  %s6 = inlined_call_operand.vmem [shape: f32[1,32], index: 6, kind: input, shape index: {}]
  %s7 = inlined_call_operand.vmem [shape: f32[1,32], index: 7, kind: input, shape index: {}]
  %s8 = inlined_call_operand.vmem [shape: f32[32,128], index: 8, kind: input, shape index: {}]
  %s9 = inlined_call_operand.vmem [shape: f32[1,128], index: 9, kind: input, shape index: {}]
  %s10 = inlined_call_operand.vmem [shape: f32[128,32], index: 10, kind: input, shape index: {}]
  %s11 = inlined_call_operand.vmem [shape: f32[1,32], index: 11, kind: input, shape index: {}]
  %s12 = inlined_call_operand.vmem [shape: f32[1,32], index: 12, kind: input, shape index: {}]
  %s13 = inlined_call_operand.vmem [shape: f32[1,32], index: 13, kind: input, shape index: {}]
  %s14 = inlined_call_operand.vmem [shape: f32[32,128], index: 14, kind: input, shape index: {}]
  %s15 = inlined_call_operand.vmem [shape: f32[1,128], index: 15, kind: input, shape index: {}]
  %s16 = inlined_call_operand.vmem [shape: f32[128,32], index: 16, kind: input, shape index: {}]
  %s17 = inlined_call_operand.vmem [shape: f32[1,32], index: 17, kind: input, shape index: {}]
  %s18 = inlined_call_operand.vmem [shape: f32[16,16], index: 18, kind: input, shape index: {}]
  %s19 = inlined_call_operand.vmem [shape: f32[16,16], index: 19, kind: input, shape index: {}]
  %s20 = inlined_call_operand.hbm [shape: f32[32,32], index: 20, kind: output, shape index: {}]
  %s21 = sld [smem:[#allocation0]]
  $region90: #{tpu_custom_call.1} parent=0
    _
  %s23 = ssub.s32 1, %s21
  %s24 = scalar_select 0, %s23, %s21
  $region1: #{tpu_custom_call.1} parent=0
    #allocation4 [shape = 'u8[16384]{0}', space=vmem, size = 0x4000, scoped, tag = 'output window, operand 0, single buffered']
    #allocation5 [shape = 's32[1]{0}', space=sflag, size = 0x4, scoped, tag = 'scoped memory for tpu_custom_call.1']
    %25 = vsyncpa [#allocation5], 0
    // Predicated region
    $region2: #{tpu_custom_call.1} parent=1 // pred_check
      _
    $region3: #{tpu_custom_call.1} parent=1 // pred_check_branch
      %27 = sbr.rel (0) target = $region5
    $region4: #{tpu_custom_call.1} parent=1 // pred_region
      _
    $region5: #{tpu_custom_call.1} parent=1 // pred_fallthru
      _
    // Predicated region
    $region6: #{tpu_custom_call.1} parent=1 // pred_check
      _
    $region7: #{tpu_custom_call.1} parent=1 // pred_check_branch
      %29 = sbr.rel (0) target = $region9
    $region8: #{tpu_custom_call.1} parent=1 // pred_region
      _
    $region9: #{tpu_custom_call.1} parent=1 // pred_fallthru
      _
    // Predicated region
    $region10: #{tpu_custom_call.1} parent=1 // pred_check
      _
    $region11: #{tpu_custom_call.1} parent=1 // pred_check_branch
      %31 = sbr.rel (0) target = $region13
    $region12: #{tpu_custom_call.1} parent=1 // pred_region
      _
    $region13: #{tpu_custom_call.1} parent=1 // pred_fallthru
      _
    // Predicated region
    $region14: #{tpu_custom_call.1} parent=1 // pred_check
      _
    $region15: #{tpu_custom_call.1} parent=1 // pred_check_branch
      %33 = sbr.rel (0) target = $region17
    $region16: #{tpu_custom_call.1} parent=1 // pred_region
      _
    $region17: #{tpu_custom_call.1} parent=1 // pred_fallthru
      _
    // Predicated region
    $region18: #{tpu_custom_call.1} parent=1 // pred_check
      _
    $region19: #{tpu_custom_call.1} parent=1 // pred_check_branch
      %35 = sbr.rel (0) target = $region21
    $region20: #{tpu_custom_call.1} parent=1 // pred_region
      _
    $region21: #{tpu_custom_call.1} parent=1 // pred_fallthru
      _
    // Predicated region
    $region22: #{tpu_custom_call.1} parent=1 // pred_check
      _
    $region23: #{tpu_custom_call.1} parent=1 // pred_check_branch
      %37 = sbr.rel (0) target = $region25
    $region24: #{tpu_custom_call.1} parent=1 // pred_region
      _
    $region25: #{tpu_custom_call.1} parent=1 // pred_fallthru
      _
    // Predicated region
    $region26: #{tpu_custom_call.1} parent=1 // pred_check
      _
    $region27: #{tpu_custom_call.1} parent=1 // pred_check_branch
      %39 = sbr.rel (0) target = $region29
    $region28: #{tpu_custom_call.1} parent=1 // pred_region
      _
    $region29: #{tpu_custom_call.1} parent=1 // pred_fallthru
      _
    // Predicated region
    $region30: #{tpu_custom_call.1} parent=1 // pred_check
      _
    $region31: #{tpu_custom_call.1} parent=1 // pred_check_branch
      %41 = sbr.rel (0) target = $region33
    $region32: #{tpu_custom_call.1} parent=1 // pred_region
      _
    $region33: #{tpu_custom_call.1} parent=1 // pred_fallthru
      _
    // Predicated region
    $region34: #{tpu_custom_call.1} parent=1 // pred_check
      _
    $region35: #{tpu_custom_call.1} parent=1 // pred_check_branch
      %43 = sbr.rel (0) target = $region37
    $region36: #{tpu_custom_call.1} parent=1 // pred_region
      _
    $region37: #{tpu_custom_call.1} parent=1 // pred_fallthru
      _
    // Predicated region
    $region38: #{tpu_custom_call.1} parent=1 // pred_check
      _
    $region39: #{tpu_custom_call.1} parent=1 // pred_check_branch
      %45 = sbr.rel (0) target = $region41
    $region40: #{tpu_custom_call.1} parent=1 // pred_region
      _
    $region41: #{tpu_custom_call.1} parent=1 // pred_fallthru
      _
    // Predicated region
    $region42: #{tpu_custom_call.1} parent=1 // pred_check
      _
    $region43: #{tpu_custom_call.1} parent=1 // pred_check_branch
      %47 = sbr.rel (0) target = $region45
    $region44: #{tpu_custom_call.1} parent=1 // pred_region
      _
    $region45: #{tpu_custom_call.1} parent=1 // pred_fallthru
      _
    // Predicated region
    $region46: #{tpu_custom_call.1} parent=1 // pred_check
      _
    $region47: #{tpu_custom_call.1} parent=1 // pred_check_branch
      %49 = sbr.rel (0) target = $region49
    $region48: #{tpu_custom_call.1} parent=1 // pred_region
      _
    $region49: #{tpu_custom_call.1} parent=1 // pred_fallthru
      _
    // Predicated region
    $region50: #{tpu_custom_call.1} parent=1 // pred_check
      _
    $region51: #{tpu_custom_call.1} parent=1 // pred_check_branch
      %51 = sbr.rel (0) target = $region53
    $region52: #{tpu_custom_call.1} parent=1 // pred_region
      _
    $region53: #{tpu_custom_call.1} parent=1 // pred_fallthru
      _
    // Predicated region
    $region54: #{tpu_custom_call.1} parent=1 // pred_check
      _
    $region55: #{tpu_custom_call.1} parent=1 // pred_check_branch
      %53 = sbr.rel (0) target = $region57
    $region56: #{tpu_custom_call.1} parent=1 // pred_region
      _
    $region57: #{tpu_custom_call.1} parent=1 // pred_fallthru
      _
    // Predicated region
    $region58: #{tpu_custom_call.1} parent=1 // pred_check
      _
    $region59: #{tpu_custom_call.1} parent=1 // pred_check_branch
      %55 = sbr.rel (0) target = $region61
    $region60: #{tpu_custom_call.1} parent=1 // pred_region
      _
    $region61: #{tpu_custom_call.1} parent=1 // pred_fallthru
      _
    // Predicated region
    $region62: #{tpu_custom_call.1} parent=1 // pred_check
      _
    $region63: #{tpu_custom_call.1} parent=1 // pred_check_branch
      %57 = sbr.rel (0) target = $region65
    $region64: #{tpu_custom_call.1} parent=1 // pred_region
      _
    $region65: #{tpu_custom_call.1} parent=1 // pred_fallthru
      _
    // Predicated region
    $region66: #{tpu_custom_call.1} parent=1 // pred_check
      _
    $region67: #{tpu_custom_call.1} parent=1 // pred_check_branch
      %59 = sbr.rel (0) target = $region69
    $region68: #{tpu_custom_call.1} parent=1 // pred_region
      _
    $region69: #{tpu_custom_call.1} parent=1 // pred_fallthru
      _
    // Predicated region
    $region70: #{tpu_custom_call.1} parent=1 // pred_check
      _
    $region71: #{tpu_custom_call.1} parent=1 // pred_check_branch
      %61 = sbr.rel (0) target = $region73
    $region72: #{tpu_custom_call.1} parent=1 // pred_region
      _
    $region73: #{tpu_custom_call.1} parent=1 // pred_fallthru
      _
    // Predicated region
    $region74: #{tpu_custom_call.1} parent=1 // pred_check
      _
    $region75: #{tpu_custom_call.1} parent=1 // pred_check_branch
      %63 = sbr.rel (0) target = $region77
    $region76: #{tpu_custom_call.1} parent=1 // pred_region
      _
    $region77: #{tpu_custom_call.1} parent=1 // pred_fallthru
      _
    // Predicated region
    $region78: #{tpu_custom_call.1} parent=1 // pred_check
      _
    $region79: #{tpu_custom_call.1} parent=1 // pred_check_branch
      %65 = sbr.rel (0) target = $region81
    $region80: #{tpu_custom_call.1} parent=1 // pred_region
      _
    $region81: #{tpu_custom_call.1} parent=1 // pred_fallthru
      _
    %v66 = vld [vmem:[%s0] sm:$0xff]
    %v67 = vld [vmem:[%s0 + $0x8] sm:$0xff]
    %v68 = vld [vmem:[%s0 + $0x10] sm:$0xff]
    %v69 = vld [vmem:[%s0 + $0x18] sm:$0xff]
    %v70 = vld [vmem:[%s1] sm:$0x1]
    %v71 = vld [vmem:[%s2] sm:$0x1]
    %vm72 = vcmask 261120
    %v73 = vsel %vm72, %v66, 0.0
    %74 = vadd.xlane.f32.xlu0 %v73
    %v75 = vpop.xlane.xlu0 %74
    %v76 = vsel %vm72, %v67, 0.0
    %77 = vadd.xlane.f32.xlu0 %v76
    %v78 = vpop.xlane.xlu0 %77
    %v79 = vsel %vm72, %v68, 0.0
    %80 = vadd.xlane.f32.xlu0 %v79
    %v81 = vpop.xlane.xlu0 %80
    %v82 = vsel %vm72, %v69, 0.0
    %83 = vadd.xlane.f32.xlu0 %v82
    %v84 = vpop.xlane.xlu0 %83
    %v85 = vrcp.pop 32.0
    %v86 = vmul.f32 %v75, %v85
    %v87 = vmul.f32 %v78, %v85
    %v88 = vmul.f32 %v81, %v85
    %v89 = vmul.f32 %v84, %v85
    %v90 = vsub.f32 %v66, %v86
    %v91 = vsub.f32 %v67, %v87
    %v92 = vsub.f32 %v68, %v88
    %v93 = vsub.f32 %v69, %v89
    %v94 = vmul.f32 %v90, %v90
    %v95 = vmul.f32 %v91, %v91
    %v96 = vmul.f32 %v92, %v92
    %v97 = vmul.f32 %v93, %v93
    %v98 = vsel %vm72, %v94, 0.0
    %99 = vadd.xlane.f32.xlu0 %v98
    %v100 = vpop.xlane.xlu0 %99
    %v101 = vsel %vm72, %v95, 0.0
    %102 = vadd.xlane.f32.xlu0 %v101
    %v103 = vpop.xlane.xlu0 %102
    %v104 = vsel %vm72, %v96, 0.0
    %105 = vadd.xlane.f32.xlu0 %v104
    %v106 = vpop.xlane.xlu0 %105
    %v107 = vsel %vm72, %v97, 0.0
    %108 = vadd.xlane.f32.xlu0 %v107
    %v109 = vpop.xlane.xlu0 %108
    %v110 = vmul.f32 %v100, %v85
    %v111 = vmul.f32 %v103, %v85
    %v112 = vmul.f32 %v106, %v85
    %v113 = vmul.f32 %v109, %v85
    %v114 = vadd.f32 %v110, 1e-05
    %v115 = vadd.f32 %v111, 1e-05
    %v116 = vadd.f32 %v112, 1e-05
    %v117 = vadd.f32 %v113, 1e-05
    %v118 = vrsqrt.pop %v114
    %v119 = vrsqrt.pop %v115
    %v120 = vrsqrt.pop %v116
    %v121 = vrsqrt.pop %v117
    %v122 = vmul.f32 %v90, %v118
    %v123 = vmul.f32 %v91, %v119
    %v124 = vmul.f32 %v92, %v120
    %v125 = vmul.f32 %v93, %v121
    %v127 = vlaneseq
    %v128 = vshrl.u32 %v127, 7
    %v129 = vsub.s32 0, %v128
    %v130 = vrot.slane %v70, %v129
    %v132 = vmul.f32 %v122, %v130
    %v133 = vmul.f32 %v123, %v130
    %v134 = vmul.f32 %v124, %v130
    %v135 = vmul.f32 %v125, %v130
    %v137 = vlaneseq
    %v138 = vshrl.u32 %v137, 7
    %v139 = vsub.s32 0, %v138
    %v140 = vrot.slane %v71, %v139
    %v142 = vadd.f32 %v132, %v140
    %v143 = vadd.f32 %v133, %v140
    %v144 = vadd.f32 %v134, %v140
    %v145 = vadd.f32 %v135, %v140
    %v146 = vld [vmem:[%s3] sm:$0xff]
    %v147 = vld [vmem:[%s3 + $0x8] sm:$0xff]
    %v148 = vld [vmem:[%s3 + $0x10] sm:$0xff]
    %v149 = vld [vmem:[%s3 + $0x18] sm:$0xff]
    %v151 = vsel %vm72, %v142, 0
    %v154 = vsel %vm72, %v143, 0
    %v157 = vsel %vm72, %v144, 0
    %v160 = vsel %vm72, %v145, 0
    %162 = vmatprep.subr.mxu0 0.0
    %163 = vmatpush1.msra.mxu0 0.0
    %164 = vmatprep.subr.mxu0 0.0
    %165 = vmatpush1.msra.mxu0 0.0
    %166 = vmatprep.subr.mxu0 0.0
    %167 = vmatpush1.msra.mxu0 0.0
    %168 = vmatprep.subr.mxu0 0.0
    %169 = vmatpush1.msra.mxu0 0.0
    %170 = vmatprep.subr.mxu0 0.0
    %171 = vmatpush1.msra.mxu0 0.0
    %172 = vmatprep.subr.mxu0 0.0
    %173 = vmatpush1.msra.mxu0 0.0
    %174 = vmatprep.subr.mxu0 0.0
    %175 = vmatpush1.msra.mxu0 0.0
    %176 = vmatprep.subr.mxu0 0.0
    %177 = vmatpush1.msra.mxu0 0.0
    %178 = vmatprep.subr.mxu0 0.0
    %179 = vmatpush1.msra.mxu0 0.0
    %180 = vmatprep.subr.mxu0 0.0
    %181 = vmatpush1.msra.mxu0 0.0
    %182 = vmatprep.subr.mxu0 0.0
    %183 = vmatpush1.msra.mxu0 0.0
    %184 = vmatprep.subr.mxu0 0.0
    %185 = vmatpush1.msra.mxu0 0.0
    %186 = vmatprep.subr.mxu0 0.0
    %187 = vmatpush1.msra.mxu0 %v149
    %188 = vmatprep.subr.mxu0 0.0
    %189 = vmatpush1.msra.mxu0 %v148
    %190 = vmatprep.subr.mxu0 0.0
    %191 = vmatpush1.msra.mxu0 %v147
    %192 = vmatprep.subr.mxu0 0.0
    %193 = vmatpush1.msra.mxu0 %v146
    %194 = vmatprep.subr.mxu0 0.0
    %195 = vmatpush2.msra.mxu0 0.0
    %196 = vmatprep.subr.mxu0 0.0
    %197 = vmatpush2.msra.mxu0 0.0
    %198 = vmatprep.subr.mxu0 0.0
    %199 = vmatpush2.msra.mxu0 0.0
    %200 = vmatprep.subr.mxu0 0.0
    %201 = vmatpush2.msra.mxu0 0.0
    %202 = vmatprep.subr.mxu0 0.0
    %203 = vmatpush2.msra.mxu0 0.0
    %204 = vmatprep.subr.mxu0 0.0
    %205 = vmatpush2.msra.mxu0 0.0
    %206 = vmatprep.subr.mxu0 0.0
    %207 = vmatpush2.msra.mxu0 0.0
    %208 = vmatprep.subr.mxu0 0.0
    %209 = vmatpush2.msra.mxu0 0.0
    %210 = vmatprep.subr.mxu0 0.0
    %211 = vmatpush2.msra.mxu0 0.0
    %212 = vmatprep.subr.mxu0 0.0
    %213 = vmatpush2.msra.mxu0 0.0
    %214 = vmatprep.subr.mxu0 0.0
    %215 = vmatpush2.msra.mxu0 0.0
    %216 = vmatprep.subr.mxu0 0.0
    %217 = vmatpush2.msra.mxu0 0.0
    %218 = vmatprep.subr.mxu0 0.0
    %219 = vmatpush2.msra.mxu0 0.0
    %220 = vmatprep.subr.mxu0 0.0
    %221 = vmatpush2.msra.mxu0 0.0
    %222 = vmatprep.subr.mxu0 0.0
    %223 = vmatpush2.msra.mxu0 0.0
    %224 = vmatprep.subr.mxu0 0.0
    %225 = vmatpush2.msra.mxu0 0.0
    %226 = vmatprep.mubr.f32.mxu0 0.0
    %227 = vmatmul.mubr.f32.gmra.mxu0 %v151
    %v228 = vpop.f32.mrf.mxu0
    %v229 = vadd.f32 0.0, %v228
    %v230 = vpop.f32.mrf.mxu0
    %231 = vmatprep.mubr.f32.mxu0 0.0
    %232 = vmatmul.mubr.f32.gmra.mxu0 %v154
    %v233 = vpop.f32.mrf.mxu0
    %v234 = vadd.f32 0.0, %v233
    %v235 = vpop.f32.mrf.mxu0
    %236 = vmatprep.mubr.f32.mxu0 0.0
    %237 = vmatmul.mubr.f32.gmra.mxu0 %v157
    %v238 = vpop.f32.mrf.mxu0
    %v239 = vadd.f32 0.0, %v238
    %v240 = vpop.f32.mrf.mxu0
    %241 = vmatprep.mubr.f32.mxu0 0.0
    %242 = vmatmul.mubr.f32.gmra.mxu0 %v160
    %v243 = vpop.f32.mrf.mxu0
    %v244 = vadd.f32 0.0, %v243
    %v245 = vpop.f32.mrf.mxu0
    %246 = vdwg.mxu0
    %vm247 = vcmask 195584
    %248 = vst.msk [vmem:[#allocation2] sm:$0xff] %vm247, %v229
    %249 = vst.msk [vmem:[#allocation2 + $0x8] sm:$0xff] %vm247, %v234
    %252 = vrot.lane.b32.xlu0 %v229, 104
    %v253 = vpop.permute.xlu0 %252
    %254 = vrot.lane.b32.xlu0 %v234, 104
    %v255 = vpop.permute.xlu0 %254
    %s258 = scalar_lea.vmem [#allocation2], 16
    %259 = vst.msk [vmem:[%s258] sm:$0xff] %vm247, %v253
    %260 = vst.msk [vmem:[%s258 + $0x8] sm:$0xff] %vm247, %v255
    %261 = vrot.lane.b32.xlu0 %v229, 80
    %v262 = vpop.permute.xlu0 %261
    %263 = vrot.lane.b32.xlu0 %v234, 80
    %v264 = vpop.permute.xlu0 %263
    %s267 = scalar_lea.vmem [#allocation2], 32
    %268 = vst.msk [vmem:[%s267] sm:$0xff] %vm247, %v262
    %269 = vst.msk [vmem:[%s267 + $0x8] sm:$0xff] %vm247, %v264
    %270 = vrot.lane.b32.xlu0 %v229, 56
    %v271 = vpop.permute.xlu0 %270
    %272 = vrot.lane.b32.xlu0 %v234, 56
    %v273 = vpop.permute.xlu0 %272
    %s276 = scalar_lea.vmem [#allocation2], 48
    %277 = vst.msk [vmem:[%s276] sm:$0xff] %vm247, %v271
    %278 = vst.msk [vmem:[%s276 + $0x8] sm:$0xff] %vm247, %v273
    %s279 = scalar_lea.vmem [#allocation2], 64
    %280 = vst.msk [vmem:[%s279] sm:$0xff] %vm247, %v239
    %281 = vst.msk [vmem:[%s279 + $0x8] sm:$0xff] %vm247, %v244
    %284 = vrot.lane.b32.xlu0 %v239, 104
    %v285 = vpop.permute.xlu0 %284
    %286 = vrot.lane.b32.xlu0 %v244, 104
    %v287 = vpop.permute.xlu0 %286
    %s290 = scalar_lea.vmem [#allocation2], 80
    %291 = vst.msk [vmem:[%s290] sm:$0xff] %vm247, %v285
    %292 = vst.msk [vmem:[%s290 + $0x8] sm:$0xff] %vm247, %v287
    %293 = vrot.lane.b32.xlu0 %v239, 80
    %v294 = vpop.permute.xlu0 %293
    %295 = vrot.lane.b32.xlu0 %v244, 80
    %v296 = vpop.permute.xlu0 %295
    %s299 = scalar_lea.vmem [#allocation2], 96
    %300 = vst.msk [vmem:[%s299] sm:$0xff] %vm247, %v294
    %301 = vst.msk [vmem:[%s299 + $0x8] sm:$0xff] %vm247, %v296
    %302 = vrot.lane.b32.xlu0 %v239, 56
    %v303 = vpop.permute.xlu0 %302
    %304 = vrot.lane.b32.xlu0 %v244, 56
    %v305 = vpop.permute.xlu0 %304
    %s308 = scalar_lea.vmem [#allocation2], 112
    %309 = vst.msk [vmem:[%s308] sm:$0xff] %vm247, %v303
    %310 = vst.msk [vmem:[%s308 + $0x8] sm:$0xff] %vm247, %v305
    %v311 = vld [vmem:[#allocation2] sm:$0xff]
    %v312 = vld [vmem:[#allocation2 + $0x8] sm:$0xff]
    %v313 = vld [vmem:[#allocation2 + $0x10] sm:$0xff]
    %v314 = vld [vmem:[#allocation2 + $0x18] sm:$0xff]
    %v315 = vld [vmem:[#allocation2 + $0x20] sm:$0xff]
    %v316 = vld [vmem:[#allocation2 + $0x28] sm:$0xff]
    %v317 = vld [vmem:[#allocation2 + $0x30] sm:$0xff]
    %v318 = vld [vmem:[#allocation2 + $0x38] sm:$0xff]
    %v319 = vld [vmem:[#allocation2 + $0x40] sm:$0xff]
    %v320 = vld [vmem:[#allocation2 + $0x48] sm:$0xff]
    %v321 = vld [vmem:[#allocation2 + $0x50] sm:$0xff]
    %v322 = vld [vmem:[#allocation2 + $0x58] sm:$0xff]
    %v323 = vld [vmem:[#allocation2 + $0x60] sm:$0xff]
    %v324 = vld [vmem:[#allocation2 + $0x68] sm:$0xff]
    %v325 = vld [vmem:[#allocation2 + $0x70] sm:$0xff]
    %v326 = vld [vmem:[#allocation2 + $0x78] sm:$0xff]
    %329 = vrot.lane.b32.xlu0 %v311, 120
    %v330 = vpop.permute.xlu0 %329
    %331 = vrot.lane.b32.xlu0 %v312, 120
    %v332 = vpop.permute.xlu0 %331
    %vm333 = vcmask 64512
    %v334 = vsel %vm333, %v311, 0
    %v336 = vsel %vm333, %v312, 0
    %v338 = vsel %vm333, %v330, 0
    %v340 = vsel %vm333, %v332, 0
    %342 = vmatprep.subr.mxu0 0.0
    %343 = vmatpush1.xpose.msra.mxu0 0.0
    %344 = vmatprep.subr.mxu0 0.0
    %345 = vmatpush1.xpose.msra.mxu0 0.0
    %346 = vmatprep.subr.mxu0 0.0
    %347 = vmatpush1.xpose.msra.mxu0 0.0
    %348 = vmatprep.subr.mxu0 0.0
    %349 = vmatpush1.xpose.msra.mxu0 0.0
    %350 = vmatprep.subr.mxu0 0.0
    %351 = vmatpush1.xpose.msra.mxu0 0.0
    %352 = vmatprep.subr.mxu0 0.0
    %353 = vmatpush1.xpose.msra.mxu0 0.0
    %354 = vmatprep.subr.mxu0 0.0
    %355 = vmatpush1.xpose.msra.mxu0 0.0
    %356 = vmatprep.subr.mxu0 0.0
    %357 = vmatpush1.xpose.msra.mxu0 0.0
    %358 = vmatprep.subr.mxu0 0.0
    %359 = vmatpush1.xpose.msra.mxu0 0.0
    %360 = vmatprep.subr.mxu0 0.0
    %361 = vmatpush1.xpose.msra.mxu0 0.0
    %362 = vmatprep.subr.mxu0 0.0
    %363 = vmatpush1.xpose.msra.mxu0 0.0
    %364 = vmatprep.subr.mxu0 0.0
    %365 = vmatpush1.xpose.msra.mxu0 0.0
    %366 = vmatprep.subr.mxu0 0.0
    %367 = vmatpush1.xpose.msra.mxu0 0.0
    %368 = vmatprep.subr.mxu0 0.0
    %369 = vmatpush1.xpose.msra.mxu0 0.0
    %370 = vmatprep.subr.mxu0 0.0
    %371 = vmatpush1.xpose.msra.mxu0 %v340
    %372 = vmatprep.subr.mxu0 0.0
    %373 = vmatpush1.xpose.msra.mxu0 %v338
    %374 = vmatprep.subr.mxu0 0.0
    %375 = vmatpush2.xpose.msra.mxu0 0.0
    %376 = vmatprep.subr.mxu0 0.0
    %377 = vmatpush2.xpose.msra.mxu0 0.0
    %378 = vmatprep.subr.mxu0 0.0
    %379 = vmatpush2.xpose.msra.mxu0 0.0
    %380 = vmatprep.subr.mxu0 0.0
    %381 = vmatpush2.xpose.msra.mxu0 0.0
    %382 = vmatprep.subr.mxu0 0.0
    %383 = vmatpush2.xpose.msra.mxu0 0.0
    %384 = vmatprep.subr.mxu0 0.0
    %385 = vmatpush2.xpose.msra.mxu0 0.0
    %386 = vmatprep.subr.mxu0 0.0
    %387 = vmatpush2.xpose.msra.mxu0 0.0
    %388 = vmatprep.subr.mxu0 0.0
    %389 = vmatpush2.xpose.msra.mxu0 0.0
    %390 = vmatprep.subr.mxu0 0.0
    %391 = vmatpush2.xpose.msra.mxu0 0.0
    %392 = vmatprep.subr.mxu0 0.0
    %393 = vmatpush2.xpose.msra.mxu0 0.0
    %394 = vmatprep.subr.mxu0 0.0
    %395 = vmatpush2.xpose.msra.mxu0 0.0
    %396 = vmatprep.subr.mxu0 0.0
    %397 = vmatpush2.xpose.msra.mxu0 0.0
    %398 = vmatprep.subr.mxu0 0.0
    %399 = vmatpush2.xpose.msra.mxu0 0.0
    %400 = vmatprep.subr.mxu0 0.0
    %401 = vmatpush2.xpose.msra.mxu0 0.0
    %402 = vmatprep.subr.mxu0 0.0
    %403 = vmatpush2.xpose.msra.mxu0 0.0
    %404 = vmatprep.subr.mxu0 0.0
    %405 = vmatpush2.xpose.msra.mxu0 0.0
    %406 = vmatprep.mubr.f32.mxu0 0.0
    %407 = vmatmul.mubr.f32.gmra.mxu0 %v334
    %v408 = vpop.f32.mrf.mxu0
    %v409 = vadd.f32 0.0, %v408
    %v410 = vpop.f32.mrf.mxu0
    %411 = vmatprep.mubr.f32.mxu0 0.0
    %412 = vmatmul.mubr.f32.gmra.mxu0 %v336
    %v413 = vpop.f32.mrf.mxu0
    %v414 = vadd.f32 0.0, %v413
    %v415 = vpop.f32.mrf.mxu0
    %416 = vdwg.mxu0
    %419 = vrot.lane.b32.xlu0 %v313, 120
    %v420 = vpop.permute.xlu0 %419
    %421 = vrot.lane.b32.xlu0 %v314, 120
    %v422 = vpop.permute.xlu0 %421
    %v423 = vsel %vm333, %v313, 0
    %v425 = vsel %vm333, %v314, 0
    %v427 = vsel %vm333, %v420, 0
    %v429 = vsel %vm333, %v422, 0
    %431 = vmatprep.subr.mxu0 0.0
    %432 = vmatpush1.xpose.msra.mxu0 0.0
    %433 = vmatprep.subr.mxu0 0.0
    %434 = vmatpush1.xpose.msra.mxu0 0.0
    %435 = vmatprep.subr.mxu0 0.0
    %436 = vmatpush1.xpose.msra.mxu0 0.0
    %437 = vmatprep.subr.mxu0 0.0
    %438 = vmatpush1.xpose.msra.mxu0 0.0
    %439 = vmatprep.subr.mxu0 0.0
    %440 = vmatpush1.xpose.msra.mxu0 0.0
    %441 = vmatprep.subr.mxu0 0.0
    %442 = vmatpush1.xpose.msra.mxu0 0.0
    %443 = vmatprep.subr.mxu0 0.0
    %444 = vmatpush1.xpose.msra.mxu0 0.0
    %445 = vmatprep.subr.mxu0 0.0
    %446 = vmatpush1.xpose.msra.mxu0 0.0
    %447 = vmatprep.subr.mxu0 0.0
    %448 = vmatpush1.xpose.msra.mxu0 0.0
    %449 = vmatprep.subr.mxu0 0.0
    %450 = vmatpush1.xpose.msra.mxu0 0.0
    %451 = vmatprep.subr.mxu0 0.0
    %452 = vmatpush1.xpose.msra.mxu0 0.0
    %453 = vmatprep.subr.mxu0 0.0
    %454 = vmatpush1.xpose.msra.mxu0 0.0
    %455 = vmatprep.subr.mxu0 0.0
    %456 = vmatpush1.xpose.msra.mxu0 0.0
    %457 = vmatprep.subr.mxu0 0.0
    %458 = vmatpush1.xpose.msra.mxu0 0.0
    %459 = vmatprep.subr.mxu0 0.0
    %460 = vmatpush1.xpose.msra.mxu0 %v429
    %461 = vmatprep.subr.mxu0 0.0
    %462 = vmatpush1.xpose.msra.mxu0 %v427
    %463 = vmatprep.subr.mxu0 0.0
    %464 = vmatpush2.xpose.msra.mxu0 0.0
    %465 = vmatprep.subr.mxu0 0.0
    %466 = vmatpush2.xpose.msra.mxu0 0.0
    %467 = vmatprep.subr.mxu0 0.0
    %468 = vmatpush2.xpose.msra.mxu0 0.0
    %469 = vmatprep.subr.mxu0 0.0
    %470 = vmatpush2.xpose.msra.mxu0 0.0
    %471 = vmatprep.subr.mxu0 0.0
    %472 = vmatpush2.xpose.msra.mxu0 0.0
    %473 = vmatprep.subr.mxu0 0.0
    %474 = vmatpush2.xpose.msra.mxu0 0.0
    %475 = vmatprep.subr.mxu0 0.0
    %476 = vmatpush2.xpose.msra.mxu0 0.0
    %477 = vmatprep.subr.mxu0 0.0
    %478 = vmatpush2.xpose.msra.mxu0 0.0
    %479 = vmatprep.subr.mxu0 0.0
    %480 = vmatpush2.xpose.msra.mxu0 0.0
    %481 = vmatprep.subr.mxu0 0.0
    %482 = vmatpush2.xpose.msra.mxu0 0.0
    %483 = vmatprep.subr.mxu0 0.0
    %484 = vmatpush2.xpose.msra.mxu0 0.0
    %485 = vmatprep.subr.mxu0 0.0
    %486 = vmatpush2.xpose.msra.mxu0 0.0
    %487 = vmatprep.subr.mxu0 0.0
    %488 = vmatpush2.xpose.msra.mxu0 0.0
    %489 = vmatprep.subr.mxu0 0.0
    %490 = vmatpush2.xpose.msra.mxu0 0.0
    %491 = vmatprep.subr.mxu0 0.0
    %492 = vmatpush2.xpose.msra.mxu0 0.0
    %493 = vmatprep.subr.mxu0 0.0
    %494 = vmatpush2.xpose.msra.mxu0 0.0
    %495 = vmatprep.mubr.f32.mxu0 0.0
    %496 = vmatmul.mubr.f32.gmra.mxu0 %v423
    %v497 = vpop.f32.mrf.mxu0
    %v498 = vadd.f32 0.0, %v497
    %v499 = vpop.f32.mrf.mxu0
    %500 = vmatprep.mubr.f32.mxu0 0.0
    %501 = vmatmul.mubr.f32.gmra.mxu0 %v425
    %v502 = vpop.f32.mrf.mxu0
    %v503 = vadd.f32 0.0, %v502
    %v504 = vpop.f32.mrf.mxu0
    %505 = vdwg.mxu0
    %508 = vrot.lane.b32.xlu0 %v315, 120
    %v509 = vpop.permute.xlu0 %508
    %510 = vrot.lane.b32.xlu0 %v316, 120
    %v511 = vpop.permute.xlu0 %510
    %v512 = vsel %vm333, %v315, 0
    %v514 = vsel %vm333, %v316, 0
    %v516 = vsel %vm333, %v509, 0
    %v518 = vsel %vm333, %v511, 0
    %520 = vmatprep.subr.mxu0 0.0
    %521 = vmatpush1.xpose.msra.mxu0 0.0
    %522 = vmatprep.subr.mxu0 0.0
    %523 = vmatpush1.xpose.msra.mxu0 0.0
    %524 = vmatprep.subr.mxu0 0.0
    %525 = vmatpush1.xpose.msra.mxu0 0.0
    %526 = vmatprep.subr.mxu0 0.0
    %527 = vmatpush1.xpose.msra.mxu0 0.0
    %528 = vmatprep.subr.mxu0 0.0
    %529 = vmatpush1.xpose.msra.mxu0 0.0
    %530 = vmatprep.subr.mxu0 0.0
    %531 = vmatpush1.xpose.msra.mxu0 0.0
    %532 = vmatprep.subr.mxu0 0.0
    %533 = vmatpush1.xpose.msra.mxu0 0.0
    %534 = vmatprep.subr.mxu0 0.0
    %535 = vmatpush1.xpose.msra.mxu0 0.0
    %536 = vmatprep.subr.mxu0 0.0
    %537 = vmatpush1.xpose.msra.mxu0 0.0
    %538 = vmatprep.subr.mxu0 0.0
    %539 = vmatpush1.xpose.msra.mxu0 0.0
    %540 = vmatprep.subr.mxu0 0.0
    %541 = vmatpush1.xpose.msra.mxu0 0.0
    %542 = vmatprep.subr.mxu0 0.0
    %543 = vmatpush1.xpose.msra.mxu0 0.0
    %544 = vmatprep.subr.mxu0 0.0
    %545 = vmatpush1.xpose.msra.mxu0 0.0
    %546 = vmatprep.subr.mxu0 0.0
    %547 = vmatpush1.xpose.msra.mxu0 0.0
    %548 = vmatprep.subr.mxu0 0.0
    %549 = vmatpush1.xpose.msra.mxu0 %v518
    %550 = vmatprep.subr.mxu0 0.0
    %551 = vmatpush1.xpose.msra.mxu0 %v516
    %552 = vmatprep.subr.mxu0 0.0
    %553 = vmatpush2.xpose.msra.mxu0 0.0
    %554 = vmatprep.subr.mxu0 0.0
    %555 = vmatpush2.xpose.msra.mxu0 0.0
    %556 = vmatprep.subr.mxu0 0.0
    %557 = vmatpush2.xpose.msra.mxu0 0.0
    %558 = vmatprep.subr.mxu0 0.0
    %559 = vmatpush2.xpose.msra.mxu0 0.0
    %560 = vmatprep.subr.mxu0 0.0
    %561 = vmatpush2.xpose.msra.mxu0 0.0
    %562 = vmatprep.subr.mxu0 0.0
    %563 = vmatpush2.xpose.msra.mxu0 0.0
    %564 = vmatprep.subr.mxu0 0.0
    %565 = vmatpush2.xpose.msra.mxu0 0.0
    %566 = vmatprep.subr.mxu0 0.0
    %567 = vmatpush2.xpose.msra.mxu0 0.0
    %568 = vmatprep.subr.mxu0 0.0
    %569 = vmatpush2.xpose.msra.mxu0 0.0
    %570 = vmatprep.subr.mxu0 0.0
    %571 = vmatpush2.xpose.msra.mxu0 0.0
    %572 = vmatprep.subr.mxu0 0.0
    %573 = vmatpush2.xpose.msra.mxu0 0.0
    %574 = vmatprep.subr.mxu0 0.0
    %575 = vmatpush2.xpose.msra.mxu0 0.0
    %576 = vmatprep.subr.mxu0 0.0
    %577 = vmatpush2.xpose.msra.mxu0 0.0
    %578 = vmatprep.subr.mxu0 0.0
    %579 = vmatpush2.xpose.msra.mxu0 0.0
    %580 = vmatprep.subr.mxu0 0.0
    %581 = vmatpush2.xpose.msra.mxu0 0.0
    %582 = vmatprep.subr.mxu0 0.0
    %583 = vmatpush2.xpose.msra.mxu0 0.0
    %584 = vmatprep.mubr.f32.mxu0 0.0
    %585 = vmatmul.mubr.f32.gmra.mxu0 %v512
    %v586 = vpop.f32.mrf.mxu0
    %v587 = vadd.f32 0.0, %v586
    %v588 = vpop.f32.mrf.mxu0
    %589 = vmatprep.mubr.f32.mxu0 0.0
    %590 = vmatmul.mubr.f32.gmra.mxu0 %v514
    %v591 = vpop.f32.mrf.mxu0
    %v592 = vadd.f32 0.0, %v591
    %v593 = vpop.f32.mrf.mxu0
    %594 = vdwg.mxu0
    %597 = vrot.lane.b32.xlu0 %v317, 120
    %v598 = vpop.permute.xlu0 %597
    %599 = vrot.lane.b32.xlu0 %v318, 120
    %v600 = vpop.permute.xlu0 %599
    %v601 = vsel %vm333, %v317, 0
    %v603 = vsel %vm333, %v318, 0
    %v605 = vsel %vm333, %v598, 0
    %v607 = vsel %vm333, %v600, 0
    %609 = vmatprep.subr.mxu0 0.0
    %610 = vmatpush1.xpose.msra.mxu0 0.0
    %611 = vmatprep.subr.mxu0 0.0
    %612 = vmatpush1.xpose.msra.mxu0 0.0
    %613 = vmatprep.subr.mxu0 0.0
    %614 = vmatpush1.xpose.msra.mxu0 0.0
    %615 = vmatprep.subr.mxu0 0.0
    %616 = vmatpush1.xpose.msra.mxu0 0.0
    %617 = vmatprep.subr.mxu0 0.0
    %618 = vmatpush1.xpose.msra.mxu0 0.0
    %619 = vmatprep.subr.mxu0 0.0
    %620 = vmatpush1.xpose.msra.mxu0 0.0
    %621 = vmatprep.subr.mxu0 0.0
    %622 = vmatpush1.xpose.msra.mxu0 0.0
    %623 = vmatprep.subr.mxu0 0.0
    %624 = vmatpush1.xpose.msra.mxu0 0.0
    %625 = vmatprep.subr.mxu0 0.0
    %626 = vmatpush1.xpose.msra.mxu0 0.0
    %627 = vmatprep.subr.mxu0 0.0
    %628 = vmatpush1.xpose.msra.mxu0 0.0
    %629 = vmatprep.subr.mxu0 0.0
    %630 = vmatpush1.xpose.msra.mxu0 0.0
    %631 = vmatprep.subr.mxu0 0.0
    %632 = vmatpush1.xpose.msra.mxu0 0.0
    %633 = vmatprep.subr.mxu0 0.0
    %634 = vmatpush1.xpose.msra.mxu0 0.0
    %635 = vmatprep.subr.mxu0 0.0
    %636 = vmatpush1.xpose.msra.mxu0 0.0
    %637 = vmatprep.subr.mxu0 0.0
    %638 = vmatpush1.xpose.msra.mxu0 %v607
    %639 = vmatprep.subr.mxu0 0.0
    %640 = vmatpush1.xpose.msra.mxu0 %v605
    %641 = vmatprep.subr.mxu0 0.0
    %642 = vmatpush2.xpose.msra.mxu0 0.0
    %643 = vmatprep.subr.mxu0 0.0
    %644 = vmatpush2.xpose.msra.mxu0 0.0
    %645 = vmatprep.subr.mxu0 0.0
    %646 = vmatpush2.xpose.msra.mxu0 0.0
    %647 = vmatprep.subr.mxu0 0.0
    %648 = vmatpush2.xpose.msra.mxu0 0.0
    %649 = vmatprep.subr.mxu0 0.0
    %650 = vmatpush2.xpose.msra.mxu0 0.0
    %651 = vmatprep.subr.mxu0 0.0
    %652 = vmatpush2.xpose.msra.mxu0 0.0
    %653 = vmatprep.subr.mxu0 0.0
    %654 = vmatpush2.xpose.msra.mxu0 0.0
    %655 = vmatprep.subr.mxu0 0.0
    %656 = vmatpush2.xpose.msra.mxu0 0.0
    %657 = vmatprep.subr.mxu0 0.0
    %658 = vmatpush2.xpose.msra.mxu0 0.0
    %659 = vmatprep.subr.mxu0 0.0
    %660 = vmatpush2.xpose.msra.mxu0 0.0
    %661 = vmatprep.subr.mxu0 0.0
    %662 = vmatpush2.xpose.msra.mxu0 0.0
    %663 = vmatprep.subr.mxu0 0.0
    %664 = vmatpush2.xpose.msra.mxu0 0.0
    %665 = vmatprep.subr.mxu0 0.0
    %666 = vmatpush2.xpose.msra.mxu0 0.0
    %667 = vmatprep.subr.mxu0 0.0
    %668 = vmatpush2.xpose.msra.mxu0 0.0
    %669 = vmatprep.subr.mxu0 0.0
    %670 = vmatpush2.xpose.msra.mxu0 0.0
    %671 = vmatprep.subr.mxu0 0.0
    %672 = vmatpush2.xpose.msra.mxu0 0.0
    %673 = vmatprep.mubr.f32.mxu0 0.0
    %674 = vmatmul.mubr.f32.gmra.mxu0 %v601
    %v675 = vpop.f32.mrf.mxu0
    %v676 = vadd.f32 0.0, %v675
    %v677 = vpop.f32.mrf.mxu0
    %678 = vmatprep.mubr.f32.mxu0 0.0
    %679 = vmatmul.mubr.f32.gmra.mxu0 %v603
    %v680 = vpop.f32.mrf.mxu0
    %v681 = vadd.f32 0.0, %v680
    %v682 = vpop.f32.mrf.mxu0
    %683 = vdwg.mxu0
    %686 = vrot.lane.b32.xlu0 %v319, 120
    %v687 = vpop.permute.xlu0 %686
    %688 = vrot.lane.b32.xlu0 %v320, 120
    %v689 = vpop.permute.xlu0 %688
    %v690 = vsel %vm333, %v319, 0
    %v692 = vsel %vm333, %v320, 0
    %v694 = vsel %vm333, %v687, 0
    %v696 = vsel %vm333, %v689, 0
    %698 = vmatprep.subr.mxu0 0.0
    %699 = vmatpush1.xpose.msra.mxu0 0.0
    %700 = vmatprep.subr.mxu0 0.0
    %701 = vmatpush1.xpose.msra.mxu0 0.0
    %702 = vmatprep.subr.mxu0 0.0
    %703 = vmatpush1.xpose.msra.mxu0 0.0
    %704 = vmatprep.subr.mxu0 0.0
    %705 = vmatpush1.xpose.msra.mxu0 0.0
    %706 = vmatprep.subr.mxu0 0.0
    %707 = vmatpush1.xpose.msra.mxu0 0.0
    %708 = vmatprep.subr.mxu0 0.0
    %709 = vmatpush1.xpose.msra.mxu0 0.0
    %710 = vmatprep.subr.mxu0 0.0
    %711 = vmatpush1.xpose.msra.mxu0 0.0
    %712 = vmatprep.subr.mxu0 0.0
    %713 = vmatpush1.xpose.msra.mxu0 0.0
    %714 = vmatprep.subr.mxu0 0.0
    %715 = vmatpush1.xpose.msra.mxu0 0.0
    %716 = vmatprep.subr.mxu0 0.0
    %717 = vmatpush1.xpose.msra.mxu0 0.0
    %718 = vmatprep.subr.mxu0 0.0
    %719 = vmatpush1.xpose.msra.mxu0 0.0
    %720 = vmatprep.subr.mxu0 0.0
    %721 = vmatpush1.xpose.msra.mxu0 0.0
    %722 = vmatprep.subr.mxu0 0.0
    %723 = vmatpush1.xpose.msra.mxu0 0.0
    %724 = vmatprep.subr.mxu0 0.0
    %725 = vmatpush1.xpose.msra.mxu0 0.0
    %726 = vmatprep.subr.mxu0 0.0
    %727 = vmatpush1.xpose.msra.mxu0 %v696
    %728 = vmatprep.subr.mxu0 0.0
    %729 = vmatpush1.xpose.msra.mxu0 %v694
    %730 = vmatprep.subr.mxu0 0.0
    %731 = vmatpush2.xpose.msra.mxu0 0.0
    %732 = vmatprep.subr.mxu0 0.0
    %733 = vmatpush2.xpose.msra.mxu0 0.0
    %734 = vmatprep.subr.mxu0 0.0
    %735 = vmatpush2.xpose.msra.mxu0 0.0
    %736 = vmatprep.subr.mxu0 0.0
    %737 = vmatpush2.xpose.msra.mxu0 0.0
    %738 = vmatprep.subr.mxu0 0.0
    %739 = vmatpush2.xpose.msra.mxu0 0.0
    %740 = vmatprep.subr.mxu0 0.0
    %741 = vmatpush2.xpose.msra.mxu0 0.0
    %742 = vmatprep.subr.mxu0 0.0
    %743 = vmatpush2.xpose.msra.mxu0 0.0
    %744 = vmatprep.subr.mxu0 0.0
    %745 = vmatpush2.xpose.msra.mxu0 0.0
    %746 = vmatprep.subr.mxu0 0.0
    %747 = vmatpush2.xpose.msra.mxu0 0.0
    %748 = vmatprep.subr.mxu0 0.0
    %749 = vmatpush2.xpose.msra.mxu0 0.0
    %750 = vmatprep.subr.mxu0 0.0
    %751 = vmatpush2.xpose.msra.mxu0 0.0
    %752 = vmatprep.subr.mxu0 0.0
    %753 = vmatpush2.xpose.msra.mxu0 0.0
    %754 = vmatprep.subr.mxu0 0.0
    %755 = vmatpush2.xpose.msra.mxu0 0.0
    %756 = vmatprep.subr.mxu0 0.0
    %757 = vmatpush2.xpose.msra.mxu0 0.0
    %758 = vmatprep.subr.mxu0 0.0
    %759 = vmatpush2.xpose.msra.mxu0 0.0
    %760 = vmatprep.subr.mxu0 0.0
    %761 = vmatpush2.xpose.msra.mxu0 0.0
    %762 = vmatprep.mubr.f32.mxu0 0.0
    %763 = vmatmul.mubr.f32.gmra.mxu0 %v690
    %v764 = vpop.f32.mrf.mxu0
    %v765 = vadd.f32 0.0, %v764
    %v766 = vpop.f32.mrf.mxu0
    %767 = vmatprep.mubr.f32.mxu0 0.0
    %768 = vmatmul.mubr.f32.gmra.mxu0 %v692
    %v769 = vpop.f32.mrf.mxu0
    %v770 = vadd.f32 0.0, %v769
    %v771 = vpop.f32.mrf.mxu0
    %772 = vdwg.mxu0
    %775 = vrot.lane.b32.xlu0 %v321, 120
    %v776 = vpop.permute.xlu0 %775
    %777 = vrot.lane.b32.xlu0 %v322, 120
    %v778 = vpop.permute.xlu0 %777
    %v779 = vsel %vm333, %v321, 0
    %v781 = vsel %vm333, %v322, 0
    %v783 = vsel %vm333, %v776, 0
    %v785 = vsel %vm333, %v778, 0
    %787 = vmatprep.subr.mxu0 0.0
    %788 = vmatpush1.xpose.msra.mxu0 0.0
    %789 = vmatprep.subr.mxu0 0.0
    %790 = vmatpush1.xpose.msra.mxu0 0.0
    %791 = vmatprep.subr.mxu0 0.0
    %792 = vmatpush1.xpose.msra.mxu0 0.0
    %793 = vmatprep.subr.mxu0 0.0
    %794 = vmatpush1.xpose.msra.mxu0 0.0
    %795 = vmatprep.subr.mxu0 0.0
    %796 = vmatpush1.xpose.msra.mxu0 0.0
    %797 = vmatprep.subr.mxu0 0.0
    %798 = vmatpush1.xpose.msra.mxu0 0.0
    %799 = vmatprep.subr.mxu0 0.0
    %800 = vmatpush1.xpose.msra.mxu0 0.0
    %801 = vmatprep.subr.mxu0 0.0
    %802 = vmatpush1.xpose.msra.mxu0 0.0
    %803 = vmatprep.subr.mxu0 0.0
    %804 = vmatpush1.xpose.msra.mxu0 0.0
    %805 = vmatprep.subr.mxu0 0.0
    %806 = vmatpush1.xpose.msra.mxu0 0.0
    %807 = vmatprep.subr.mxu0 0.0
    %808 = vmatpush1.xpose.msra.mxu0 0.0
    %809 = vmatprep.subr.mxu0 0.0
    %810 = vmatpush1.xpose.msra.mxu0 0.0
    %811 = vmatprep.subr.mxu0 0.0
    %812 = vmatpush1.xpose.msra.mxu0 0.0
    %813 = vmatprep.subr.mxu0 0.0
    %814 = vmatpush1.xpose.msra.mxu0 0.0
    %815 = vmatprep.subr.mxu0 0.0
    %816 = vmatpush1.xpose.msra.mxu0 %v785
    %817 = vmatprep.subr.mxu0 0.0
    %818 = vmatpush1.xpose.msra.mxu0 %v783
    %819 = vmatprep.subr.mxu0 0.0
    %820 = vmatpush2.xpose.msra.mxu0 0.0
    %821 = vmatprep.subr.mxu0 0.0
    %822 = vmatpush2.xpose.msra.mxu0 0.0
    %823 = vmatprep.subr.mxu0 0.0
    %824 = vmatpush2.xpose.msra.mxu0 0.0
    %825 = vmatprep.subr.mxu0 0.0
    %826 = vmatpush2.xpose.msra.mxu0 0.0
    %827 = vmatprep.subr.mxu0 0.0
    %828 = vmatpush2.xpose.msra.mxu0 0.0
    %829 = vmatprep.subr.mxu0 0.0
    %830 = vmatpush2.xpose.msra.mxu0 0.0
    %831 = vmatprep.subr.mxu0 0.0
    %832 = vmatpush2.xpose.msra.mxu0 0.0
    %833 = vmatprep.subr.mxu0 0.0
    %834 = vmatpush2.xpose.msra.mxu0 0.0
    %835 = vmatprep.subr.mxu0 0.0
    %836 = vmatpush2.xpose.msra.mxu0 0.0
    %837 = vmatprep.subr.mxu0 0.0
    %838 = vmatpush2.xpose.msra.mxu0 0.0
    %839 = vmatprep.subr.mxu0 0.0
    %840 = vmatpush2.xpose.msra.mxu0 0.0
    %841 = vmatprep.subr.mxu0 0.0
    %842 = vmatpush2.xpose.msra.mxu0 0.0
    %843 = vmatprep.subr.mxu0 0.0
    %844 = vmatpush2.xpose.msra.mxu0 0.0
    %845 = vmatprep.subr.mxu0 0.0
    %846 = vmatpush2.xpose.msra.mxu0 0.0
    %847 = vmatprep.subr.mxu0 0.0
    %848 = vmatpush2.xpose.msra.mxu0 0.0
    %849 = vmatprep.subr.mxu0 0.0
    %850 = vmatpush2.xpose.msra.mxu0 0.0
    %851 = vmatprep.mubr.f32.mxu0 0.0
    %852 = vmatmul.mubr.f32.gmra.mxu0 %v779
    %v853 = vpop.f32.mrf.mxu0
    %v854 = vadd.f32 0.0, %v853
    %v855 = vpop.f32.mrf.mxu0
    %856 = vmatprep.mubr.f32.mxu0 0.0
    %857 = vmatmul.mubr.f32.gmra.mxu0 %v781
    %v858 = vpop.f32.mrf.mxu0
    %v859 = vadd.f32 0.0, %v858
    %v860 = vpop.f32.mrf.mxu0
    %861 = vdwg.mxu0
    %864 = vrot.lane.b32.xlu0 %v323, 120
    %v865 = vpop.permute.xlu0 %864
    %866 = vrot.lane.b32.xlu0 %v324, 120
    %v867 = vpop.permute.xlu0 %866
    %v868 = vsel %vm333, %v323, 0
    %v870 = vsel %vm333, %v324, 0
    %v872 = vsel %vm333, %v865, 0
    %v874 = vsel %vm333, %v867, 0
    %876 = vmatprep.subr.mxu0 0.0
    %877 = vmatpush1.xpose.msra.mxu0 0.0
    %878 = vmatprep.subr.mxu0 0.0
    %879 = vmatpush1.xpose.msra.mxu0 0.0
    %880 = vmatprep.subr.mxu0 0.0
    %881 = vmatpush1.xpose.msra.mxu0 0.0
    %882 = vmatprep.subr.mxu0 0.0
    %883 = vmatpush1.xpose.msra.mxu0 0.0
    %884 = vmatprep.subr.mxu0 0.0
    %885 = vmatpush1.xpose.msra.mxu0 0.0
    %886 = vmatprep.subr.mxu0 0.0
    %887 = vmatpush1.xpose.msra.mxu0 0.0
    %888 = vmatprep.subr.mxu0 0.0
    %889 = vmatpush1.xpose.msra.mxu0 0.0
    %890 = vmatprep.subr.mxu0 0.0
    %891 = vmatpush1.xpose.msra.mxu0 0.0
    %892 = vmatprep.subr.mxu0 0.0
    %893 = vmatpush1.xpose.msra.mxu0 0.0
    %894 = vmatprep.subr.mxu0 0.0
    %895 = vmatpush1.xpose.msra.mxu0 0.0
    %896 = vmatprep.subr.mxu0 0.0
    %897 = vmatpush1.xpose.msra.mxu0 0.0
    %898 = vmatprep.subr.mxu0 0.0
    %899 = vmatpush1.xpose.msra.mxu0 0.0
    %900 = vmatprep.subr.mxu0 0.0
    %901 = vmatpush1.xpose.msra.mxu0 0.0
    %902 = vmatprep.subr.mxu0 0.0
    %903 = vmatpush1.xpose.msra.mxu0 0.0
    %904 = vmatprep.subr.mxu0 0.0
    %905 = vmatpush1.xpose.msra.mxu0 %v874
    %906 = vmatprep.subr.mxu0 0.0
    %907 = vmatpush1.xpose.msra.mxu0 %v872
    %908 = vmatprep.subr.mxu0 0.0
    %909 = vmatpush2.xpose.msra.mxu0 0.0
    %910 = vmatprep.subr.mxu0 0.0
    %911 = vmatpush2.xpose.msra.mxu0 0.0
    %912 = vmatprep.subr.mxu0 0.0
    %913 = vmatpush2.xpose.msra.mxu0 0.0
    %914 = vmatprep.subr.mxu0 0.0
    %915 = vmatpush2.xpose.msra.mxu0 0.0
    %916 = vmatprep.subr.mxu0 0.0
    %917 = vmatpush2.xpose.msra.mxu0 0.0
    %918 = vmatprep.subr.mxu0 0.0
    %919 = vmatpush2.xpose.msra.mxu0 0.0
    %920 = vmatprep.subr.mxu0 0.0
    %921 = vmatpush2.xpose.msra.mxu0 0.0
    %922 = vmatprep.subr.mxu0 0.0
    %923 = vmatpush2.xpose.msra.mxu0 0.0
    %924 = vmatprep.subr.mxu0 0.0
    %925 = vmatpush2.xpose.msra.mxu0 0.0
    %926 = vmatprep.subr.mxu0 0.0
    %927 = vmatpush2.xpose.msra.mxu0 0.0
    %928 = vmatprep.subr.mxu0 0.0
    %929 = vmatpush2.xpose.msra.mxu0 0.0
    %930 = vmatprep.subr.mxu0 0.0
    %931 = vmatpush2.xpose.msra.mxu0 0.0
    %932 = vmatprep.subr.mxu0 0.0
    %933 = vmatpush2.xpose.msra.mxu0 0.0
    %934 = vmatprep.subr.mxu0 0.0
    %935 = vmatpush2.xpose.msra.mxu0 0.0
    %936 = vmatprep.subr.mxu0 0.0
    %937 = vmatpush2.xpose.msra.mxu0 0.0
    %938 = vmatprep.subr.mxu0 0.0
    %939 = vmatpush2.xpose.msra.mxu0 0.0
    %940 = vmatprep.mubr.f32.mxu0 0.0
    %941 = vmatmul.mubr.f32.gmra.mxu0 %v868
    %v942 = vpop.f32.mrf.mxu0
    %v943 = vadd.f32 0.0, %v942
    %v944 = vpop.f32.mrf.mxu0
    %945 = vmatprep.mubr.f32.mxu0 0.0
    %946 = vmatmul.mubr.f32.gmra.mxu0 %v870
    %v947 = vpop.f32.mrf.mxu0
    %v948 = vadd.f32 0.0, %v947
    %v949 = vpop.f32.mrf.mxu0
    %950 = vdwg.mxu0
    %953 = vrot.lane.b32.xlu0 %v325, 120
    %v954 = vpop.permute.xlu0 %953
    %955 = vrot.lane.b32.xlu0 %v326, 120
    %v956 = vpop.permute.xlu0 %955
    %v957 = vsel %vm333, %v325, 0
    %v959 = vsel %vm333, %v326, 0
    %v961 = vsel %vm333, %v954, 0
    %v963 = vsel %vm333, %v956, 0
    %965 = vmatprep.subr.mxu0 0.0
    %966 = vmatpush1.xpose.msra.mxu0 0.0
    %967 = vmatprep.subr.mxu0 0.0
    %968 = vmatpush1.xpose.msra.mxu0 0.0
    %969 = vmatprep.subr.mxu0 0.0
    %970 = vmatpush1.xpose.msra.mxu0 0.0
    %971 = vmatprep.subr.mxu0 0.0
    %972 = vmatpush1.xpose.msra.mxu0 0.0
    %973 = vmatprep.subr.mxu0 0.0
    %974 = vmatpush1.xpose.msra.mxu0 0.0
    %975 = vmatprep.subr.mxu0 0.0
    %976 = vmatpush1.xpose.msra.mxu0 0.0
    %977 = vmatprep.subr.mxu0 0.0
    %978 = vmatpush1.xpose.msra.mxu0 0.0
    %979 = vmatprep.subr.mxu0 0.0
    %980 = vmatpush1.xpose.msra.mxu0 0.0
    %981 = vmatprep.subr.mxu0 0.0
    %982 = vmatpush1.xpose.msra.mxu0 0.0
    %983 = vmatprep.subr.mxu0 0.0
    %984 = vmatpush1.xpose.msra.mxu0 0.0
    %985 = vmatprep.subr.mxu0 0.0
    %986 = vmatpush1.xpose.msra.mxu0 0.0
    %987 = vmatprep.subr.mxu0 0.0
    %988 = vmatpush1.xpose.msra.mxu0 0.0
    %989 = vmatprep.subr.mxu0 0.0
    %990 = vmatpush1.xpose.msra.mxu0 0.0
    %991 = vmatprep.subr.mxu0 0.0
    %992 = vmatpush1.xpose.msra.mxu0 0.0
    %993 = vmatprep.subr.mxu0 0.0
    %994 = vmatpush1.xpose.msra.mxu0 %v963
    %995 = vmatprep.subr.mxu0 0.0
    %996 = vmatpush1.xpose.msra.mxu0 %v961
    %997 = vmatprep.subr.mxu0 0.0
    %998 = vmatpush2.xpose.msra.mxu0 0.0
    %999 = vmatprep.subr.mxu0 0.0
    %1000 = vmatpush2.xpose.msra.mxu0 0.0
    %1001 = vmatprep.subr.mxu0 0.0
    %1002 = vmatpush2.xpose.msra.mxu0 0.0
    %1003 = vmatprep.subr.mxu0 0.0
    %1004 = vmatpush2.xpose.msra.mxu0 0.0
    %1005 = vmatprep.subr.mxu0 0.0
    %1006 = vmatpush2.xpose.msra.mxu0 0.0
    %1007 = vmatprep.subr.mxu0 0.0
    %1008 = vmatpush2.xpose.msra.mxu0 0.0
    %1009 = vmatprep.subr.mxu0 0.0
    %1010 = vmatpush2.xpose.msra.mxu0 0.0
    %1011 = vmatprep.subr.mxu0 0.0
    %1012 = vmatpush2.xpose.msra.mxu0 0.0
    %1013 = vmatprep.subr.mxu0 0.0
    %1014 = vmatpush2.xpose.msra.mxu0 0.0
    %1015 = vmatprep.subr.mxu0 0.0
    %1016 = vmatpush2.xpose.msra.mxu0 0.0
    %1017 = vmatprep.subr.mxu0 0.0
    %1018 = vmatpush2.xpose.msra.mxu0 0.0
    %1019 = vmatprep.subr.mxu0 0.0
    %1020 = vmatpush2.xpose.msra.mxu0 0.0
    %1021 = vmatprep.subr.mxu0 0.0
    %1022 = vmatpush2.xpose.msra.mxu0 0.0
    %1023 = vmatprep.subr.mxu0 0.0
    %1024 = vmatpush2.xpose.msra.mxu0 0.0
    %1025 = vmatprep.subr.mxu0 0.0
    %1026 = vmatpush2.xpose.msra.mxu0 0.0
    %1027 = vmatprep.subr.mxu0 0.0
    %1028 = vmatpush2.xpose.msra.mxu0 0.0
    %1029 = vmatprep.mubr.f32.mxu0 0.0
    %1030 = vmatmul.mubr.f32.gmra.mxu0 %v957
    %v1031 = vpop.f32.mrf.mxu0
    %v1032 = vadd.f32 0.0, %v1031
    %v1033 = vpop.f32.mrf.mxu0
    %1034 = vmatprep.mubr.f32.mxu0 0.0
    %1035 = vmatmul.mubr.f32.gmra.mxu0 %v959
    %v1036 = vpop.f32.mrf.mxu0
    %v1037 = vadd.f32 0.0, %v1036
    %v1038 = vpop.f32.mrf.mxu0
    %1039 = vdwg.mxu0
    %vm1040 = vcmask 130048
    %v1041 = vsel %vm1040, %v409, -inf
    %1042 = vmax.xlane.f32.xlu0 %v1041
    %v1043 = vpop.xlane.xlu0 %1042
    %v1044 = vsel %vm1040, %v414, -inf
    %1045 = vmax.xlane.f32.xlu0 %v1044
    %v1046 = vpop.xlane.xlu0 %1045
    %v1047 = vsel %vm1040, %v498, -inf
    %1048 = vmax.xlane.f32.xlu0 %v1047
    %v1049 = vpop.xlane.xlu0 %1048
    %v1050 = vsel %vm1040, %v503, -inf
    %1051 = vmax.xlane.f32.xlu0 %v1050
    %v1052 = vpop.xlane.xlu0 %1051
    %v1053 = vsel %vm1040, %v587, -inf
    %1054 = vmax.xlane.f32.xlu0 %v1053
    %v1055 = vpop.xlane.xlu0 %1054
    %v1056 = vsel %vm1040, %v592, -inf
    %1057 = vmax.xlane.f32.xlu0 %v1056
    %v1058 = vpop.xlane.xlu0 %1057
    %v1059 = vsel %vm1040, %v676, -inf
    %1060 = vmax.xlane.f32.xlu0 %v1059
    %v1061 = vpop.xlane.xlu0 %1060
    %v1062 = vsel %vm1040, %v681, -inf
    %1063 = vmax.xlane.f32.xlu0 %v1062
    %v1064 = vpop.xlane.xlu0 %1063
    %v1065 = vsel %vm1040, %v765, -inf
    %1066 = vmax.xlane.f32.xlu0 %v1065
    %v1067 = vpop.xlane.xlu0 %1066
    %v1068 = vsel %vm1040, %v770, -inf
    %1069 = vmax.xlane.f32.xlu0 %v1068
    %v1070 = vpop.xlane.xlu0 %1069
    %v1071 = vsel %vm1040, %v854, -inf
    %1072 = vmax.xlane.f32.xlu0 %v1071
    %v1073 = vpop.xlane.xlu0 %1072
    %v1074 = vsel %vm1040, %v859, -inf
    %1075 = vmax.xlane.f32.xlu0 %v1074
    %v1076 = vpop.xlane.xlu0 %1075
    %v1077 = vsel %vm1040, %v943, -inf
    %1078 = vmax.xlane.f32.xlu0 %v1077
    %v1079 = vpop.xlane.xlu0 %1078
    %v1080 = vsel %vm1040, %v948, -inf
    %1081 = vmax.xlane.f32.xlu0 %v1080
    %v1082 = vpop.xlane.xlu0 %1081
    %v1083 = vsel %vm1040, %v1032, -inf
    %1084 = vmax.xlane.f32.xlu0 %v1083
    %v1085 = vpop.xlane.xlu0 %1084
    %v1086 = vsel %vm1040, %v1037, -inf
    %1087 = vmax.xlane.f32.xlu0 %v1086
    %v1088 = vpop.xlane.xlu0 %1087
    %v1089 = vsub.f32 %v409, %v1043
    %v1090 = vsub.f32 %v414, %v1046
    %v1091 = vsub.f32 %v498, %v1049
    %v1092 = vsub.f32 %v503, %v1052
    %v1093 = vsub.f32 %v587, %v1055
    %v1094 = vsub.f32 %v592, %v1058
    %v1095 = vsub.f32 %v676, %v1061
    %v1096 = vsub.f32 %v681, %v1064
    %v1097 = vsub.f32 %v765, %v1067
    %v1098 = vsub.f32 %v770, %v1070
    %v1099 = vsub.f32 %v854, %v1073
    %v1100 = vsub.f32 %v859, %v1076
    %v1101 = vsub.f32 %v943, %v1079
    %v1102 = vsub.f32 %v948, %v1082
    %v1103 = vsub.f32 %v1032, %v1085
    %v1104 = vsub.f32 %v1037, %v1088
    %v1105 = vmul.f32 %v1089, 1.442695
    %v1106 = vpow.pop %v1105
    %v1107 = vmul.f32 %v1090, 1.442695
    %v1108 = vpow.pop %v1107
    %v1109 = vmul.f32 %v1091, 1.442695
    %v1110 = vpow.pop %v1109
    %v1111 = vmul.f32 %v1092, 1.442695
    %v1112 = vpow.pop %v1111
    %v1113 = vmul.f32 %v1093, 1.442695
    %v1114 = vpow.pop %v1113
    %v1115 = vmul.f32 %v1094, 1.442695
    %v1116 = vpow.pop %v1115
    %v1117 = vmul.f32 %v1095, 1.442695
    %v1118 = vpow.pop %v1117
    %v1119 = vmul.f32 %v1096, 1.442695
    %v1120 = vpow.pop %v1119
    %v1121 = vmul.f32 %v1097, 1.442695
    %v1122 = vpow.pop %v1121
    %v1123 = vmul.f32 %v1098, 1.442695
    %v1124 = vpow.pop %v1123
    %v1125 = vmul.f32 %v1099, 1.442695
    %v1126 = vpow.pop %v1125
    %v1127 = vmul.f32 %v1100, 1.442695
    %v1128 = vpow.pop %v1127
    %v1129 = vmul.f32 %v1101, 1.442695
    %v1130 = vpow.pop %v1129
    %v1131 = vmul.f32 %v1102, 1.442695
    %v1132 = vpow.pop %v1131
    %v1133 = vmul.f32 %v1103, 1.442695
    %v1134 = vpow.pop %v1133
    %v1135 = vmul.f32 %v1104, 1.442695
    %v1136 = vpow.pop %v1135
    %v1137 = vsel %vm1040, %v1106, 0.0
    %1138 = vadd.xlane.f32.xlu0 %v1137
    %v1139 = vpop.xlane.xlu0 %1138
    %v1140 = vsel %vm1040, %v1108, 0.0
    %1141 = vadd.xlane.f32.xlu0 %v1140
    %v1142 = vpop.xlane.xlu0 %1141
    %v1143 = vsel %vm1040, %v1110, 0.0
    %1144 = vadd.xlane.f32.xlu0 %v1143
    %v1145 = vpop.xlane.xlu0 %1144
    %v1146 = vsel %vm1040, %v1112, 0.0
    %1147 = vadd.xlane.f32.xlu0 %v1146
    %v1148 = vpop.xlane.xlu0 %1147
    %v1149 = vsel %vm1040, %v1114, 0.0
    %1150 = vadd.xlane.f32.xlu0 %v1149
    %v1151 = vpop.xlane.xlu0 %1150
    %v1152 = vsel %vm1040, %v1116, 0.0
    %1153 = vadd.xlane.f32.xlu0 %v1152
    %v1154 = vpop.xlane.xlu0 %1153
    %v1155 = vsel %vm1040, %v1118, 0.0
    %1156 = vadd.xlane.f32.xlu0 %v1155
    %v1157 = vpop.xlane.xlu0 %1156
    %v1158 = vsel %vm1040, %v1120, 0.0
    %1159 = vadd.xlane.f32.xlu0 %v1158
    %v1160 = vpop.xlane.xlu0 %1159
    %v1161 = vsel %vm1040, %v1122, 0.0
    %1162 = vadd.xlane.f32.xlu0 %v1161
    %v1163 = vpop.xlane.xlu0 %1162
    %v1164 = vsel %vm1040, %v1124, 0.0
    %1165 = vadd.xlane.f32.xlu0 %v1164
    %v1166 = vpop.xlane.xlu0 %1165
    %v1167 = vsel %vm1040, %v1126, 0.0
    %1168 = vadd.xlane.f32.xlu0 %v1167
    %v1169 = vpop.xlane.xlu0 %1168
    %v1170 = vsel %vm1040, %v1128, 0.0
    %1171 = vadd.xlane.f32.xlu0 %v1170
    %v1172 = vpop.xlane.xlu0 %1171
    %v1173 = vsel %vm1040, %v1130, 0.0
    %1174 = vadd.xlane.f32.xlu0 %v1173
    %v1175 = vpop.xlane.xlu0 %1174
    %v1176 = vsel %vm1040, %v1132, 0.0
    %1177 = vadd.xlane.f32.xlu0 %v1176
    %v1178 = vpop.xlane.xlu0 %1177
    %v1179 = vsel %vm1040, %v1134, 0.0
    %1180 = vadd.xlane.f32.xlu0 %v1179
    %v1181 = vpop.xlane.xlu0 %1180
    %v1182 = vsel %vm1040, %v1136, 0.0
    %1183 = vadd.xlane.f32.xlu0 %v1182
    %v1184 = vpop.xlane.xlu0 %1183
    %v1185 = vrcp.pop %v1139
    %v1186 = vrcp.pop %v1142
    %v1187 = vrcp.pop %v1145
    %v1188 = vrcp.pop %v1148
    %v1189 = vrcp.pop %v1151
    %v1190 = vrcp.pop %v1154
    %v1191 = vrcp.pop %v1157
    %v1192 = vrcp.pop %v1160
    %v1193 = vrcp.pop %v1163
    %v1194 = vrcp.pop %v1166
    %v1195 = vrcp.pop %v1169
    %v1196 = vrcp.pop %v1172
    %v1197 = vrcp.pop %v1175
    %v1198 = vrcp.pop %v1178
    %v1199 = vrcp.pop %v1181
    %v1200 = vrcp.pop %v1184
    %v1201 = vmul.f32 %v1106, %v1185
    %v1202 = vmul.f32 %v1108, %v1186
    %v1203 = vmul.f32 %v1110, %v1187
    %v1204 = vmul.f32 %v1112, %v1188
    %v1205 = vmul.f32 %v1114, %v1189
    %v1206 = vmul.f32 %v1116, %v1190
    %v1207 = vmul.f32 %v1118, %v1191
    %v1208 = vmul.f32 %v1120, %v1192
    %v1209 = vmul.f32 %v1122, %v1193
    %v1210 = vmul.f32 %v1124, %v1194
    %v1211 = vmul.f32 %v1126, %v1195
    %v1212 = vmul.f32 %v1128, %v1196
    %v1213 = vmul.f32 %v1130, %v1197
    %v1214 = vmul.f32 %v1132, %v1198
    %v1215 = vmul.f32 %v1134, %v1199
    %v1216 = vmul.f32 %v1136, %v1200
    %1217 = vrot.lane.b32.xlu0 %v311, 112
    %v1218 = vpop.permute.xlu0 %1217
    %1219 = vrot.lane.b32.xlu0 %v312, 112
    %v1220 = vpop.permute.xlu0 %1219
    %v1224 = vsel %vm1040, %v1201, 0
    %v1227 = vsel %vm1040, %v1202, 0
    %1229 = vmatprep.subr.mxu0 0.0
    %1230 = vmatpush1.msra.mxu0 0.0
    %1231 = vmatprep.subr.mxu0 0.0
    %1232 = vmatpush1.msra.mxu0 0.0
    %1233 = vmatprep.subr.mxu0 0.0
    %1234 = vmatpush1.msra.mxu0 0.0
    %1235 = vmatprep.subr.mxu0 0.0
    %1236 = vmatpush1.msra.mxu0 0.0
    %1237 = vmatprep.subr.mxu0 0.0
    %1238 = vmatpush1.msra.mxu0 0.0
    %1239 = vmatprep.subr.mxu0 0.0
    %1240 = vmatpush1.msra.mxu0 0.0
    %1241 = vmatprep.subr.mxu0 0.0
    %1242 = vmatpush1.msra.mxu0 0.0
    %1243 = vmatprep.subr.mxu0 0.0
    %1244 = vmatpush1.msra.mxu0 0.0
    %1245 = vmatprep.subr.mxu0 0.0
    %1246 = vmatpush1.msra.mxu0 0.0
    %1247 = vmatprep.subr.mxu0 0.0
    %1248 = vmatpush1.msra.mxu0 0.0
    %1249 = vmatprep.subr.mxu0 0.0
    %1250 = vmatpush1.msra.mxu0 0.0
    %1251 = vmatprep.subr.mxu0 0.0
    %1252 = vmatpush1.msra.mxu0 0.0
    %1253 = vmatprep.subr.mxu0 0.0
    %1254 = vmatpush1.msra.mxu0 0.0
    %1255 = vmatprep.subr.mxu0 0.0
    %1256 = vmatpush1.msra.mxu0 0.0
    %1257 = vmatprep.subr.mxu0 0.0
    %1258 = vmatpush1.msra.mxu0 %v1220
    %1259 = vmatprep.subr.mxu0 0.0
    %1260 = vmatpush1.msra.mxu0 %v1218
    %1261 = vmatprep.subr.mxu0 0.0
    %1262 = vmatpush2.msra.mxu0 0.0
    %1263 = vmatprep.subr.mxu0 0.0
    %1264 = vmatpush2.msra.mxu0 0.0
    %1265 = vmatprep.subr.mxu0 0.0
    %1266 = vmatpush2.msra.mxu0 0.0
    %1267 = vmatprep.subr.mxu0 0.0
    %1268 = vmatpush2.msra.mxu0 0.0
    %1269 = vmatprep.subr.mxu0 0.0
    %1270 = vmatpush2.msra.mxu0 0.0
    %1271 = vmatprep.subr.mxu0 0.0
    %1272 = vmatpush2.msra.mxu0 0.0
    %1273 = vmatprep.subr.mxu0 0.0
    %1274 = vmatpush2.msra.mxu0 0.0
    %1275 = vmatprep.subr.mxu0 0.0
    %1276 = vmatpush2.msra.mxu0 0.0
    %1277 = vmatprep.subr.mxu0 0.0
    %1278 = vmatpush2.msra.mxu0 0.0
    %1279 = vmatprep.subr.mxu0 0.0
    %1280 = vmatpush2.msra.mxu0 0.0
    %1281 = vmatprep.subr.mxu0 0.0
    %1282 = vmatpush2.msra.mxu0 0.0
    %1283 = vmatprep.subr.mxu0 0.0
    %1284 = vmatpush2.msra.mxu0 0.0
    %1285 = vmatprep.subr.mxu0 0.0
    %1286 = vmatpush2.msra.mxu0 0.0
    %1287 = vmatprep.subr.mxu0 0.0
    %1288 = vmatpush2.msra.mxu0 0.0
    %1289 = vmatprep.subr.mxu0 0.0
    %1290 = vmatpush2.msra.mxu0 0.0
    %1291 = vmatprep.subr.mxu0 0.0
    %1292 = vmatpush2.msra.mxu0 0.0
    %1293 = vmatprep.mubr.f32.mxu0 0.0
    %1294 = vmatmul.mubr.f32.gmra.mxu0 %v1224
    %v1295 = vpop.f32.mrf.mxu0
    %v1296 = vadd.f32 0.0, %v1295
    %v1297 = vpop.f32.mrf.mxu0
    %1298 = vmatprep.mubr.f32.mxu0 0.0
    %1299 = vmatmul.mubr.f32.gmra.mxu0 %v1227
    %v1300 = vpop.f32.mrf.mxu0
    %v1301 = vadd.f32 0.0, %v1300
    %v1302 = vpop.f32.mrf.mxu0
    %1303 = vdwg.mxu0
    %1304 = vrot.lane.b32.xlu0 %v313, 112
    %v1305 = vpop.permute.xlu0 %1304
    %1306 = vrot.lane.b32.xlu0 %v314, 112
    %v1307 = vpop.permute.xlu0 %1306
    %v1311 = vsel %vm1040, %v1203, 0
    %v1314 = vsel %vm1040, %v1204, 0
    %1316 = vmatprep.subr.mxu0 0.0
    %1317 = vmatpush1.msra.mxu0 0.0
    %1318 = vmatprep.subr.mxu0 0.0
    %1319 = vmatpush1.msra.mxu0 0.0
    %1320 = vmatprep.subr.mxu0 0.0
    %1321 = vmatpush1.msra.mxu0 0.0
    %1322 = vmatprep.subr.mxu0 0.0
    %1323 = vmatpush1.msra.mxu0 0.0
    %1324 = vmatprep.subr.mxu0 0.0
    %1325 = vmatpush1.msra.mxu0 0.0
    %1326 = vmatprep.subr.mxu0 0.0
    %1327 = vmatpush1.msra.mxu0 0.0
    %1328 = vmatprep.subr.mxu0 0.0
    %1329 = vmatpush1.msra.mxu0 0.0
    %1330 = vmatprep.subr.mxu0 0.0
    %1331 = vmatpush1.msra.mxu0 0.0
    %1332 = vmatprep.subr.mxu0 0.0
    %1333 = vmatpush1.msra.mxu0 0.0
    %1334 = vmatprep.subr.mxu0 0.0
    %1335 = vmatpush1.msra.mxu0 0.0
    %1336 = vmatprep.subr.mxu0 0.0
    %1337 = vmatpush1.msra.mxu0 0.0
    %1338 = vmatprep.subr.mxu0 0.0
    %1339 = vmatpush1.msra.mxu0 0.0
    %1340 = vmatprep.subr.mxu0 0.0
    %1341 = vmatpush1.msra.mxu0 0.0
    %1342 = vmatprep.subr.mxu0 0.0
    %1343 = vmatpush1.msra.mxu0 0.0
    %1344 = vmatprep.subr.mxu0 0.0
    %1345 = vmatpush1.msra.mxu0 %v1307
    %1346 = vmatprep.subr.mxu0 0.0
    %1347 = vmatpush1.msra.mxu0 %v1305
    %1348 = vmatprep.subr.mxu0 0.0
    %1349 = vmatpush2.msra.mxu0 0.0
    %1350 = vmatprep.subr.mxu0 0.0
    %1351 = vmatpush2.msra.mxu0 0.0
    %1352 = vmatprep.subr.mxu0 0.0
    %1353 = vmatpush2.msra.mxu0 0.0
    %1354 = vmatprep.subr.mxu0 0.0
    %1355 = vmatpush2.msra.mxu0 0.0
    %1356 = vmatprep.subr.mxu0 0.0
    %1357 = vmatpush2.msra.mxu0 0.0
    %1358 = vmatprep.subr.mxu0 0.0
    %1359 = vmatpush2.msra.mxu0 0.0
    %1360 = vmatprep.subr.mxu0 0.0
    %1361 = vmatpush2.msra.mxu0 0.0
    %1362 = vmatprep.subr.mxu0 0.0
    %1363 = vmatpush2.msra.mxu0 0.0
    %1364 = vmatprep.subr.mxu0 0.0
    %1365 = vmatpush2.msra.mxu0 0.0
    %1366 = vmatprep.subr.mxu0 0.0
    %1367 = vmatpush2.msra.mxu0 0.0
    %1368 = vmatprep.subr.mxu0 0.0
    %1369 = vmatpush2.msra.mxu0 0.0
    %1370 = vmatprep.subr.mxu0 0.0
    %1371 = vmatpush2.msra.mxu0 0.0
    %1372 = vmatprep.subr.mxu0 0.0
    %1373 = vmatpush2.msra.mxu0 0.0
    %1374 = vmatprep.subr.mxu0 0.0
    %1375 = vmatpush2.msra.mxu0 0.0
    %1376 = vmatprep.subr.mxu0 0.0
    %1377 = vmatpush2.msra.mxu0 0.0
    %1378 = vmatprep.subr.mxu0 0.0
    %1379 = vmatpush2.msra.mxu0 0.0
    %1380 = vmatprep.mubr.f32.mxu0 0.0
    %1381 = vmatmul.mubr.f32.gmra.mxu0 %v1311
    %v1382 = vpop.f32.mrf.mxu0
    %v1383 = vadd.f32 0.0, %v1382
    %v1384 = vpop.f32.mrf.mxu0
    %1385 = vmatprep.mubr.f32.mxu0 0.0
    %1386 = vmatmul.mubr.f32.gmra.mxu0 %v1314
    %v1387 = vpop.f32.mrf.mxu0
    %v1388 = vadd.f32 0.0, %v1387
    %v1389 = vpop.f32.mrf.mxu0
    %1390 = vdwg.mxu0
    %1391 = vrot.lane.b32.xlu0 %v315, 112
    %v1392 = vpop.permute.xlu0 %1391
    %1393 = vrot.lane.b32.xlu0 %v316, 112
    %v1394 = vpop.permute.xlu0 %1393
    %v1398 = vsel %vm1040, %v1205, 0
    %v1401 = vsel %vm1040, %v1206, 0
    %1403 = vmatprep.subr.mxu0 0.0
    %1404 = vmatpush1.msra.mxu0 0.0
    %1405 = vmatprep.subr.mxu0 0.0
    %1406 = vmatpush1.msra.mxu0 0.0
    %1407 = vmatprep.subr.mxu0 0.0
    %1408 = vmatpush1.msra.mxu0 0.0
    %1409 = vmatprep.subr.mxu0 0.0
    %1410 = vmatpush1.msra.mxu0 0.0
    %1411 = vmatprep.subr.mxu0 0.0
    %1412 = vmatpush1.msra.mxu0 0.0
    %1413 = vmatprep.subr.mxu0 0.0
    %1414 = vmatpush1.msra.mxu0 0.0
    %1415 = vmatprep.subr.mxu0 0.0
    %1416 = vmatpush1.msra.mxu0 0.0
    %1417 = vmatprep.subr.mxu0 0.0
    %1418 = vmatpush1.msra.mxu0 0.0
    %1419 = vmatprep.subr.mxu0 0.0
    %1420 = vmatpush1.msra.mxu0 0.0
    %1421 = vmatprep.subr.mxu0 0.0
    %1422 = vmatpush1.msra.mxu0 0.0
    %1423 = vmatprep.subr.mxu0 0.0
    %1424 = vmatpush1.msra.mxu0 0.0
    %1425 = vmatprep.subr.mxu0 0.0
    %1426 = vmatpush1.msra.mxu0 0.0
    %1427 = vmatprep.subr.mxu0 0.0
    %1428 = vmatpush1.msra.mxu0 0.0
    %1429 = vmatprep.subr.mxu0 0.0
    %1430 = vmatpush1.msra.mxu0 0.0
    %1431 = vmatprep.subr.mxu0 0.0
    %1432 = vmatpush1.msra.mxu0 %v1394
    %1433 = vmatprep.subr.mxu0 0.0
    %1434 = vmatpush1.msra.mxu0 %v1392
    %1435 = vmatprep.subr.mxu0 0.0
    %1436 = vmatpush2.msra.mxu0 0.0
    %1437 = vmatprep.subr.mxu0 0.0
    %1438 = vmatpush2.msra.mxu0 0.0
    %1439 = vmatprep.subr.mxu0 0.0
    %1440 = vmatpush2.msra.mxu0 0.0
    %1441 = vmatprep.subr.mxu0 0.0
    %1442 = vmatpush2.msra.mxu0 0.0
    %1443 = vmatprep.subr.mxu0 0.0
    %1444 = vmatpush2.msra.mxu0 0.0
    %1445 = vmatprep.subr.mxu0 0.0
    %1446 = vmatpush2.msra.mxu0 0.0
    %1447 = vmatprep.subr.mxu0 0.0
    %1448 = vmatpush2.msra.mxu0 0.0
    %1449 = vmatprep.subr.mxu0 0.0
    %1450 = vmatpush2.msra.mxu0 0.0
    %1451 = vmatprep.subr.mxu0 0.0
    %1452 = vmatpush2.msra.mxu0 0.0
    %1453 = vmatprep.subr.mxu0 0.0
    %1454 = vmatpush2.msra.mxu0 0.0
    %1455 = vmatprep.subr.mxu0 0.0
    %1456 = vmatpush2.msra.mxu0 0.0
    %1457 = vmatprep.subr.mxu0 0.0
    %1458 = vmatpush2.msra.mxu0 0.0
    %1459 = vmatprep.subr.mxu0 0.0
    %1460 = vmatpush2.msra.mxu0 0.0
    %1461 = vmatprep.subr.mxu0 0.0
    %1462 = vmatpush2.msra.mxu0 0.0
    %1463 = vmatprep.subr.mxu0 0.0
    %1464 = vmatpush2.msra.mxu0 0.0
    %1465 = vmatprep.subr.mxu0 0.0
    %1466 = vmatpush2.msra.mxu0 0.0
    %1467 = vmatprep.mubr.f32.mxu0 0.0
    %1468 = vmatmul.mubr.f32.gmra.mxu0 %v1398
    %v1469 = vpop.f32.mrf.mxu0
    %v1470 = vadd.f32 0.0, %v1469
    %v1471 = vpop.f32.mrf.mxu0
    %1472 = vmatprep.mubr.f32.mxu0 0.0
    %1473 = vmatmul.mubr.f32.gmra.mxu0 %v1401
    %v1474 = vpop.f32.mrf.mxu0
    %v1475 = vadd.f32 0.0, %v1474
    %v1476 = vpop.f32.mrf.mxu0
    %1477 = vdwg.mxu0
    %1478 = vrot.lane.b32.xlu0 %v317, 112
    %v1479 = vpop.permute.xlu0 %1478
    %1480 = vrot.lane.b32.xlu0 %v318, 112
    %v1481 = vpop.permute.xlu0 %1480
    %v1485 = vsel %vm1040, %v1207, 0
    %v1488 = vsel %vm1040, %v1208, 0
    %1490 = vmatprep.subr.mxu0 0.0
    %1491 = vmatpush1.msra.mxu0 0.0
    %1492 = vmatprep.subr.mxu0 0.0
    %1493 = vmatpush1.msra.mxu0 0.0
    %1494 = vmatprep.subr.mxu0 0.0
    %1495 = vmatpush1.msra.mxu0 0.0
    %1496 = vmatprep.subr.mxu0 0.0
    %1497 = vmatpush1.msra.mxu0 0.0
    %1498 = vmatprep.subr.mxu0 0.0
    %1499 = vmatpush1.msra.mxu0 0.0
    %1500 = vmatprep.subr.mxu0 0.0
    %1501 = vmatpush1.msra.mxu0 0.0
    %1502 = vmatprep.subr.mxu0 0.0
    %1503 = vmatpush1.msra.mxu0 0.0
    %1504 = vmatprep.subr.mxu0 0.0
    %1505 = vmatpush1.msra.mxu0 0.0
    %1506 = vmatprep.subr.mxu0 0.0
    %1507 = vmatpush1.msra.mxu0 0.0
    %1508 = vmatprep.subr.mxu0 0.0
    %1509 = vmatpush1.msra.mxu0 0.0
    %1510 = vmatprep.subr.mxu0 0.0
    %1511 = vmatpush1.msra.mxu0 0.0
    %1512 = vmatprep.subr.mxu0 0.0
    %1513 = vmatpush1.msra.mxu0 0.0
    %1514 = vmatprep.subr.mxu0 0.0
    %1515 = vmatpush1.msra.mxu0 0.0
    %1516 = vmatprep.subr.mxu0 0.0
    %1517 = vmatpush1.msra.mxu0 0.0
    %1518 = vmatprep.subr.mxu0 0.0
    %1519 = vmatpush1.msra.mxu0 %v1481
    %1520 = vmatprep.subr.mxu0 0.0
    %1521 = vmatpush1.msra.mxu0 %v1479
    %1522 = vmatprep.subr.mxu0 0.0
    %1523 = vmatpush2.msra.mxu0 0.0
    %1524 = vmatprep.subr.mxu0 0.0
    %1525 = vmatpush2.msra.mxu0 0.0
    %1526 = vmatprep.subr.mxu0 0.0
    %1527 = vmatpush2.msra.mxu0 0.0
    %1528 = vmatprep.subr.mxu0 0.0
    %1529 = vmatpush2.msra.mxu0 0.0
    %1530 = vmatprep.subr.mxu0 0.0
    %1531 = vmatpush2.msra.mxu0 0.0
    %1532 = vmatprep.subr.mxu0 0.0
    %1533 = vmatpush2.msra.mxu0 0.0
    %1534 = vmatprep.subr.mxu0 0.0
    %1535 = vmatpush2.msra.mxu0 0.0
    %1536 = vmatprep.subr.mxu0 0.0
    %1537 = vmatpush2.msra.mxu0 0.0
    %1538 = vmatprep.subr.mxu0 0.0
    %1539 = vmatpush2.msra.mxu0 0.0
    %1540 = vmatprep.subr.mxu0 0.0
    %1541 = vmatpush2.msra.mxu0 0.0
    %1542 = vmatprep.subr.mxu0 0.0
    %1543 = vmatpush2.msra.mxu0 0.0
    %1544 = vmatprep.subr.mxu0 0.0
    %1545 = vmatpush2.msra.mxu0 0.0
    %1546 = vmatprep.subr.mxu0 0.0
    %1547 = vmatpush2.msra.mxu0 0.0
    %1548 = vmatprep.subr.mxu0 0.0
    %1549 = vmatpush2.msra.mxu0 0.0
    %1550 = vmatprep.subr.mxu0 0.0
    %1551 = vmatpush2.msra.mxu0 0.0
    %1552 = vmatprep.subr.mxu0 0.0
    %1553 = vmatpush2.msra.mxu0 0.0
    %1554 = vmatprep.mubr.f32.mxu0 0.0
    %1555 = vmatmul.mubr.f32.gmra.mxu0 %v1485
    %v1556 = vpop.f32.mrf.mxu0
    %v1557 = vadd.f32 0.0, %v1556
    %v1558 = vpop.f32.mrf.mxu0
    %1559 = vmatprep.mubr.f32.mxu0 0.0
    %1560 = vmatmul.mubr.f32.gmra.mxu0 %v1488
    %v1561 = vpop.f32.mrf.mxu0
    %v1562 = vadd.f32 0.0, %v1561
    %v1563 = vpop.f32.mrf.mxu0
    %1564 = vdwg.mxu0
    %1565 = vrot.lane.b32.xlu0 %v319, 112
    %v1566 = vpop.permute.xlu0 %1565
    %1567 = vrot.lane.b32.xlu0 %v320, 112
    %v1568 = vpop.permute.xlu0 %1567
    %v1572 = vsel %vm1040, %v1209, 0
    %v1575 = vsel %vm1040, %v1210, 0
    %1577 = vmatprep.subr.mxu0 0.0
    %1578 = vmatpush1.msra.mxu0 0.0
    %1579 = vmatprep.subr.mxu0 0.0
    %1580 = vmatpush1.msra.mxu0 0.0
    %1581 = vmatprep.subr.mxu0 0.0
    %1582 = vmatpush1.msra.mxu0 0.0
    %1583 = vmatprep.subr.mxu0 0.0
    %1584 = vmatpush1.msra.mxu0 0.0
    %1585 = vmatprep.subr.mxu0 0.0
    %1586 = vmatpush1.msra.mxu0 0.0
    %1587 = vmatprep.subr.mxu0 0.0
    %1588 = vmatpush1.msra.mxu0 0.0
    %1589 = vmatprep.subr.mxu0 0.0
    %1590 = vmatpush1.msra.mxu0 0.0
    %1591 = vmatprep.subr.mxu0 0.0
    %1592 = vmatpush1.msra.mxu0 0.0
    %1593 = vmatprep.subr.mxu0 0.0
    %1594 = vmatpush1.msra.mxu0 0.0
    %1595 = vmatprep.subr.mxu0 0.0
    %1596 = vmatpush1.msra.mxu0 0.0
    %1597 = vmatprep.subr.mxu0 0.0
    %1598 = vmatpush1.msra.mxu0 0.0
    %1599 = vmatprep.subr.mxu0 0.0
    %1600 = vmatpush1.msra.mxu0 0.0
    %1601 = vmatprep.subr.mxu0 0.0
    %1602 = vmatpush1.msra.mxu0 0.0
    %1603 = vmatprep.subr.mxu0 0.0
    %1604 = vmatpush1.msra.mxu0 0.0
    %1605 = vmatprep.subr.mxu0 0.0
    %1606 = vmatpush1.msra.mxu0 %v1568
    %1607 = vmatprep.subr.mxu0 0.0
    %1608 = vmatpush1.msra.mxu0 %v1566
    %1609 = vmatprep.subr.mxu0 0.0
    %1610 = vmatpush2.msra.mxu0 0.0
    %1611 = vmatprep.subr.mxu0 0.0
    %1612 = vmatpush2.msra.mxu0 0.0
    %1613 = vmatprep.subr.mxu0 0.0
    %1614 = vmatpush2.msra.mxu0 0.0
    %1615 = vmatprep.subr.mxu0 0.0
    %1616 = vmatpush2.msra.mxu0 0.0
    %1617 = vmatprep.subr.mxu0 0.0
    %1618 = vmatpush2.msra.mxu0 0.0
    %1619 = vmatprep.subr.mxu0 0.0
    %1620 = vmatpush2.msra.mxu0 0.0
    %1621 = vmatprep.subr.mxu0 0.0
    %1622 = vmatpush2.msra.mxu0 0.0
    %1623 = vmatprep.subr.mxu0 0.0
    %1624 = vmatpush2.msra.mxu0 0.0
    %1625 = vmatprep.subr.mxu0 0.0
    %1626 = vmatpush2.msra.mxu0 0.0
    %1627 = vmatprep.subr.mxu0 0.0
    %1628 = vmatpush2.msra.mxu0 0.0
    %1629 = vmatprep.subr.mxu0 0.0
    %1630 = vmatpush2.msra.mxu0 0.0
    %1631 = vmatprep.subr.mxu0 0.0
    %1632 = vmatpush2.msra.mxu0 0.0
    %1633 = vmatprep.subr.mxu0 0.0
    %1634 = vmatpush2.msra.mxu0 0.0
    %1635 = vmatprep.subr.mxu0 0.0
    %1636 = vmatpush2.msra.mxu0 0.0
    %1637 = vmatprep.subr.mxu0 0.0
    %1638 = vmatpush2.msra.mxu0 0.0
    %1639 = vmatprep.subr.mxu0 0.0
    %1640 = vmatpush2.msra.mxu0 0.0
    %1641 = vmatprep.mubr.f32.mxu0 0.0
    %1642 = vmatmul.mubr.f32.gmra.mxu0 %v1572
    %v1643 = vpop.f32.mrf.mxu0
    %v1644 = vadd.f32 0.0, %v1643
    %v1645 = vpop.f32.mrf.mxu0
    %1646 = vmatprep.mubr.f32.mxu0 0.0
    %1647 = vmatmul.mubr.f32.gmra.mxu0 %v1575
    %v1648 = vpop.f32.mrf.mxu0
    %v1649 = vadd.f32 0.0, %v1648
    %v1650 = vpop.f32.mrf.mxu0
    %1651 = vdwg.mxu0
    %1652 = vrot.lane.b32.xlu0 %v321, 112
    %v1653 = vpop.permute.xlu0 %1652
    %1654 = vrot.lane.b32.xlu0 %v322, 112
    %v1655 = vpop.permute.xlu0 %1654
    %v1659 = vsel %vm1040, %v1211, 0
    %v1662 = vsel %vm1040, %v1212, 0
    %1664 = vmatprep.subr.mxu0 0.0
    %1665 = vmatpush1.msra.mxu0 0.0
    %1666 = vmatprep.subr.mxu0 0.0
    %1667 = vmatpush1.msra.mxu0 0.0
    %1668 = vmatprep.subr.mxu0 0.0
    %1669 = vmatpush1.msra.mxu0 0.0
    %1670 = vmatprep.subr.mxu0 0.0
    %1671 = vmatpush1.msra.mxu0 0.0
    %1672 = vmatprep.subr.mxu0 0.0
    %1673 = vmatpush1.msra.mxu0 0.0
    %1674 = vmatprep.subr.mxu0 0.0
    %1675 = vmatpush1.msra.mxu0 0.0
    %1676 = vmatprep.subr.mxu0 0.0
    %1677 = vmatpush1.msra.mxu0 0.0
    %1678 = vmatprep.subr.mxu0 0.0
    %1679 = vmatpush1.msra.mxu0 0.0
    %1680 = vmatprep.subr.mxu0 0.0
    %1681 = vmatpush1.msra.mxu0 0.0
    %1682 = vmatprep.subr.mxu0 0.0
    %1683 = vmatpush1.msra.mxu0 0.0
    %1684 = vmatprep.subr.mxu0 0.0
    %1685 = vmatpush1.msra.mxu0 0.0
    %1686 = vmatprep.subr.mxu0 0.0
    %1687 = vmatpush1.msra.mxu0 0.0
    %1688 = vmatprep.subr.mxu0 0.0
    %1689 = vmatpush1.msra.mxu0 0.0
    %1690 = vmatprep.subr.mxu0 0.0
    %1691 = vmatpush1.msra.mxu0 0.0
    %1692 = vmatprep.subr.mxu0 0.0
    %1693 = vmatpush1.msra.mxu0 %v1655
    %1694 = vmatprep.subr.mxu0 0.0
    %1695 = vmatpush1.msra.mxu0 %v1653
    %1696 = vmatprep.subr.mxu0 0.0
    %1697 = vmatpush2.msra.mxu0 0.0
    %1698 = vmatprep.subr.mxu0 0.0
    %1699 = vmatpush2.msra.mxu0 0.0
    %1700 = vmatprep.subr.mxu0 0.0
    %1701 = vmatpush2.msra.mxu0 0.0
    %1702 = vmatprep.subr.mxu0 0.0
    %1703 = vmatpush2.msra.mxu0 0.0
    %1704 = vmatprep.subr.mxu0 0.0
    %1705 = vmatpush2.msra.mxu0 0.0
    %1706 = vmatprep.subr.mxu0 0.0
    %1707 = vmatpush2.msra.mxu0 0.0
    %1708 = vmatprep.subr.mxu0 0.0
    %1709 = vmatpush2.msra.mxu0 0.0
    %1710 = vmatprep.subr.mxu0 0.0
    %1711 = vmatpush2.msra.mxu0 0.0
    %1712 = vmatprep.subr.mxu0 0.0
    %1713 = vmatpush2.msra.mxu0 0.0
    %1714 = vmatprep.subr.mxu0 0.0
    %1715 = vmatpush2.msra.mxu0 0.0
    %1716 = vmatprep.subr.mxu0 0.0
    %1717 = vmatpush2.msra.mxu0 0.0
    %1718 = vmatprep.subr.mxu0 0.0
    %1719 = vmatpush2.msra.mxu0 0.0
    %1720 = vmatprep.subr.mxu0 0.0
    %1721 = vmatpush2.msra.mxu0 0.0
    %1722 = vmatprep.subr.mxu0 0.0
    %1723 = vmatpush2.msra.mxu0 0.0
    %1724 = vmatprep.subr.mxu0 0.0
    %1725 = vmatpush2.msra.mxu0 0.0
    %1726 = vmatprep.subr.mxu0 0.0
    %1727 = vmatpush2.msra.mxu0 0.0
    %1728 = vmatprep.mubr.f32.mxu0 0.0
    %1729 = vmatmul.mubr.f32.gmra.mxu0 %v1659
    %v1730 = vpop.f32.mrf.mxu0
    %v1731 = vadd.f32 0.0, %v1730
    %v1732 = vpop.f32.mrf.mxu0
    %1733 = vmatprep.mubr.f32.mxu0 0.0
    %1734 = vmatmul.mubr.f32.gmra.mxu0 %v1662
    %v1735 = vpop.f32.mrf.mxu0
    %v1736 = vadd.f32 0.0, %v1735
    %v1737 = vpop.f32.mrf.mxu0
    %1738 = vdwg.mxu0
    %1739 = vrot.lane.b32.xlu0 %v323, 112
    %v1740 = vpop.permute.xlu0 %1739
    %1741 = vrot.lane.b32.xlu0 %v324, 112
    %v1742 = vpop.permute.xlu0 %1741
    %v1746 = vsel %vm1040, %v1213, 0
    %v1749 = vsel %vm1040, %v1214, 0
    %1751 = vmatprep.subr.mxu0 0.0
    %1752 = vmatpush1.msra.mxu0 0.0
    %1753 = vmatprep.subr.mxu0 0.0
    %1754 = vmatpush1.msra.mxu0 0.0
    %1755 = vmatprep.subr.mxu0 0.0
    %1756 = vmatpush1.msra.mxu0 0.0
    %1757 = vmatprep.subr.mxu0 0.0
    %1758 = vmatpush1.msra.mxu0 0.0
    %1759 = vmatprep.subr.mxu0 0.0
    %1760 = vmatpush1.msra.mxu0 0.0
    %1761 = vmatprep.subr.mxu0 0.0
    %1762 = vmatpush1.msra.mxu0 0.0
    %1763 = vmatprep.subr.mxu0 0.0
    %1764 = vmatpush1.msra.mxu0 0.0
    %1765 = vmatprep.subr.mxu0 0.0
    %1766 = vmatpush1.msra.mxu0 0.0
    %1767 = vmatprep.subr.mxu0 0.0
    %1768 = vmatpush1.msra.mxu0 0.0
    %1769 = vmatprep.subr.mxu0 0.0
    %1770 = vmatpush1.msra.mxu0 0.0
    %1771 = vmatprep.subr.mxu0 0.0
    %1772 = vmatpush1.msra.mxu0 0.0
    %1773 = vmatprep.subr.mxu0 0.0
    %1774 = vmatpush1.msra.mxu0 0.0
    %1775 = vmatprep.subr.mxu0 0.0
    %1776 = vmatpush1.msra.mxu0 0.0
    %1777 = vmatprep.subr.mxu0 0.0
    %1778 = vmatpush1.msra.mxu0 0.0
    %1779 = vmatprep.subr.mxu0 0.0
    %1780 = vmatpush1.msra.mxu0 %v1742
    %1781 = vmatprep.subr.mxu0 0.0
    %1782 = vmatpush1.msra.mxu0 %v1740
    %1783 = vmatprep.subr.mxu0 0.0
    %1784 = vmatpush2.msra.mxu0 0.0
    %1785 = vmatprep.subr.mxu0 0.0
    %1786 = vmatpush2.msra.mxu0 0.0
    %1787 = vmatprep.subr.mxu0 0.0
    %1788 = vmatpush2.msra.mxu0 0.0
    %1789 = vmatprep.subr.mxu0 0.0
    %1790 = vmatpush2.msra.mxu0 0.0
    %1791 = vmatprep.subr.mxu0 0.0
    %1792 = vmatpush2.msra.mxu0 0.0
    %1793 = vmatprep.subr.mxu0 0.0
    %1794 = vmatpush2.msra.mxu0 0.0
    %1795 = vmatprep.subr.mxu0 0.0
    %1796 = vmatpush2.msra.mxu0 0.0
    %1797 = vmatprep.subr.mxu0 0.0
    %1798 = vmatpush2.msra.mxu0 0.0
    %1799 = vmatprep.subr.mxu0 0.0
    %1800 = vmatpush2.msra.mxu0 0.0
    %1801 = vmatprep.subr.mxu0 0.0
    %1802 = vmatpush2.msra.mxu0 0.0
    %1803 = vmatprep.subr.mxu0 0.0
    %1804 = vmatpush2.msra.mxu0 0.0
    %1805 = vmatprep.subr.mxu0 0.0
    %1806 = vmatpush2.msra.mxu0 0.0
    %1807 = vmatprep.subr.mxu0 0.0
    %1808 = vmatpush2.msra.mxu0 0.0
    %1809 = vmatprep.subr.mxu0 0.0
    %1810 = vmatpush2.msra.mxu0 0.0
    %1811 = vmatprep.subr.mxu0 0.0
    %1812 = vmatpush2.msra.mxu0 0.0
    %1813 = vmatprep.subr.mxu0 0.0
    %1814 = vmatpush2.msra.mxu0 0.0
    %1815 = vmatprep.mubr.f32.mxu0 0.0
    %1816 = vmatmul.mubr.f32.gmra.mxu0 %v1746
    %v1817 = vpop.f32.mrf.mxu0
    %v1818 = vadd.f32 0.0, %v1817
    %v1819 = vpop.f32.mrf.mxu0
    %1820 = vmatprep.mubr.f32.mxu0 0.0
    %1821 = vmatmul.mubr.f32.gmra.mxu0 %v1749
    %v1822 = vpop.f32.mrf.mxu0
    %v1823 = vadd.f32 0.0, %v1822
    %v1824 = vpop.f32.mrf.mxu0
    %1825 = vdwg.mxu0
    %1826 = vrot.lane.b32.xlu0 %v325, 112
    %v1827 = vpop.permute.xlu0 %1826
    %1828 = vrot.lane.b32.xlu0 %v326, 112
    %v1829 = vpop.permute.xlu0 %1828
    %v1833 = vsel %vm1040, %v1215, 0
    %v1836 = vsel %vm1040, %v1216, 0
    %1838 = vmatprep.subr.mxu0 0.0
    %1839 = vmatpush1.msra.mxu0 0.0
    %1840 = vmatprep.subr.mxu0 0.0
    %1841 = vmatpush1.msra.mxu0 0.0
    %1842 = vmatprep.subr.mxu0 0.0
    %1843 = vmatpush1.msra.mxu0 0.0
    %1844 = vmatprep.subr.mxu0 0.0
    %1845 = vmatpush1.msra.mxu0 0.0
    %1846 = vmatprep.subr.mxu0 0.0
    %1847 = vmatpush1.msra.mxu0 0.0
    %1848 = vmatprep.subr.mxu0 0.0
    %1849 = vmatpush1.msra.mxu0 0.0
    %1850 = vmatprep.subr.mxu0 0.0
    %1851 = vmatpush1.msra.mxu0 0.0
    %1852 = vmatprep.subr.mxu0 0.0
    %1853 = vmatpush1.msra.mxu0 0.0
    %1854 = vmatprep.subr.mxu0 0.0
    %1855 = vmatpush1.msra.mxu0 0.0
    %1856 = vmatprep.subr.mxu0 0.0
    %1857 = vmatpush1.msra.mxu0 0.0
    %1858 = vmatprep.subr.mxu0 0.0
    %1859 = vmatpush1.msra.mxu0 0.0
    %1860 = vmatprep.subr.mxu0 0.0
    %1861 = vmatpush1.msra.mxu0 0.0
    %1862 = vmatprep.subr.mxu0 0.0
    %1863 = vmatpush1.msra.mxu0 0.0
    %1864 = vmatprep.subr.mxu0 0.0
    %1865 = vmatpush1.msra.mxu0 0.0
    %1866 = vmatprep.subr.mxu0 0.0
    %1867 = vmatpush1.msra.mxu0 %v1829
    %1868 = vmatprep.subr.mxu0 0.0
    %1869 = vmatpush1.msra.mxu0 %v1827
    %1870 = vmatprep.subr.mxu0 0.0
    %1871 = vmatpush2.msra.mxu0 0.0
    %1872 = vmatprep.subr.mxu0 0.0
    %1873 = vmatpush2.msra.mxu0 0.0
    %1874 = vmatprep.subr.mxu0 0.0
    %1875 = vmatpush2.msra.mxu0 0.0
    %1876 = vmatprep.subr.mxu0 0.0
    %1877 = vmatpush2.msra.mxu0 0.0
    %1878 = vmatprep.subr.mxu0 0.0
    %1879 = vmatpush2.msra.mxu0 0.0
    %1880 = vmatprep.subr.mxu0 0.0
    %1881 = vmatpush2.msra.mxu0 0.0
    %1882 = vmatprep.subr.mxu0 0.0
    %1883 = vmatpush2.msra.mxu0 0.0
    %1884 = vmatprep.subr.mxu0 0.0
    %1885 = vmatpush2.msra.mxu0 0.0
    %1886 = vmatprep.subr.mxu0 0.0
    %1887 = vmatpush2.msra.mxu0 0.0
    %1888 = vmatprep.subr.mxu0 0.0
    %1889 = vmatpush2.msra.mxu0 0.0
    %1890 = vmatprep.subr.mxu0 0.0
    %1891 = vmatpush2.msra.mxu0 0.0
    %1892 = vmatprep.subr.mxu0 0.0
    %1893 = vmatpush2.msra.mxu0 0.0
    %1894 = vmatprep.subr.mxu0 0.0
    %1895 = vmatpush2.msra.mxu0 0.0
    %1896 = vmatprep.subr.mxu0 0.0
    %1897 = vmatpush2.msra.mxu0 0.0
    %1898 = vmatprep.subr.mxu0 0.0
    %1899 = vmatpush2.msra.mxu0 0.0
    %1900 = vmatprep.subr.mxu0 0.0
    %1901 = vmatpush2.msra.mxu0 0.0
    %1902 = vmatprep.mubr.f32.mxu0 0.0
    %1903 = vmatmul.mubr.f32.gmra.mxu0 %v1833
    %v1904 = vpop.f32.mrf.mxu0
    %v1905 = vadd.f32 0.0, %v1904
    %v1906 = vpop.f32.mrf.mxu0
    %1907 = vmatprep.mubr.f32.mxu0 0.0
    %1908 = vmatmul.mubr.f32.gmra.mxu0 %v1836
    %v1909 = vpop.f32.mrf.mxu0
    %v1910 = vadd.f32 0.0, %v1909
    %v1911 = vpop.f32.mrf.mxu0
    %1912 = vdwg.mxu0
    %1913 = vst.msk [vmem:[#allocation3] sm:$0xff] %vm333, %v1296
    %1914 = vst.msk [vmem:[#allocation3 + $0x8] sm:$0xff] %vm333, %v1301
    %1917 = vrot.lane.b32.xlu0 %v1383, 8
    %v1918 = vpop.permute.xlu0 %1917
    %1919 = vrot.lane.b32.xlu0 %v1388, 8
    %v1920 = vpop.permute.xlu0 %1919
    %vm1923 = vcmask 130112
    %1924 = vst.msk [vmem:[#allocation3] sm:$0xff] %vm1923, %v1918
    %1925 = vst.msk [vmem:[#allocation3 + $0x8] sm:$0xff] %vm1923, %v1920
    %1928 = vrot.lane.b32.xlu0 %v1470, 16
    %v1929 = vpop.permute.xlu0 %1928
    %1930 = vrot.lane.b32.xlu0 %v1475, 16
    %v1931 = vpop.permute.xlu0 %1930
    %vm1934 = vcmask 195712
    %1935 = vst.msk [vmem:[#allocation3] sm:$0xff] %vm1934, %v1929
    %1936 = vst.msk [vmem:[#allocation3 + $0x8] sm:$0xff] %vm1934, %v1931
    %1939 = vrot.lane.b32.xlu0 %v1557, 24
    %v1940 = vpop.permute.xlu0 %1939
    %1941 = vrot.lane.b32.xlu0 %v1562, 24
    %v1942 = vpop.permute.xlu0 %1941
    %vm1945 = vcmask 261312
    %1946 = vst.msk [vmem:[#allocation3] sm:$0xff] %vm1945, %v1940
    %1947 = vst.msk [vmem:[#allocation3 + $0x8] sm:$0xff] %vm1945, %v1942
    %1948 = vst.msk [vmem:[#allocation3 + $0x10] sm:$0xff] %vm333, %v1644
    %1949 = vst.msk [vmem:[#allocation3 + $0x18] sm:$0xff] %vm333, %v1649
    %1952 = vrot.lane.b32.xlu0 %v1731, 8
    %v1953 = vpop.permute.xlu0 %1952
    %1954 = vrot.lane.b32.xlu0 %v1736, 8
    %v1955 = vpop.permute.xlu0 %1954
    %1958 = vst.msk [vmem:[#allocation3 + $0x10] sm:$0xff] %vm1923, %v1953
    %1959 = vst.msk [vmem:[#allocation3 + $0x18] sm:$0xff] %vm1923, %v1955
    %1962 = vrot.lane.b32.xlu0 %v1818, 16
    %v1963 = vpop.permute.xlu0 %1962
    %1964 = vrot.lane.b32.xlu0 %v1823, 16
    %v1965 = vpop.permute.xlu0 %1964
    %1968 = vst.msk [vmem:[#allocation3 + $0x10] sm:$0xff] %vm1934, %v1963
    %1969 = vst.msk [vmem:[#allocation3 + $0x18] sm:$0xff] %vm1934, %v1965
    %1972 = vrot.lane.b32.xlu0 %v1905, 24
    %v1973 = vpop.permute.xlu0 %1972
    %1974 = vrot.lane.b32.xlu0 %v1910, 24
    %v1975 = vpop.permute.xlu0 %1974
    %1978 = vst.msk [vmem:[#allocation3 + $0x10] sm:$0xff] %vm1945, %v1973
    %1979 = vst.msk [vmem:[#allocation3 + $0x18] sm:$0xff] %vm1945, %v1975
    %v1980 = vld [vmem:[#allocation3] sm:$0xff]
    %v1981 = vld [vmem:[#allocation3 + $0x8] sm:$0xff]
    %v1982 = vld [vmem:[#allocation3 + $0x10] sm:$0xff]
    %v1983 = vld [vmem:[#allocation3 + $0x18] sm:$0xff]
    %v1984 = vld [vmem:[%s4] sm:$0xff]
    %v1985 = vld [vmem:[%s4 + $0x8] sm:$0xff]
    %v1986 = vld [vmem:[%s4 + $0x10] sm:$0xff]
    %v1987 = vld [vmem:[%s4 + $0x18] sm:$0xff]
    %v1988 = vld [vmem:[%s5] sm:$0x1]
    %v1990 = vlaneseq
    %v1991 = vshrl.u32 %v1990, 7
    %v1992 = vsub.s32 0, %v1991
    %v1993 = vrot.slane %v1988, %v1992
    %v1996 = vsel %vm72, %v1980, 0
    %v1999 = vsel %vm72, %v1981, 0
    %v2002 = vsel %vm72, %v1982, 0
    %v2005 = vsel %vm72, %v1983, 0
    %2007 = vmatprep.subr.mxu0 0.0
    %2008 = vmatpush1.msra.mxu0 0.0
    %2009 = vmatprep.subr.mxu0 0.0
    %2010 = vmatpush1.msra.mxu0 0.0
    %2011 = vmatprep.subr.mxu0 0.0
    %2012 = vmatpush1.msra.mxu0 0.0
    %2013 = vmatprep.subr.mxu0 0.0
    %2014 = vmatpush1.msra.mxu0 0.0
    %2015 = vmatprep.subr.mxu0 0.0
    %2016 = vmatpush1.msra.mxu0 0.0
    %2017 = vmatprep.subr.mxu0 0.0
    %2018 = vmatpush1.msra.mxu0 0.0
    %2019 = vmatprep.subr.mxu0 0.0
    %2020 = vmatpush1.msra.mxu0 0.0
    %2021 = vmatprep.subr.mxu0 0.0
    %2022 = vmatpush1.msra.mxu0 0.0
    %2023 = vmatprep.subr.mxu0 0.0
    %2024 = vmatpush1.msra.mxu0 0.0
    %2025 = vmatprep.subr.mxu0 0.0
    %2026 = vmatpush1.msra.mxu0 0.0
    %2027 = vmatprep.subr.mxu0 0.0
    %2028 = vmatpush1.msra.mxu0 0.0
    %2029 = vmatprep.subr.mxu0 0.0
    %2030 = vmatpush1.msra.mxu0 0.0
    %2031 = vmatprep.subr.mxu0 0.0
    %2032 = vmatpush1.msra.mxu0 %v1987
    %2033 = vmatprep.subr.mxu0 0.0
    %2034 = vmatpush1.msra.mxu0 %v1986
    %2035 = vmatprep.subr.mxu0 0.0
    %2036 = vmatpush1.msra.mxu0 %v1985
    %2037 = vmatprep.subr.mxu0 0.0
    %2038 = vmatpush1.msra.mxu0 %v1984
    %2039 = vmatprep.subr.mxu0 0.0
    %2040 = vmatpush2.msra.mxu0 0.0
    %2041 = vmatprep.subr.mxu0 0.0
    %2042 = vmatpush2.msra.mxu0 0.0
    %2043 = vmatprep.subr.mxu0 0.0
    %2044 = vmatpush2.msra.mxu0 0.0
    %2045 = vmatprep.subr.mxu0 0.0
    %2046 = vmatpush2.msra.mxu0 0.0
    %2047 = vmatprep.subr.mxu0 0.0
    %2048 = vmatpush2.msra.mxu0 0.0
    %2049 = vmatprep.subr.mxu0 0.0
    %2050 = vmatpush2.msra.mxu0 0.0
    %2051 = vmatprep.subr.mxu0 0.0
    %2052 = vmatpush2.msra.mxu0 0.0
    %2053 = vmatprep.subr.mxu0 0.0
    %2054 = vmatpush2.msra.mxu0 0.0
    %2055 = vmatprep.subr.mxu0 0.0
    %2056 = vmatpush2.msra.mxu0 0.0
    %2057 = vmatprep.subr.mxu0 0.0
    %2058 = vmatpush2.msra.mxu0 0.0
    %2059 = vmatprep.subr.mxu0 0.0
    %2060 = vmatpush2.msra.mxu0 0.0
    %2061 = vmatprep.subr.mxu0 0.0
    %2062 = vmatpush2.msra.mxu0 0.0
    %2063 = vmatprep.subr.mxu0 0.0
    %2064 = vmatpush2.msra.mxu0 0.0
    %2065 = vmatprep.subr.mxu0 0.0
    %2066 = vmatpush2.msra.mxu0 0.0
    %2067 = vmatprep.subr.mxu0 0.0
    %2068 = vmatpush2.msra.mxu0 0.0
    %2069 = vmatprep.subr.mxu0 0.0
    %2070 = vmatpush2.msra.mxu0 0.0
    %2071 = vmatprep.mubr.f32.mxu0 0.0
    %2072 = vmatmul.mubr.f32.gmra.mxu0 %v1996
    %v2073 = vpop.f32.mrf.mxu0
    %v2074 = vadd.f32 %v1993, %v2073
    %v2075 = vpop.f32.mrf.mxu0
    %2076 = vmatprep.mubr.f32.mxu0 0.0
    %2077 = vmatmul.mubr.f32.gmra.mxu0 %v1999
    %v2078 = vpop.f32.mrf.mxu0
    %v2079 = vadd.f32 %v1993, %v2078
    %v2080 = vpop.f32.mrf.mxu0
    %2081 = vmatprep.mubr.f32.mxu0 0.0
    %2082 = vmatmul.mubr.f32.gmra.mxu0 %v2002
    %v2083 = vpop.f32.mrf.mxu0
    %v2084 = vadd.f32 %v1993, %v2083
    %v2085 = vpop.f32.mrf.mxu0
    %2086 = vmatprep.mubr.f32.mxu0 0.0
    %2087 = vmatmul.mubr.f32.gmra.mxu0 %v2005
    %v2088 = vpop.f32.mrf.mxu0
    %v2089 = vadd.f32 %v1993, %v2088
    %v2090 = vpop.f32.mrf.mxu0
    %2091 = vdwg.mxu0
    %v2092 = vadd.f32 %v66, %v2074
    %v2093 = vadd.f32 %v67, %v2079
    %v2094 = vadd.f32 %v68, %v2084
    %v2095 = vadd.f32 %v69, %v2089
    %v2096 = vld [vmem:[%s6] sm:$0x1]
    %v2097 = vld [vmem:[%s7] sm:$0x1]
    %v2098 = vsel %vm72, %v2092, 0.0
    %2099 = vadd.xlane.f32.xlu0 %v2098
    %v2100 = vpop.xlane.xlu0 %2099
    %v2101 = vsel %vm72, %v2094, 0.0
    %2102 = vadd.xlane.f32.xlu0 %v2101
    %v2103 = vpop.xlane.xlu0 %2102
    %v2104 = vmul.f32 %v2100, %v85
    %v2105 = vmul.f32 %v2103, %v85
    %v2106 = vsub.f32 %v2092, %v2104
    %v2107 = vsub.f32 %v2094, %v2105
    %v2108 = vmul.f32 %v2106, %v2106
    %v2109 = vmul.f32 %v2107, %v2107
    %v2110 = vsel %vm72, %v2108, 0.0
    %2111 = vadd.xlane.f32.xlu0 %v2110
    %v2112 = vpop.xlane.xlu0 %2111
    %v2113 = vsel %vm72, %v2109, 0.0
    %2114 = vadd.xlane.f32.xlu0 %v2113
    %v2115 = vpop.xlane.xlu0 %2114
    %v2116 = vmul.f32 %v2112, %v85
    %v2117 = vmul.f32 %v2115, %v85
    %v2118 = vadd.f32 %v2116, 1e-05
    %v2119 = vadd.f32 %v2117, 1e-05
    %v2120 = vrsqrt.pop %v2118
    %v2121 = vrsqrt.pop %v2119
    %v2122 = vmul.f32 %v2106, %v2120
    %v2123 = vmul.f32 %v2107, %v2121
    %v2125 = vlaneseq
    %v2126 = vshrl.u32 %v2125, 7
    %v2127 = vsub.s32 0, %v2126
    %v2128 = vrot.slane %v2096, %v2127
    %v2130 = vmul.f32 %v2122, %v2128
    %v2131 = vmul.f32 %v2123, %v2128
    %v2133 = vlaneseq
    %v2134 = vshrl.u32 %v2133, 7
    %v2135 = vsub.s32 0, %v2134
    %v2136 = vrot.slane %v2097, %v2135
    %v2138 = vadd.f32 %v2130, %v2136
    %v2139 = vadd.f32 %v2131, %v2136
    %v2140 = vld [vmem:[%s8] sm:$0xff]
    %v2141 = vld [vmem:[%s8 + $0x8] sm:$0xff]
    %v2142 = vld [vmem:[%s8 + $0x10] sm:$0xff]
    %v2143 = vld [vmem:[%s8 + $0x18] sm:$0xff]
    %v2144 = vld [vmem:[%s9] sm:$0x1]
    %v2146 = vlaneseq
    %v2147 = vshrl.u32 %v2146, 7
    %v2148 = vsub.s32 0, %v2147
    %v2149 = vrot.slane %v2144, %v2148
    %v2152 = vsel %vm72, %v2138, 0
    %v2155 = vsel %vm72, %v2139, 0
    %2157 = vmatprep.subr.mxu0 0.0
    %2158 = vmatpush1.msra.mxu0 0.0
    %2159 = vmatprep.subr.mxu0 0.0
    %2160 = vmatpush1.msra.mxu0 0.0
    %2161 = vmatprep.subr.mxu0 0.0
    %2162 = vmatpush1.msra.mxu0 0.0
    %2163 = vmatprep.subr.mxu0 0.0
    %2164 = vmatpush1.msra.mxu0 0.0
    %2165 = vmatprep.subr.mxu0 0.0
    %2166 = vmatpush1.msra.mxu0 0.0
    %2167 = vmatprep.subr.mxu0 0.0
    %2168 = vmatpush1.msra.mxu0 0.0
    %2169 = vmatprep.subr.mxu0 0.0
    %2170 = vmatpush1.msra.mxu0 0.0
    %2171 = vmatprep.subr.mxu0 0.0
    %2172 = vmatpush1.msra.mxu0 0.0
    %2173 = vmatprep.subr.mxu0 0.0
    %2174 = vmatpush1.msra.mxu0 0.0
    %2175 = vmatprep.subr.mxu0 0.0
    %2176 = vmatpush1.msra.mxu0 0.0
    %2177 = vmatprep.subr.mxu0 0.0
    %2178 = vmatpush1.msra.mxu0 0.0
    %2179 = vmatprep.subr.mxu0 0.0
    %2180 = vmatpush1.msra.mxu0 0.0
    %2181 = vmatprep.subr.mxu0 0.0
    %2182 = vmatpush1.msra.mxu0 %v2143
    %2183 = vmatprep.subr.mxu0 0.0
    %2184 = vmatpush1.msra.mxu0 %v2142
    %2185 = vmatprep.subr.mxu0 0.0
    %2186 = vmatpush1.msra.mxu0 %v2141
    %2187 = vmatprep.subr.mxu0 0.0
    %2188 = vmatpush1.msra.mxu0 %v2140
    %2189 = vmatprep.subr.mxu0 0.0
    %2190 = vmatpush2.msra.mxu0 0.0
    %2191 = vmatprep.subr.mxu0 0.0
    %2192 = vmatpush2.msra.mxu0 0.0
    %2193 = vmatprep.subr.mxu0 0.0
    %2194 = vmatpush2.msra.mxu0 0.0
    %2195 = vmatprep.subr.mxu0 0.0
    %2196 = vmatpush2.msra.mxu0 0.0
    %2197 = vmatprep.subr.mxu0 0.0
    %2198 = vmatpush2.msra.mxu0 0.0
    %2199 = vmatprep.subr.mxu0 0.0
    %2200 = vmatpush2.msra.mxu0 0.0
    %2201 = vmatprep.subr.mxu0 0.0
    %2202 = vmatpush2.msra.mxu0 0.0
    %2203 = vmatprep.subr.mxu0 0.0
    %2204 = vmatpush2.msra.mxu0 0.0
    %2205 = vmatprep.subr.mxu0 0.0
    %2206 = vmatpush2.msra.mxu0 0.0
    %2207 = vmatprep.subr.mxu0 0.0
    %2208 = vmatpush2.msra.mxu0 0.0
    %2209 = vmatprep.subr.mxu0 0.0
    %2210 = vmatpush2.msra.mxu0 0.0
    %2211 = vmatprep.subr.mxu0 0.0
    %2212 = vmatpush2.msra.mxu0 0.0
    %2213 = vmatprep.subr.mxu0 0.0
    %2214 = vmatpush2.msra.mxu0 0.0
    %2215 = vmatprep.subr.mxu0 0.0
    %2216 = vmatpush2.msra.mxu0 0.0
    %2217 = vmatprep.subr.mxu0 0.0
    %2218 = vmatpush2.msra.mxu0 0.0
    %2219 = vmatprep.subr.mxu0 0.0
    %2220 = vmatpush2.msra.mxu0 0.0
    %2221 = vmatprep.mubr.f32.mxu0 0.0
    %2222 = vmatmul.mubr.f32.gmra.mxu0 %v2152
    %v2223 = vpop.f32.mrf.mxu0
    %v2224 = vadd.f32 %v2149, %v2223
    %v2225 = vpop.f32.mrf.mxu0
    %2226 = vmatprep.mubr.f32.mxu0 0.0
    %2227 = vmatmul.mubr.f32.gmra.mxu0 %v2155
    %v2228 = vpop.f32.mrf.mxu0
    %v2229 = vadd.f32 %v2149, %v2228
    %v2230 = vpop.f32.mrf.mxu0
    %2231 = vdwg.mxu0
    %v2232 = vmul.f32 %v2224, 0.5
    %v2233 = vmul.f32 %v2229, 0.5
    %v2234 = vmul.f32 %v2224, 0.70710677
    %v2235 = vmul.f32 %v2229, 0.70710677
    %v2236 = vand.u32 2147483647, %v2234
    %v2237 = vand.u32 2147483647, %v2235
    %v2238 = vmul.f32 %v2236, 0.3275911
    %v2239 = vmul.f32 %v2237, 0.3275911
    %v2240 = vadd.f32 %v2238, 1.0
    %v2241 = vadd.f32 %v2239, 1.0
    %v2242 = vrcp.pop %v2240
    %v2243 = vrcp.pop %v2241
    %v2244 = vmul.f32 %v2242, 1.0614054
    %v2245 = vmul.f32 %v2243, 1.0614054
    %v2246 = vadd.f32 %v2244, -1.4531521
    %v2247 = vadd.f32 %v2245, -1.4531521
    %v2248 = vmul.f32 %v2246, %v2242
    %v2249 = vmul.f32 %v2247, %v2243
    %v2250 = vadd.f32 %v2248, 1.4214138
    %v2251 = vadd.f32 %v2249, 1.4214138
    %v2252 = vmul.f32 %v2250, %v2242
    %v2253 = vmul.f32 %v2251, %v2243
    %v2254 = vadd.f32 %v2252, -0.28449672
    %v2255 = vadd.f32 %v2253, -0.28449672
    %v2256 = vmul.f32 %v2254, %v2242
    %v2257 = vmul.f32 %v2255, %v2243
    %v2258 = vadd.f32 %v2256, 0.2548296
    %v2259 = vadd.f32 %v2257, 0.2548296
    %v2260 = vmul.f32 %v2258, %v2242
    %v2261 = vmul.f32 %v2259, %v2243
    %v2262 = vsub.f32 0.0, %v2236
    %v2263 = vsub.f32 0.0, %v2237
    %v2264 = vmul.f32 %v2262, %v2236
    %v2265 = vmul.f32 %v2263, %v2237
    %v2266 = vmul.f32 %v2264, 1.442695
    %v2267 = vpow.pop %v2266
    %v2268 = vmul.f32 %v2265, 1.442695
    %v2269 = vpow.pop %v2268
    %v2270 = vmul.f32 %v2260, %v2267
    %v2271 = vmul.f32 %v2261, %v2269
    %v2272 = vsub.f32 1.0, %v2270
    %v2273 = vsub.f32 1.0, %v2271
    %vm2274 = vcmp.ge.f32.partialorder %v2234, 0.0
    %vm2275 = vcmp.ge.f32.partialorder %v2235, 0.0
    %v2276 = vsub.f32 0.0, %v2272
    %v2277 = vsub.f32 0.0, %v2273
    %v2278 = vsel %vm2274, %v2272, %v2276
    %v2279 = vsel %vm2275, %v2273, %v2277
    %v2280 = vadd.f32 %v2278, 1.0
    %v2281 = vadd.f32 %v2279, 1.0
    %v2282 = vmul.f32 %v2232, %v2280
    %v2283 = vmul.f32 %v2233, %v2281
    %v2284 = vld [vmem:[%s10] sm:$0xff]
    %v2285 = vld [vmem:[%s10 + $0x8] sm:$0xff]
    %v2286 = vld [vmem:[%s10 + $0x10] sm:$0xff]
    %v2287 = vld [vmem:[%s10 + $0x18] sm:$0xff]
    %v2288 = vld [vmem:[%s10 + $0x20] sm:$0xff]
    %v2289 = vld [vmem:[%s10 + $0x28] sm:$0xff]
    %v2290 = vld [vmem:[%s10 + $0x30] sm:$0xff]
    %v2291 = vld [vmem:[%s10 + $0x38] sm:$0xff]
    %v2292 = vld [vmem:[%s10 + $0x40] sm:$0xff]
    %v2293 = vld [vmem:[%s10 + $0x48] sm:$0xff]
    %v2294 = vld [vmem:[%s10 + $0x50] sm:$0xff]
    %v2295 = vld [vmem:[%s10 + $0x58] sm:$0xff]
    %v2296 = vld [vmem:[%s10 + $0x60] sm:$0xff]
    %v2297 = vld [vmem:[%s10 + $0x68] sm:$0xff]
    %v2298 = vld [vmem:[%s10 + $0x70] sm:$0xff]
    %v2299 = vld [vmem:[%s10 + $0x78] sm:$0xff]
    %v2300 = vld [vmem:[%s11] sm:$0x1]
    %v2302 = vlaneseq
    %v2303 = vshrl.u32 %v2302, 7
    %v2304 = vsub.s32 0, %v2303
    %v2305 = vrot.slane %v2300, %v2304
    %2307 = vmatprep.subr.mxu0 0.0
    %2308 = vmatpush1.msra.mxu0 %v2299
    %2309 = vmatprep.subr.mxu0 0.0
    %2310 = vmatpush1.msra.mxu0 %v2298
    %2311 = vmatprep.subr.mxu0 0.0
    %2312 = vmatpush1.msra.mxu0 %v2297
    %2313 = vmatprep.subr.mxu0 0.0
    %2314 = vmatpush1.msra.mxu0 %v2296
    %2315 = vmatprep.subr.mxu0 0.0
    %2316 = vmatpush1.msra.mxu0 %v2295
    %2317 = vmatprep.subr.mxu0 0.0
    %2318 = vmatpush1.msra.mxu0 %v2294
    %2319 = vmatprep.subr.mxu0 0.0
    %2320 = vmatpush1.msra.mxu0 %v2293
    %2321 = vmatprep.subr.mxu0 0.0
    %2322 = vmatpush1.msra.mxu0 %v2292
    %2323 = vmatprep.subr.mxu0 0.0
    %2324 = vmatpush1.msra.mxu0 %v2291
    %2325 = vmatprep.subr.mxu0 0.0
    %2326 = vmatpush1.msra.mxu0 %v2290
    %2327 = vmatprep.subr.mxu0 0.0
    %2328 = vmatpush1.msra.mxu0 %v2289
    %2329 = vmatprep.subr.mxu0 0.0
    %2330 = vmatpush1.msra.mxu0 %v2288
    %2331 = vmatprep.subr.mxu0 0.0
    %2332 = vmatpush1.msra.mxu0 %v2287
    %2333 = vmatprep.subr.mxu0 0.0
    %2334 = vmatpush1.msra.mxu0 %v2286
    %2335 = vmatprep.subr.mxu0 0.0
    %2336 = vmatpush1.msra.mxu0 %v2285
    %2337 = vmatprep.subr.mxu0 0.0
    %2338 = vmatpush1.msra.mxu0 %v2284
    %2339 = vmatprep.subr.mxu0 0.0
    %2340 = vmatpush2.msra.mxu0 0.0
    %2341 = vmatprep.subr.mxu0 0.0
    %2342 = vmatpush2.msra.mxu0 0.0
    %2343 = vmatprep.subr.mxu0 0.0
    %2344 = vmatpush2.msra.mxu0 0.0
    %2345 = vmatprep.subr.mxu0 0.0
    %2346 = vmatpush2.msra.mxu0 0.0
    %2347 = vmatprep.subr.mxu0 0.0
    %2348 = vmatpush2.msra.mxu0 0.0
    %2349 = vmatprep.subr.mxu0 0.0
    %2350 = vmatpush2.msra.mxu0 0.0
    %2351 = vmatprep.subr.mxu0 0.0
    %2352 = vmatpush2.msra.mxu0 0.0
    %2353 = vmatprep.subr.mxu0 0.0
    %2354 = vmatpush2.msra.mxu0 0.0
    %2355 = vmatprep.subr.mxu0 0.0
    %2356 = vmatpush2.msra.mxu0 0.0
    %2357 = vmatprep.subr.mxu0 0.0
    %2358 = vmatpush2.msra.mxu0 0.0
    %2359 = vmatprep.subr.mxu0 0.0
    %2360 = vmatpush2.msra.mxu0 0.0
    %2361 = vmatprep.subr.mxu0 0.0
    %2362 = vmatpush2.msra.mxu0 0.0
    %2363 = vmatprep.subr.mxu0 0.0
    %2364 = vmatpush2.msra.mxu0 0.0
    %2365 = vmatprep.subr.mxu0 0.0
    %2366 = vmatpush2.msra.mxu0 0.0
    %2367 = vmatprep.subr.mxu0 0.0
    %2368 = vmatpush2.msra.mxu0 0.0
    %2369 = vmatprep.subr.mxu0 0.0
    %2370 = vmatpush2.msra.mxu0 0.0
    %2371 = vmatprep.mubr.f32.mxu0 0.0
    %2372 = vmatmul.mubr.f32.gmra.mxu0 %v2282
    %v2373 = vpop.f32.mrf.mxu0
    %v2374 = vadd.f32 %v2305, %v2373
    %v2375 = vpop.f32.mrf.mxu0
    %2376 = vmatprep.mubr.f32.mxu0 0.0
    %2377 = vmatmul.mubr.f32.gmra.mxu0 %v2283
    %v2378 = vpop.f32.mrf.mxu0
    %v2379 = vadd.f32 %v2305, %v2378
    %v2380 = vpop.f32.mrf.mxu0
    %2381 = vdwg.mxu0
    %v2382 = vadd.f32 %v2092, %v2374
    %v2383 = vadd.f32 %v2094, %v2379
    %v2384 = vld [vmem:[%s12] sm:$0x1]
    %v2385 = vld [vmem:[%s13] sm:$0x1]
    %v2386 = vsel %vm72, %v2093, 0.0
    %2387 = vadd.xlane.f32.xlu0 %v2386
    %v2388 = vpop.xlane.xlu0 %2387
    %v2389 = vsel %vm72, %v2095, 0.0
    %2390 = vadd.xlane.f32.xlu0 %v2389
    %v2391 = vpop.xlane.xlu0 %2390
    %v2392 = vmul.f32 %v2388, %v85
    %v2393 = vmul.f32 %v2391, %v85
    %v2394 = vsub.f32 %v2093, %v2392
    %v2395 = vsub.f32 %v2095, %v2393
    %v2396 = vmul.f32 %v2394, %v2394
    %v2397 = vmul.f32 %v2395, %v2395
    %v2398 = vsel %vm72, %v2396, 0.0
    %2399 = vadd.xlane.f32.xlu0 %v2398
    %v2400 = vpop.xlane.xlu0 %2399
    %v2401 = vsel %vm72, %v2397, 0.0
    %2402 = vadd.xlane.f32.xlu0 %v2401
    %v2403 = vpop.xlane.xlu0 %2402
    %v2404 = vmul.f32 %v2400, %v85
    %v2405 = vmul.f32 %v2403, %v85
    %v2406 = vadd.f32 %v2404, 1e-05
    %v2407 = vadd.f32 %v2405, 1e-05
    %v2408 = vrsqrt.pop %v2406
    %v2409 = vrsqrt.pop %v2407
    %v2410 = vmul.f32 %v2394, %v2408
    %v2411 = vmul.f32 %v2395, %v2409
    %v2413 = vlaneseq
    %v2414 = vshrl.u32 %v2413, 7
    %v2415 = vsub.s32 0, %v2414
    %v2416 = vrot.slane %v2384, %v2415
    %v2418 = vmul.f32 %v2410, %v2416
    %v2419 = vmul.f32 %v2411, %v2416
    %v2421 = vlaneseq
    %v2422 = vshrl.u32 %v2421, 7
    %v2423 = vsub.s32 0, %v2422
    %v2424 = vrot.slane %v2385, %v2423
    %v2426 = vadd.f32 %v2418, %v2424
    %v2427 = vadd.f32 %v2419, %v2424
    %v2428 = vld [vmem:[%s18] sm:$0xff]
    %v2429 = vld [vmem:[%s18 + $0x8] sm:$0xff]
    %v2431 = vsel %vm1040, %v2428, 0
    %v2434 = vsel %vm1040, %v2429, 0
    %2436 = vmatprep.subr.mxu0 0.0
    %2437 = vmatpush1.msra.mxu0 0.0
    %2438 = vmatprep.subr.mxu0 0.0
    %2439 = vmatpush1.msra.mxu0 0.0
    %2440 = vmatprep.subr.mxu0 0.0
    %2441 = vmatpush1.msra.mxu0 0.0
    %2442 = vmatprep.subr.mxu0 0.0
    %2443 = vmatpush1.msra.mxu0 0.0
    %2444 = vmatprep.subr.mxu0 0.0
    %2445 = vmatpush1.msra.mxu0 0.0
    %2446 = vmatprep.subr.mxu0 0.0
    %2447 = vmatpush1.msra.mxu0 0.0
    %2448 = vmatprep.subr.mxu0 0.0
    %2449 = vmatpush1.msra.mxu0 0.0
    %2450 = vmatprep.subr.mxu0 0.0
    %2451 = vmatpush1.msra.mxu0 0.0
    %2452 = vmatprep.subr.mxu0 0.0
    %2453 = vmatpush1.msra.mxu0 0.0
    %2454 = vmatprep.subr.mxu0 0.0
    %2455 = vmatpush1.msra.mxu0 0.0
    %2456 = vmatprep.subr.mxu0 0.0
    %2457 = vmatpush1.msra.mxu0 0.0
    %2458 = vmatprep.subr.mxu0 0.0
    %2459 = vmatpush1.msra.mxu0 0.0
    %2460 = vmatprep.subr.mxu0 0.0
    %2461 = vmatpush1.msra.mxu0 0.0
    %2462 = vmatprep.subr.mxu0 0.0
    %2463 = vmatpush1.msra.mxu0 0.0
    %2464 = vmatprep.subr.mxu0 0.0
    %2465 = vmatpush1.msra.mxu0 %v2427
    %2466 = vmatprep.subr.mxu0 0.0
    %2467 = vmatpush1.msra.mxu0 %v2426
    %2468 = vmatprep.subr.mxu0 0.0
    %2469 = vmatpush2.msra.mxu0 0.0
    %2470 = vmatprep.subr.mxu0 0.0
    %2471 = vmatpush2.msra.mxu0 0.0
    %2472 = vmatprep.subr.mxu0 0.0
    %2473 = vmatpush2.msra.mxu0 0.0
    %2474 = vmatprep.subr.mxu0 0.0
    %2475 = vmatpush2.msra.mxu0 0.0
    %2476 = vmatprep.subr.mxu0 0.0
    %2477 = vmatpush2.msra.mxu0 0.0
    %2478 = vmatprep.subr.mxu0 0.0
    %2479 = vmatpush2.msra.mxu0 0.0
    %2480 = vmatprep.subr.mxu0 0.0
    %2481 = vmatpush2.msra.mxu0 0.0
    %2482 = vmatprep.subr.mxu0 0.0
    %2483 = vmatpush2.msra.mxu0 0.0
    %2484 = vmatprep.subr.mxu0 0.0
    %2485 = vmatpush2.msra.mxu0 0.0
    %2486 = vmatprep.subr.mxu0 0.0
    %2487 = vmatpush2.msra.mxu0 0.0
    %2488 = vmatprep.subr.mxu0 0.0
    %2489 = vmatpush2.msra.mxu0 0.0
    %2490 = vmatprep.subr.mxu0 0.0
    %2491 = vmatpush2.msra.mxu0 0.0
    %2492 = vmatprep.subr.mxu0 0.0
    %2493 = vmatpush2.msra.mxu0 0.0
    %2494 = vmatprep.subr.mxu0 0.0
    %2495 = vmatpush2.msra.mxu0 0.0
    %2496 = vmatprep.subr.mxu0 0.0
    %2497 = vmatpush2.msra.mxu0 0.0
    %2498 = vmatprep.subr.mxu0 0.0
    %2499 = vmatpush2.msra.mxu0 0.0
    %2500 = vmatprep.mubr.f32.mxu0 0.0
    %2501 = vmatmul.mubr.f32.gmra.mxu0 %v2431
    %v2502 = vpop.f32.mrf.mxu0
    %v2503 = vadd.f32 0.0, %v2502
    %v2504 = vpop.f32.mrf.mxu0
    %2505 = vmatprep.mubr.f32.mxu0 0.0
    %2506 = vmatmul.mubr.f32.gmra.mxu0 %v2434
    %v2507 = vpop.f32.mrf.mxu0
    %v2508 = vadd.f32 0.0, %v2507
    %v2509 = vpop.f32.mrf.mxu0
    %2510 = vdwg.mxu0
    %v2511 = vld [vmem:[%s14] sm:$0xff]
    %v2512 = vld [vmem:[%s14 + $0x8] sm:$0xff]
    %v2513 = vld [vmem:[%s14 + $0x10] sm:$0xff]
    %v2514 = vld [vmem:[%s14 + $0x18] sm:$0xff]
    %v2515 = vld [vmem:[%s15] sm:$0x1]
    %v2517 = vlaneseq
    %v2518 = vshrl.u32 %v2517, 7
    %v2519 = vsub.s32 0, %v2518
    %v2520 = vrot.slane %v2515, %v2519
    %v2523 = vsel %vm72, %v2503, 0
    %v2526 = vsel %vm72, %v2508, 0
    %2528 = vmatprep.subr.mxu0 0.0
    %2529 = vmatpush1.msra.mxu0 0.0
    %2530 = vmatprep.subr.mxu0 0.0
    %2531 = vmatpush1.msra.mxu0 0.0
    %2532 = vmatprep.subr.mxu0 0.0
    %2533 = vmatpush1.msra.mxu0 0.0
    %2534 = vmatprep.subr.mxu0 0.0
    %2535 = vmatpush1.msra.mxu0 0.0
    %2536 = vmatprep.subr.mxu0 0.0
    %2537 = vmatpush1.msra.mxu0 0.0
    %2538 = vmatprep.subr.mxu0 0.0
    %2539 = vmatpush1.msra.mxu0 0.0
    %2540 = vmatprep.subr.mxu0 0.0
    %2541 = vmatpush1.msra.mxu0 0.0
    %2542 = vmatprep.subr.mxu0 0.0
    %2543 = vmatpush1.msra.mxu0 0.0
    %2544 = vmatprep.subr.mxu0 0.0
    %2545 = vmatpush1.msra.mxu0 0.0
    %2546 = vmatprep.subr.mxu0 0.0
    %2547 = vmatpush1.msra.mxu0 0.0
    %2548 = vmatprep.subr.mxu0 0.0
    %2549 = vmatpush1.msra.mxu0 0.0
    %2550 = vmatprep.subr.mxu0 0.0
    %2551 = vmatpush1.msra.mxu0 0.0
    %2552 = vmatprep.subr.mxu0 0.0
    %2553 = vmatpush1.msra.mxu0 %v2514
    %2554 = vmatprep.subr.mxu0 0.0
    %2555 = vmatpush1.msra.mxu0 %v2513
    %2556 = vmatprep.subr.mxu0 0.0
    %2557 = vmatpush1.msra.mxu0 %v2512
    %2558 = vmatprep.subr.mxu0 0.0
    %2559 = vmatpush1.msra.mxu0 %v2511
    %2560 = vmatprep.subr.mxu0 0.0
    %2561 = vmatpush2.msra.mxu0 0.0
    %2562 = vmatprep.subr.mxu0 0.0
    %2563 = vmatpush2.msra.mxu0 0.0
    %2564 = vmatprep.subr.mxu0 0.0
    %2565 = vmatpush2.msra.mxu0 0.0
    %2566 = vmatprep.subr.mxu0 0.0
    %2567 = vmatpush2.msra.mxu0 0.0
    %2568 = vmatprep.subr.mxu0 0.0
    %2569 = vmatpush2.msra.mxu0 0.0
    %2570 = vmatprep.subr.mxu0 0.0
    %2571 = vmatpush2.msra.mxu0 0.0
    %2572 = vmatprep.subr.mxu0 0.0
    %2573 = vmatpush2.msra.mxu0 0.0
    %2574 = vmatprep.subr.mxu0 0.0
    %2575 = vmatpush2.msra.mxu0 0.0
    %2576 = vmatprep.subr.mxu0 0.0
    %2577 = vmatpush2.msra.mxu0 0.0
    %2578 = vmatprep.subr.mxu0 0.0
    %2579 = vmatpush2.msra.mxu0 0.0
    %2580 = vmatprep.subr.mxu0 0.0
    %2581 = vmatpush2.msra.mxu0 0.0
    %2582 = vmatprep.subr.mxu0 0.0
    %2583 = vmatpush2.msra.mxu0 0.0
    %2584 = vmatprep.subr.mxu0 0.0
    %2585 = vmatpush2.msra.mxu0 0.0
    %2586 = vmatprep.subr.mxu0 0.0
    %2587 = vmatpush2.msra.mxu0 0.0
    %2588 = vmatprep.subr.mxu0 0.0
    %2589 = vmatpush2.msra.mxu0 0.0
    %2590 = vmatprep.subr.mxu0 0.0
    %2591 = vmatpush2.msra.mxu0 0.0
    %2592 = vmatprep.mubr.f32.mxu0 0.0
    %2593 = vmatmul.mubr.f32.gmra.mxu0 %v2523
    %v2594 = vpop.f32.mrf.mxu0
    %v2595 = vadd.f32 %v2520, %v2594
    %v2596 = vpop.f32.mrf.mxu0
    %2597 = vmatprep.mubr.f32.mxu0 0.0
    %2598 = vmatmul.mubr.f32.gmra.mxu0 %v2526
    %v2599 = vpop.f32.mrf.mxu0
    %v2600 = vadd.f32 %v2520, %v2599
    %v2601 = vpop.f32.mrf.mxu0
    %2602 = vdwg.mxu0
    %v2603 = vmul.f32 %v2595, 0.5
    %v2604 = vmul.f32 %v2600, 0.5
    %v2605 = vmul.f32 %v2595, 0.70710677
    %v2606 = vmul.f32 %v2600, 0.70710677
    %v2607 = vand.u32 2147483647, %v2605
    %v2608 = vand.u32 2147483647, %v2606
    %v2609 = vmul.f32 %v2607, 0.3275911
    %v2610 = vmul.f32 %v2608, 0.3275911
    %v2611 = vadd.f32 %v2609, 1.0
    %v2612 = vadd.f32 %v2610, 1.0
    %v2613 = vrcp.pop %v2611
    %v2614 = vrcp.pop %v2612
    %v2615 = vmul.f32 %v2613, 1.0614054
    %v2616 = vmul.f32 %v2614, 1.0614054
    %v2617 = vadd.f32 %v2615, -1.4531521
    %v2618 = vadd.f32 %v2616, -1.4531521
    %v2619 = vmul.f32 %v2617, %v2613
    %v2620 = vmul.f32 %v2618, %v2614
    %v2621 = vadd.f32 %v2619, 1.4214138
    %v2622 = vadd.f32 %v2620, 1.4214138
    %v2623 = vmul.f32 %v2621, %v2613
    %v2624 = vmul.f32 %v2622, %v2614
    %v2625 = vadd.f32 %v2623, -0.28449672
    %v2626 = vadd.f32 %v2624, -0.28449672
    %v2627 = vmul.f32 %v2625, %v2613
    %v2628 = vmul.f32 %v2626, %v2614
    %v2629 = vadd.f32 %v2627, 0.2548296
    %v2630 = vadd.f32 %v2628, 0.2548296
    %v2631 = vmul.f32 %v2629, %v2613
    %v2632 = vmul.f32 %v2630, %v2614
    %v2633 = vsub.f32 0.0, %v2607
    %v2634 = vsub.f32 0.0, %v2608
    %v2635 = vmul.f32 %v2633, %v2607
    %v2636 = vmul.f32 %v2634, %v2608
    %v2637 = vmul.f32 %v2635, 1.442695
    %v2638 = vpow.pop %v2637
    %v2639 = vmul.f32 %v2636, 1.442695
    %v2640 = vpow.pop %v2639
    %v2641 = vmul.f32 %v2631, %v2638
    %v2642 = vmul.f32 %v2632, %v2640
    %v2643 = vsub.f32 1.0, %v2641
    %v2644 = vsub.f32 1.0, %v2642
    %vm2645 = vcmp.ge.f32.partialorder %v2605, 0.0
    %vm2646 = vcmp.ge.f32.partialorder %v2606, 0.0
    %v2647 = vsub.f32 0.0, %v2643
    %v2648 = vsub.f32 0.0, %v2644
    %v2649 = vsel %vm2645, %v2643, %v2647
    %v2650 = vsel %vm2646, %v2644, %v2648
    %v2651 = vadd.f32 %v2649, 1.0
    %v2652 = vadd.f32 %v2650, 1.0
    %v2653 = vmul.f32 %v2603, %v2651
    %v2654 = vmul.f32 %v2604, %v2652
    %v2655 = vld [vmem:[%s16] sm:$0xff]
    %v2656 = vld [vmem:[%s16 + $0x8] sm:$0xff]
    %v2657 = vld [vmem:[%s16 + $0x10] sm:$0xff]
    %v2658 = vld [vmem:[%s16 + $0x18] sm:$0xff]
    %v2659 = vld [vmem:[%s16 + $0x20] sm:$0xff]
    %v2660 = vld [vmem:[%s16 + $0x28] sm:$0xff]
    %v2661 = vld [vmem:[%s16 + $0x30] sm:$0xff]
    %v2662 = vld [vmem:[%s16 + $0x38] sm:$0xff]
    %v2663 = vld [vmem:[%s16 + $0x40] sm:$0xff]
    %v2664 = vld [vmem:[%s16 + $0x48] sm:$0xff]
    %v2665 = vld [vmem:[%s16 + $0x50] sm:$0xff]
    %v2666 = vld [vmem:[%s16 + $0x58] sm:$0xff]
    %v2667 = vld [vmem:[%s16 + $0x60] sm:$0xff]
    %v2668 = vld [vmem:[%s16 + $0x68] sm:$0xff]
    %v2669 = vld [vmem:[%s16 + $0x70] sm:$0xff]
    %v2670 = vld [vmem:[%s16 + $0x78] sm:$0xff]
    %v2671 = vld [vmem:[%s17] sm:$0x1]
    %v2673 = vlaneseq
    %v2674 = vshrl.u32 %v2673, 7
    %v2675 = vsub.s32 0, %v2674
    %v2676 = vrot.slane %v2671, %v2675
    %2678 = vmatprep.subr.mxu0 0.0
    %2679 = vmatpush1.msra.mxu0 %v2670
    %2680 = vmatprep.subr.mxu0 0.0
    %2681 = vmatpush1.msra.mxu0 %v2669
    %2682 = vmatprep.subr.mxu0 0.0
    %2683 = vmatpush1.msra.mxu0 %v2668
    %2684 = vmatprep.subr.mxu0 0.0
    %2685 = vmatpush1.msra.mxu0 %v2667
    %2686 = vmatprep.subr.mxu0 0.0
    %2687 = vmatpush1.msra.mxu0 %v2666
    %2688 = vmatprep.subr.mxu0 0.0
    %2689 = vmatpush1.msra.mxu0 %v2665
    %2690 = vmatprep.subr.mxu0 0.0
    %2691 = vmatpush1.msra.mxu0 %v2664
    %2692 = vmatprep.subr.mxu0 0.0
    %2693 = vmatpush1.msra.mxu0 %v2663
    %2694 = vmatprep.subr.mxu0 0.0
    %2695 = vmatpush1.msra.mxu0 %v2662
    %2696 = vmatprep.subr.mxu0 0.0
    %2697 = vmatpush1.msra.mxu0 %v2661
    %2698 = vmatprep.subr.mxu0 0.0
    %2699 = vmatpush1.msra.mxu0 %v2660
    %2700 = vmatprep.subr.mxu0 0.0
    %2701 = vmatpush1.msra.mxu0 %v2659
    %2702 = vmatprep.subr.mxu0 0.0
    %2703 = vmatpush1.msra.mxu0 %v2658
    %2704 = vmatprep.subr.mxu0 0.0
    %2705 = vmatpush1.msra.mxu0 %v2657
    %2706 = vmatprep.subr.mxu0 0.0
    %2707 = vmatpush1.msra.mxu0 %v2656
    %2708 = vmatprep.subr.mxu0 0.0
    %2709 = vmatpush1.msra.mxu0 %v2655
    %2710 = vmatprep.subr.mxu0 0.0
    %2711 = vmatpush2.msra.mxu0 0.0
    %2712 = vmatprep.subr.mxu0 0.0
    %2713 = vmatpush2.msra.mxu0 0.0
    %2714 = vmatprep.subr.mxu0 0.0
    %2715 = vmatpush2.msra.mxu0 0.0
    %2716 = vmatprep.subr.mxu0 0.0
    %2717 = vmatpush2.msra.mxu0 0.0
    %2718 = vmatprep.subr.mxu0 0.0
    %2719 = vmatpush2.msra.mxu0 0.0
    %2720 = vmatprep.subr.mxu0 0.0
    %2721 = vmatpush2.msra.mxu0 0.0
    %2722 = vmatprep.subr.mxu0 0.0
    %2723 = vmatpush2.msra.mxu0 0.0
    %2724 = vmatprep.subr.mxu0 0.0
    %2725 = vmatpush2.msra.mxu0 0.0
    %2726 = vmatprep.subr.mxu0 0.0
    %2727 = vmatpush2.msra.mxu0 0.0
    %2728 = vmatprep.subr.mxu0 0.0
    %2729 = vmatpush2.msra.mxu0 0.0
    %2730 = vmatprep.subr.mxu0 0.0
    %2731 = vmatpush2.msra.mxu0 0.0
    %2732 = vmatprep.subr.mxu0 0.0
    %2733 = vmatpush2.msra.mxu0 0.0
    %2734 = vmatprep.subr.mxu0 0.0
    %2735 = vmatpush2.msra.mxu0 0.0
    %2736 = vmatprep.subr.mxu0 0.0
    %2737 = vmatpush2.msra.mxu0 0.0
    %2738 = vmatprep.subr.mxu0 0.0
    %2739 = vmatpush2.msra.mxu0 0.0
    %2740 = vmatprep.subr.mxu0 0.0
    %2741 = vmatpush2.msra.mxu0 0.0
    %2742 = vmatprep.mubr.f32.mxu0 0.0
    %2743 = vmatmul.mubr.f32.gmra.mxu0 %v2653
    %v2744 = vpop.f32.mrf.mxu0
    %v2745 = vadd.f32 %v2676, %v2744
    %v2746 = vpop.f32.mrf.mxu0
    %2747 = vmatprep.mubr.f32.mxu0 0.0
    %2748 = vmatmul.mubr.f32.gmra.mxu0 %v2654
    %v2749 = vpop.f32.mrf.mxu0
    %v2750 = vadd.f32 %v2676, %v2749
    %v2751 = vpop.f32.mrf.mxu0
    %2752 = vdwg.mxu0
    %v2753 = vld [vmem:[%s19] sm:$0xff]
    %v2754 = vld [vmem:[%s19 + $0x8] sm:$0xff]
    %v2756 = vsel %vm1040, %v2753, 0
    %v2759 = vsel %vm1040, %v2754, 0
    %2761 = vmatprep.subr.mxu0 0.0
    %2762 = vmatpush1.msra.mxu0 0.0
    %2763 = vmatprep.subr.mxu0 0.0
    %2764 = vmatpush1.msra.mxu0 0.0
    %2765 = vmatprep.subr.mxu0 0.0
    %2766 = vmatpush1.msra.mxu0 0.0
    %2767 = vmatprep.subr.mxu0 0.0
    %2768 = vmatpush1.msra.mxu0 0.0
    %2769 = vmatprep.subr.mxu0 0.0
    %2770 = vmatpush1.msra.mxu0 0.0
    %2771 = vmatprep.subr.mxu0 0.0
    %2772 = vmatpush1.msra.mxu0 0.0
    %2773 = vmatprep.subr.mxu0 0.0
    %2774 = vmatpush1.msra.mxu0 0.0
    %2775 = vmatprep.subr.mxu0 0.0
    %2776 = vmatpush1.msra.mxu0 0.0
    %2777 = vmatprep.subr.mxu0 0.0
    %2778 = vmatpush1.msra.mxu0 0.0
    %2779 = vmatprep.subr.mxu0 0.0
    %2780 = vmatpush1.msra.mxu0 0.0
    %2781 = vmatprep.subr.mxu0 0.0
    %2782 = vmatpush1.msra.mxu0 0.0
    %2783 = vmatprep.subr.mxu0 0.0
    %2784 = vmatpush1.msra.mxu0 0.0
    %2785 = vmatprep.subr.mxu0 0.0
    %2786 = vmatpush1.msra.mxu0 0.0
    %2787 = vmatprep.subr.mxu0 0.0
    %2788 = vmatpush1.msra.mxu0 0.0
    %2789 = vmatprep.subr.mxu0 0.0
    %2790 = vmatpush1.msra.mxu0 %v2750
    %2791 = vmatprep.subr.mxu0 0.0
    %2792 = vmatpush1.msra.mxu0 %v2745
    %2793 = vmatprep.subr.mxu0 0.0
    %2794 = vmatpush2.msra.mxu0 0.0
    %2795 = vmatprep.subr.mxu0 0.0
    %2796 = vmatpush2.msra.mxu0 0.0
    %2797 = vmatprep.subr.mxu0 0.0
    %2798 = vmatpush2.msra.mxu0 0.0
    %2799 = vmatprep.subr.mxu0 0.0
    %2800 = vmatpush2.msra.mxu0 0.0
    %2801 = vmatprep.subr.mxu0 0.0
    %2802 = vmatpush2.msra.mxu0 0.0
    %2803 = vmatprep.subr.mxu0 0.0
    %2804 = vmatpush2.msra.mxu0 0.0
    %2805 = vmatprep.subr.mxu0 0.0
    %2806 = vmatpush2.msra.mxu0 0.0
    %2807 = vmatprep.subr.mxu0 0.0
    %2808 = vmatpush2.msra.mxu0 0.0
    %2809 = vmatprep.subr.mxu0 0.0
    %2810 = vmatpush2.msra.mxu0 0.0
    %2811 = vmatprep.subr.mxu0 0.0
    %2812 = vmatpush2.msra.mxu0 0.0
    %2813 = vmatprep.subr.mxu0 0.0
    %2814 = vmatpush2.msra.mxu0 0.0
    %2815 = vmatprep.subr.mxu0 0.0
    %2816 = vmatpush2.msra.mxu0 0.0
    %2817 = vmatprep.subr.mxu0 0.0
    %2818 = vmatpush2.msra.mxu0 0.0
    %2819 = vmatprep.subr.mxu0 0.0
    %2820 = vmatpush2.msra.mxu0 0.0
    %2821 = vmatprep.subr.mxu0 0.0
    %2822 = vmatpush2.msra.mxu0 0.0
    %2823 = vmatprep.subr.mxu0 0.0
    %2824 = vmatpush2.msra.mxu0 0.0
    %2825 = vmatprep.mubr.f32.mxu0 0.0
    %2826 = vmatmul.mubr.f32.gmra.mxu0 %v2756
    %v2827 = vpop.f32.mrf.mxu0
    %v2828 = vadd.f32 0.0, %v2827
    %v2829 = vpop.f32.mrf.mxu0
    %2830 = vmatprep.mubr.f32.mxu0 0.0
    %2831 = vmatmul.mubr.f32.gmra.mxu0 %v2759
    %v2832 = vpop.f32.mrf.mxu0
    %v2833 = vadd.f32 0.0, %v2832
    %v2834 = vpop.f32.mrf.mxu0
    %2835 = vdwg.mxu0
    %v2836 = vadd.f32 %v2093, %v2828
    %v2837 = vadd.f32 %v2095, %v2833
    %2838 = vst.msk [vmem:[#allocation4] sm:$0xff] %vm72, %v2382
    %2839 = vst.msk [vmem:[#allocation4 + $0x8] sm:$0xff] %vm72, %v2836
    %2840 = vst.msk [vmem:[#allocation4 + $0x10] sm:$0xff] %vm72, %v2383
    %2841 = vst.msk [vmem:[#allocation4 + $0x18] sm:$0xff] %vm72, %v2837
    // Predicated region
    $region82: #{tpu_custom_call.1} parent=1 // pred_check
      _
    $region83: #{tpu_custom_call.1} parent=1 // pred_check_branch
      %2843 = sbr.rel (0) target = $region85
    $region84: #{tpu_custom_call.1} parent=1 // pred_region
      %s2845 = ssub.s32 512, 512
      %2846 = vsyncadd [#allocation5], %s2845
      %s2847 = sshll.u32 [#allocation4], 4
      %s2848 = int_to_ptr.vmem [resolvable:$true] %s2847
      %2853 = dma.vmem_to_hbm [thread:$0]  %s2848, 512, %s20, [#allocation5], 128, 128, 8
    $region85: #{tpu_custom_call.1} parent=1 // pred_fallthru
      _
    // Predicated region
    $region86: #{tpu_custom_call.1} parent=1 // pred_check
      _
    $region87: #{tpu_custom_call.1} parent=1 // pred_check_branch
      %2855 = sbr.rel (0) target = $region89
    $region88: #{tpu_custom_call.1} parent=1 // pred_region
      %2856 = dma.done [#allocation5], 512
    $region89: #{tpu_custom_call.1} parent=1 // pred_fallthru
      _
    %2857 = vsyncpa [#allocation5], 1

</llo_original>
